<compile_context>
chip_gen: v5e
topology: v5e:2x2
jax: 0.10.0
libtpu: 0.0.40
codegen_flags: <defaults>
</compile_context>

<pallas_src>
import math
from functools import partial

import numpy as np
import jax
import jax.numpy as jnp
from jax.experimental import pallas as pl
from jax.experimental.pallas import tpu as pltpu


def _pick_tile(n, cap):
    """Largest divisor of n that is <= cap and a multiple of 8; falls back to n."""
    cap = max(1, min(cap, n))
    for t in range(cap, 0, -1):
        if n % t == 0 and t % 8 == 0:
            return t
    return n


# ----------------------- kernel A: fused SAB core --------------------------- #

def _sab_fused_kernel(x_ref, wqkv_ref, bqkv_ref, wo_ref, bo_ref,
                      conv_ref, sum_ref, ssq_ref,
                      apad_scr,
                      *, H, W, C, C8, TQ, PAD, scale):
    HW = H * W
    f32 = jnp.float32
    bf16 = jnp.bfloat16

    # Activations arrive f32 straight from the (transposed) input; cast to bf16 in
    # VMEM instead of materialising a bf16 copy in HBM.
    x = x_ref[0].astype(bf16)                                       # [HW, C]

    # ---- fused 1x1 Q/K/V projection: one [HW, C] @ [C, C+2*C8] matmul ---------
    # Column order of the fused weight is [v | q | k] so the wide V slice starts
    # at lane offset 0.
    qkv = jnp.dot(x, wqkv_ref[...], preferred_element_type=f32) + bqkv_ref[...]
    v = qkv[:, 0:C].astype(bf16)                                    # [HW, C]
    q = (qkv[:, C:C + C8] * scale).astype(bf16)                     # [HW, C8]
    k = qkv[:, C + C8:C + 2 * C8].astype(bf16)                      # [HW, C8]

    # ---- zero the halo rows of the padded attention-output scratch -----------
    apad_scr[0:PAD, :] = jnp.zeros((PAD, C), f32)
    apad_scr[PAD + HW:PAD + HW + PAD, :] = jnp.zeros((PAD, C), f32)

    # ---- attention, query-tiled so the score matrix is only [TQ, HW] in VMEM --
    for t in range(HW // TQ):                                       # static trip count
        qt = q[t * TQ:(t + 1) * TQ, :]                              # [TQ, C8]
        s = jax.lax.dot_general(qt, k, (((1,), (1,)), ((), ())),
                                preferred_element_type=f32)         # [TQ, HW]
        s = s - jnp.max(s, axis=-1, keepdims=True)
        p = jnp.exp(s)
        p = p * pl.reciprocal(jnp.sum(p, axis=-1, keepdims=True), approx=True)
        o_t = jnp.dot(p.astype(bf16), v, preferred_element_type=f32)    # [TQ, C]
        apad_scr[PAD + t * TQ:PAD + (t + 1) * TQ, :] = o_t

    # ---- 3x3 conv (padding=1) as ONE im2col matmul ----------------------------
    # Build [HW, 9*C] patches from 9 shifted slices of the zero-haloed scratch
    # (column-wrap masks hoisted out of the tap loop; they only depend on ox).
    ap = apad_scr[...]                                              # [HW + 2*PAD, C]
    cidx = jax.lax.broadcasted_iota(jnp.int32, (HW, 1), 0) % W      # output column c
    mask_l = cidx >= 1          # input column c-1 in range  (ox = -1)
    mask_r = cidx < (W - 1)     # input column c+1 in range  (ox = +1)

    taps = []
    for oy in (-1, 0, 1):
        base = PAD + oy * W
        for ox in (-1, 0, 1):
            sl = ap[base + ox:base + ox + HW, :]                    # a[(r+oy),(c+ox)]
            if ox == -1:
                sl = jnp.where(mask_l, sl, 0.0)
            elif ox == 1:
                sl = jnp.where(mask_r, sl, 0.0)
            taps.append(sl)
    patches = jnp.concatenate(taps, axis=-1).astype(bf16)           # [HW, 9*C]
    acc = jnp.dot(patches, wo_ref[...], preferred_element_type=f32) + bo_ref[...]

    conv_ref[0] = acc                                               # [HW, C] f32
    # per-batch partial BatchNorm statistics (summed over HW)
    sum_ref[0] = jnp.sum(acc, axis=0, keepdims=True)                # [1, C]
    ssq_ref[0] = jnp.sum(acc * acc, axis=0, keepdims=True)          # [1, C]


# -------------- kernel B: BatchNorm affine + ReLU + residual ----------------- #

def _bn_relu_res_kernel(y_ref, scale_ref, shift_ref, xres_ref, o_ref):
    y = y_ref[...] * scale_ref[...] + shift_ref[...]                # BN (batch stats)
    o_ref[...] = jnp.maximum(y, 0.0) + xres_ref[...]                # ReLU + residual


# --------------------------------- wrapper ----------------------------------- #

def sab_forward(x_nchw, params, matmul_norm=True):
    B, C, H, W = x_nchw.shape
    assert C % 8 == 0, "SAB requires channels divisible by 8 (C//8 projection dim)"
    C8 = C // 8
    HW = H * W
    f32, bf16 = jnp.float32, jnp.bfloat16

    # channels-last activations, f32 only (bf16 cast happens inside kernel A)
    x_flat = jnp.transpose(x_nchw, (0, 2, 3, 1)).reshape(B, HW, C)

    # fused 1x1 weights as a single [C, C+2*C8] matmul operand, column order [v|q|k]
    wq_t = params["wq"].reshape(C8, C).T
    wk_t = params["wk"].reshape(C8, C).T
    wv_t = params["wv"].reshape(C, C).T
    w_qkv = jnp.concatenate([wv_t, wq_t, wk_t], axis=1).astype(bf16)      # [C, C+2*C8]
    b_qkv = jnp.concatenate([params["bv"], params["bq"], params["bk"]]
                            ).reshape(1, C + 2 * C8).astype(f32)

    # 3x3 conv weights (PyTorch [out,in,3,3]) -> im2col form [9*C, C],
    # row index = ((ky*3 + kx)*C + cin) which matches the tap concat order in-kernel.
    wo_mat = jnp.transpose(params["wo"], (2, 3, 1, 0)).reshape(9 * C, C).astype(bf16)
    bo2 = params["bo"].reshape(1, C).astype(f32)

    scale = float(C8) ** -0.5 if matmul_norm else 1.0
    # Query tile: full 256 MXU height where possible, capped so the [TQ, HW] f32
    # score tile stays <= ~8 MiB (fits v7x's 64 MiB VMEM with headroom).
    tq_cap = max(8, min(256, (8 * 2 ** 20) // max(HW * 4, 1)))
    TQ = _pick_tile(HW, tq_cap)
    PAD = ((W + 1) + 7) // 8 * 8           # sublane-aligned halo for the 3x3 conv

    cp = pltpu.CompilerParams(dimension_semantics=("parallel",))

    # ---- kernel A: fused QKV + attention + im2col 3x3 conv + BN partial stats --
    conv_out, csum, cssq = pl.pallas_call(
        partial(_sab_fused_kernel, H=H, W=W, C=C, C8=C8, TQ=TQ, PAD=PAD, scale=scale),
        out_shape=(jax.ShapeDtypeStruct((B, HW, C), f32),
                   jax.ShapeDtypeStruct((B, 1, C), f32),
                   jax.ShapeDtypeStruct((B, 1, C), f32)),
        grid=(B,),
        in_specs=[
            pl.BlockSpec((1, HW, C), lambda b: (b, 0, 0)),          # x (f32)
            pl.BlockSpec((C, C + 2 * C8), lambda b: (0, 0)),        # fused W [v|q|k]
            pl.BlockSpec((1, C + 2 * C8), lambda b: (0, 0)),        # fused bias
            pl.BlockSpec((9 * C, C), lambda b: (0, 0)),             # wo (im2col form)
            pl.BlockSpec((1, C), lambda b: (0, 0)),                 # bo
        ],
        out_specs=(pl.BlockSpec((1, HW, C), lambda b: (b, 0, 0)),
                   pl.BlockSpec((1, 1, C), lambda b: (b, 0, 0)),
                   pl.BlockSpec((1, 1, C), lambda b: (b, 0, 0))),
        scratch_shapes=[pltpu.VMEM((HW + 2 * PAD, C), f32)],
        compiler_params=cp,
    )(x_flat, w_qkv, b_qkv, wo_mat, bo2)

    # ---- BatchNorm2d batch statistics (train-mode) from per-batch partials -----
    n = float(B * HW)
    mean = jnp.sum(csum, axis=(0, 1)) / n                                   # [C]
    var = jnp.maximum(jnp.sum(cssq, axis=(0, 1)) / n - mean * mean, 0.0)    # biased
    inv_std = jax.lax.rsqrt(var + 1e-5)
    bn_scale = params["bn_gamma"] * inv_std                                 # [C]
    bn_shift = params["bn_beta"] - params["bn_gamma"] * mean * inv_std      # [C]

    # ---- kernel B: lane-dense BN affine + ReLU + residual ----------------------
    # View the [B*HW, C] activations as [B*HW/g, g*C] where g*C is a multiple of 128
    # (free row-major reshape), so every vreg load/store uses all 128 lanes instead
    # of C/128 masked lanes.  BN scale/shift are tiled g-fold to match.
    M = B * HW
    g = 128 // math.gcd(C, 128)
    if M % g != 0:
        g = 1                              # fallback: still correct, just narrower
    Mg, CL = M // g, g * C
    scale_row = jnp.tile(bn_scale, g).reshape(1, CL)
    shift_row = jnp.tile(bn_shift, g).reshape(1, CL)

    TM = _pick_tile(Mg, 1024)              # big, lane-dense tiles (HBM-bound kernel)
    out_flat = pl.pallas_call(
        _bn_relu_res_kernel,
        out_shape=jax.ShapeDtypeStruct((Mg, CL), f32),
        grid=(Mg // TM,),
        in_specs=[
            pl.BlockSpec((TM, CL), lambda i: (i, 0)),
            pl.BlockSpec((1, CL), lambda i: (0, 0)),
            pl.BlockSpec((1, CL), lambda i: (0, 0)),
            pl.BlockSpec((TM, CL), lambda i: (i, 0)),
        ],
        out_specs=pl.BlockSpec((TM, CL), lambda i: (i, 0)),
        input_output_aliases={0: 0},        # write BN output in place of conv_out
        compiler_params=cp,
    )(conv_out.reshape(Mg, CL), scale_row, shift_row, x_flat.reshape(Mg, CL))

    return jnp.transpose(out_flat.reshape(B, H, W, C), (0, 3, 1, 2))   # back to NCHW


# -------------------- pure-JAX references (for checking) --------------------- #

def sab_reference(x, params, matmul_norm=True, matmul_dtype=jnp.float32):
    """Pure-JAX reference.  matmul_dtype=bfloat16 mirrors the kernel's MXU precision
    (bf16 operands, f32 accumulation); matmul_dtype=float32 is the exact module."""
    B, C, H, W = x.shape
    C8 = C // 8
    HW = H * W
    f32 = jnp.float32
    md = matmul_dtype
    hi = jax.lax.Precision.HIGHEST

    xf = jnp.transpose(x, (0, 2, 3, 1)).reshape(B, HW, C).astype(md)
    wq = params["wq"].reshape(C8, C).T.astype(md)
    wk = params["wk"].reshape(C8, C).T.astype(md)
    wv = params["wv"].reshape(C, C).T.astype(md)

    q = jnp.einsum("bsc,co->bso", xf, wq, precision=hi,
                   preferred_element_type=f32) + params["bq"]
    k = jnp.einsum("bsc,co->bso", xf, wk, precision=hi,
                   preferred_element_type=f32) + params["bk"]
    v = jnp.einsum("bsc,co->bso", xf, wv, precision=hi,
                   preferred_element_type=f32) + params["bv"]
    scale = float(C8) ** -0.5 if matmul_norm else 1.0
    q = (q * scale).astype(md)
    k = k.astype(md)
    v = v.astype(md)

    s = jnp.einsum("bic,bjc->bij", q, k, precision=hi, preferred_element_type=f32)
    p = jax.nn.softmax(s, axis=-1)
    o = jnp.einsum("bij,bjc->bic", p.astype(md), v, precision=hi,
                   preferred_element_type=f32)

    conv = jax.lax.conv_general_dilated(
        o.reshape(B, H, W, C).astype(md),
        jnp.transpose(params["wo"], (2, 3, 1, 0)).astype(md),
        window_strides=(1, 1), padding=((1, 1), (1, 1)),
        dimension_numbers=("NHWC", "HWIO", "NHWC"),
        precision=hi, preferred_element_type=f32) + params["bo"]

    mean = jnp.mean(conv, axis=(0, 1, 2))
    var = jnp.mean((conv - mean) ** 2, axis=(0, 1, 2))     # biased (train-mode BN)
    y = (conv - mean) * jax.lax.rsqrt(var + 1e-5)
    y = y * params["bn_gamma"] + params["bn_beta"]
    out = jnp.maximum(y, 0.0) + jnp.transpose(x, (0, 2, 3, 1))
    return jnp.transpose(out, (0, 3, 1, 2))


# ----------------------------------- main ------------------------------------ #

if __name__ == "__main__":
    B, C, H, W = 2, 16, 16, 16        # channels must be divisible by 8 (C//8 heads dim)
    C8 = C // 8

    key = jax.random.PRNGKey(0)
    keys = jax.random.split(key, 12)
    x = jax.random.normal(keys[0], (B, C, H, W), jnp.float32)

    params = {
        # 1x1 conv projections (PyTorch weight layout [out, in, 1, 1])
        "wq": 0.3 * jax.random.normal(keys[1], (C8, C, 1, 1), jnp.float32),
        "bq": 0.1 * jax.random.normal(keys[2], (C8,), jnp.float32),
        "wk": 0.3 * jax.random.normal(keys[3], (C8, C, 1, 1), jnp.float32),
        "bk": 0.1 * jax.random.normal(keys[4], (C8,), jnp.float32),
        "wv": 0.2 * jax.random.normal(keys[5], (C, C, 1, 1), jnp.float32),
        "bv": 0.1 * jax.random.normal(keys[6], (C,), jnp.float32),
        # 3x3 output conv (PyTorch layout [out, in, 3, 3]) + BatchNorm2d params
        "wo": 0.15 * jax.random.normal(keys[7], (C, C, 3, 3), jnp.float32),
        "bo": 0.1 * jax.random.normal(keys[8], (C,), jnp.float32),
        "bn_gamma": 1.0 + 0.1 * jax.random.normal(keys[9], (C,), jnp.float32),
        "bn_beta": 0.1 * jax.random.normal(keys[10], (C,), jnp.float32),
    }

    out = jax.jit(sab_forward)(x, params)
    out = np.asarray(jax.block_until_ready(out))

    # (a) tight element-wise check against a reference that mirrors the kernel's
    #     bf16-operand / f32-accumulate MXU precision.
    ref_bf16 = np.asarray(sab_reference(x, params, matmul_dtype=jnp.bfloat16))
    np.testing.assert_allclose(out, ref_bf16, atol=2e-2, rtol=2e-2)

    # (b) global check against the full-f32 reference.  BatchNorm at random init
    #     normalizes by a small batch std, which amplifies bf16 rounding per element,
    #     so use a relative-L2 criterion for the mixed-precision comparison.
    ref_f32 = np.asarray(sab_reference(x, params, matmul_dtype=jnp.float32))
    rel_l2 = np.linalg.norm(out - ref_f32) / np.linalg.norm(ref_f32)
    assert rel_l2 < 3e-2, f"relative L2 error vs f32 reference too large: {rel_l2}"

    print("KERNEL_OK")
</pallas_src>

<mosaic_0001>
module attributes {stable_mosaic.version = 11 : i64} {
  func.func @_sab_fused_kernel(%arg0: i32, %arg1: memref<1x256x16xf32, #tpu.memory_space<vmem>>, %arg2: memref<16x20xbf16, #tpu.memory_space<vmem>>, %arg3: memref<1x20xf32, #tpu.memory_space<vmem>>, %arg4: memref<144x16xbf16, #tpu.memory_space<vmem>>, %arg5: memref<1x16xf32, #tpu.memory_space<vmem>>, %arg6: memref<1x256x16xf32, #tpu.memory_space<vmem>>, %arg7: memref<1x1x16xf32, #tpu.memory_space<vmem>>, %arg8: memref<1x1x16xf32, #tpu.memory_space<vmem>>, %arg9: memref<304x16xf32, #tpu.memory_space<vmem>>) attributes {dimension_semantics = [#tpu.dimension_semantics<parallel>], iteration_bounds = array<i64: 2>, scalar_prefetch = 0 : i64, scratch_operands = 1 : i64, tpu.core_type = #tpu.core_type<tc>, window_params = [{transform_indices = @transform_0, window_bounds = array<i64: 1, 256, 16>}, {pipeline_mode = #tpu.pipeline_mode<synchronous>, transform_indices = @transform_1, window_bounds = array<i64: 16, 20>}, {pipeline_mode = #tpu.pipeline_mode<synchronous>, transform_indices = @transform_2, window_bounds = array<i64: 1, 20>}, {pipeline_mode = #tpu.pipeline_mode<synchronous>, transform_indices = @transform_3, window_bounds = array<i64: 144, 16>}, {pipeline_mode = #tpu.pipeline_mode<synchronous>, transform_indices = @transform_4, window_bounds = array<i64: 1, 16>}, {transform_indices = @transform_5, window_bounds = array<i64: 1, 256, 16>}, {transform_indices = @transform_6, window_bounds = array<i64: 1, 1, 16>}, {transform_indices = @transform_7, window_bounds = array<i64: 1, 1, 16>}]} {
    %c0 = arith.constant 0 : index
    %c0_0 = arith.constant 0 : index
    %c0_1 = arith.constant 0 : index
    %0 = vector.load %arg1[%c0, %c0_0, %c0_1] : memref<1x256x16xf32, #tpu.memory_space<vmem>>, vector<1x256x16xf32>
    %1 = vector.shape_cast %0 : vector<1x256x16xf32> to vector<256x16xf32>
    %2 = arith.truncf %1 : vector<256x16xf32> to vector<256x16xbf16>
    %c0_2 = arith.constant 0 : index
    %c0_3 = arith.constant 0 : index
    %3 = vector.load %arg2[%c0_2, %c0_3] : memref<16x20xbf16, #tpu.memory_space<vmem>>, vector<16x20xbf16>
    %cst = arith.constant dense<0.000000e+00> : vector<256x20xf32>
    %4 = tpu.matmul %2, %3, %cst {dimension_numbers = #tpu.dot_dimension_numbers<[1], [0], [0], [1], [0, 0, 1, 1], [], []>} : vector<256x16xbf16>, vector<16x20xbf16>, vector<256x20xf32> -> vector<256x20xf32>
    %c0_4 = arith.constant 0 : index
    %c0_5 = arith.constant 0 : index
    %5 = vector.load %arg3[%c0_4, %c0_5] : memref<1x20xf32, #tpu.memory_space<vmem>>, vector<1x20xf32>
    %6 = vector.broadcast %5 : vector<1x20xf32> to vector<256x20xf32>
    %7 = arith.addf %4, %6 : vector<256x20xf32>
    %8 = vector.extract_strided_slice %7 {offsets = [0, 0], sizes = [256, 16], strides = [1, 1]} : vector<256x20xf32> to vector<256x16xf32>
    %9 = arith.truncf %8 : vector<256x16xf32> to vector<256x16xbf16>
    %10 = vector.extract_strided_slice %7 {offsets = [0, 16], sizes = [256, 2], strides = [1, 1]} : vector<256x20xf32> to vector<256x2xf32>
    %cst_6 = arith.constant 0.707106769 : f32
    %11 = vector.broadcast %cst_6 : f32 to vector<256x2xf32>
    %12 = arith.mulf %10, %11 : vector<256x2xf32>
    %13 = arith.truncf %12 : vector<256x2xf32> to vector<256x2xbf16>
    %14 = vector.extract_strided_slice %7 {offsets = [0, 18], sizes = [256, 2], strides = [1, 1]} : vector<256x20xf32> to vector<256x2xf32>
    %15 = arith.truncf %14 : vector<256x2xf32> to vector<256x2xbf16>
    %cst_7 = arith.constant 0.000000e+00 : f32
    %16 = vector.broadcast %cst_7 : f32 to vector<24x16xf32>
    %c0_8 = arith.constant 0 : index
    %c0_9 = arith.constant 0 : index
    %17 = vector.load %arg9[%c0_8, %c0_9] : memref<304x16xf32, #tpu.memory_space<vmem>>, vector<24x16xf32>
    tpu.vector_store %arg9[%c0_8, %c0_9], %16 {strides = array<i32>} : memref<304x16xf32, #tpu.memory_space<vmem>>, vector<24x16xf32>,
    %cst_10 = arith.constant 0.000000e+00 : f32
    %18 = vector.broadcast %cst_10 : f32 to vector<24x16xf32>
    %c280 = arith.constant 280 : index
    %c0_11 = arith.constant 0 : index
    %19 = vector.load %arg9[%c280, %c0_11] : memref<304x16xf32, #tpu.memory_space<vmem>>, vector<24x16xf32>
    tpu.vector_store %arg9[%c280, %c0_11], %18 {strides = array<i32>} : memref<304x16xf32, #tpu.memory_space<vmem>>, vector<24x16xf32>,
    %cst_12 = arith.constant dense<0.000000e+00> : vector<256x256xf32>
    %20 = tpu.matmul %13, %15, %cst_12 {dimension_numbers = #tpu.dot_dimension_numbers<[1], [1], [0], [0], [0, 0, 1, 0], [], []>} : vector<256x2xbf16>, vector<256x2xbf16>, vector<256x256xf32> -> vector<256x256xf32>
    %cst_13 = arith.constant dense<0xFF800000> : vector<256xf32>
    %21 = vector.multi_reduction <maximumf>, %20, %cst_13 [1] : vector<256x256xf32> to vector<256xf32>
    %22 = vector.shape_cast %21 : vector<256xf32> to vector<256x1xf32>
    %23 = vector.broadcast %22 : vector<256x1xf32> to vector<256x256xf32>
    %24 = arith.subf %20, %23 : vector<256x256xf32>
    %25 = math.exp %24 : vector<256x256xf32>
    %cst_14 = arith.constant dense<0.000000e+00> : vector<256xf32>
    %26 = vector.multi_reduction <add>, %25, %cst_14 [1] : vector<256x256xf32> to vector<256xf32>
    %27 = vector.shape_cast %26 : vector<256xf32> to vector<256x1xf32>
    %28 = tpu.reciprocal %27 {approx = true} : vector<256x1xf32> -> vector<256x1xf32>
    %29 = vector.broadcast %28 : vector<256x1xf32> to vector<256x256xf32>
    %30 = arith.mulf %25, %29 : vector<256x256xf32>
    %31 = arith.truncf %30 : vector<256x256xf32> to vector<256x256xbf16>
    %cst_15 = arith.constant dense<0.000000e+00> : vector<256x16xf32>
    %32 = tpu.matmul %31, %9, %cst_15 {dimension_numbers = #tpu.dot_dimension_numbers<[1], [0], [0], [1], [0, 0, 1, 1], [], []>} : vector<256x256xbf16>, vector<256x16xbf16>, vector<256x16xf32> -> vector<256x16xf32>
    %c24 = arith.constant 24 : index
    %c0_16 = arith.constant 0 : index
    %33 = vector.load %arg9[%c24, %c0_16] : memref<304x16xf32, #tpu.memory_space<vmem>>, vector<256x16xf32>
    tpu.vector_store %arg9[%c24, %c0_16], %32 {strides = array<i32>} : memref<304x16xf32, #tpu.memory_space<vmem>>, vector<256x16xf32>,
    %c0_17 = arith.constant 0 : index
    %c0_18 = arith.constant 0 : index
    %34 = vector.load %arg9[%c0_17, %c0_18] : memref<304x16xf32, #tpu.memory_space<vmem>>, vector<304x16xf32>
    %35 = tpu.iota {dimensions = array<i32: 0>} : vector<256x1xi32>
    %c16_i32 = arith.constant 16 : i32
    %c0_i32 = arith.constant 0 : i32
    %36 = arith.cmpi eq, %c16_i32, %c0_i32 : i32
    %c1_i32 = arith.constant 1 : i32
    %37 = arith.select %36, %c1_i32, %c16_i32 : i32
    %38 = vector.broadcast %37 : i32 to vector<256x1xi32>
    %39 = arith.remsi %35, %38 : vector<256x1xi32>
    %c0_i32_19 = arith.constant 0 : i32
    %40 = vector.broadcast %c0_i32_19 : i32 to vector<256x1xi32>
    %41 = arith.cmpi ne, %39, %40 : vector<256x1xi32>
    %c0_i32_20 = arith.constant 0 : i32
    %42 = vector.broadcast %c0_i32_20 : i32 to vector<256x1xi32>
    %43 = arith.cmpi slt, %39, %42 : vector<256x1xi32>
    %c0_i32_21 = arith.constant 0 : i32
    %44 = arith.cmpi slt, %37, %c0_i32_21 : i32
    %45 = vector.broadcast %44 : i1 to vector<256x1xi1>
    %46 = vector.broadcast %45 : vector<256x1xi1> to vector<256x1xi1>
    %47 = arith.xori %43, %46 : vector<256x1xi1>
    %48 = arith.andi %47, %41 : vector<256x1xi1>
    %49 = vector.broadcast %37 : i32 to vector<256x1xi32>
    %50 = arith.addi %39, %49 : vector<256x1xi32>
    %51 = arith.select %48, %50, %39 : vector<256x1xi1>, vector<256x1xi32>
    %c1_i32_22 = arith.constant 1 : i32
    %52 = vector.broadcast %c1_i32_22 : i32 to vector<256x1xi32>
    %53 = arith.cmpi sge, %51, %52 : vector<256x1xi32>
    %c15_i32 = arith.constant 15 : i32
    %54 = vector.broadcast %c15_i32 : i32 to vector<256x1xi32>
    %55 = arith.cmpi slt, %51, %54 : vector<256x1xi32>
    %56 = vector.extract_strided_slice %34 {offsets = [7, 0], sizes = [256, 16], strides = [1, 1]} : vector<304x16xf32> to vector<256x16xf32>
    %cst_23 = arith.constant 0.000000e+00 : f32
    %57 = vector.shape_cast %53 : vector<256x1xi1> to vector<256x1xi1>
    %58 = vector.broadcast %57 : vector<256x1xi1> to vector<256x16xi1>
    %59 = vector.broadcast %cst_23 : f32 to vector<256x16xf32>
    %60 = arith.select %58, %56, %59 : vector<256x16xi1>, vector<256x16xf32>
    %61 = vector.extract_strided_slice %34 {offsets = [8, 0], sizes = [256, 16], strides = [1, 1]} : vector<304x16xf32> to vector<256x16xf32>
    %62 = vector.extract_strided_slice %34 {offsets = [9, 0], sizes = [256, 16], strides = [1, 1]} : vector<304x16xf32> to vector<256x16xf32>
    %cst_24 = arith.constant 0.000000e+00 : f32
    %63 = vector.shape_cast %55 : vector<256x1xi1> to vector<256x1xi1>
    %64 = vector.broadcast %63 : vector<256x1xi1> to vector<256x16xi1>
    %65 = vector.broadcast %cst_24 : f32 to vector<256x16xf32>
    %66 = arith.select %64, %62, %65 : vector<256x16xi1>, vector<256x16xf32>
    %67 = vector.extract_strided_slice %34 {offsets = [23, 0], sizes = [256, 16], strides = [1, 1]} : vector<304x16xf32> to vector<256x16xf32>
    %cst_25 = arith.constant 0.000000e+00 : f32
    %68 = vector.shape_cast %53 : vector<256x1xi1> to vector<256x1xi1>
    %69 = vector.broadcast %68 : vector<256x1xi1> to vector<256x16xi1>
    %70 = vector.broadcast %cst_25 : f32 to vector<256x16xf32>
    %71 = arith.select %69, %67, %70 : vector<256x16xi1>, vector<256x16xf32>
    %72 = vector.extract_strided_slice %34 {offsets = [24, 0], sizes = [256, 16], strides = [1, 1]} : vector<304x16xf32> to vector<256x16xf32>
    %73 = vector.extract_strided_slice %34 {offsets = [25, 0], sizes = [256, 16], strides = [1, 1]} : vector<304x16xf32> to vector<256x16xf32>
    %cst_26 = arith.constant 0.000000e+00 : f32
    %74 = vector.shape_cast %55 : vector<256x1xi1> to vector<256x1xi1>
    %75 = vector.broadcast %74 : vector<256x1xi1> to vector<256x16xi1>
    %76 = vector.broadcast %cst_26 : f32 to vector<256x16xf32>
    %77 = arith.select %75, %73, %76 : vector<256x16xi1>, vector<256x16xf32>
    %78 = vector.extract_strided_slice %34 {offsets = [39, 0], sizes = [256, 16], strides = [1, 1]} : vector<304x16xf32> to vector<256x16xf32>
    %cst_27 = arith.constant 0.000000e+00 : f32
    %79 = vector.shape_cast %53 : vector<256x1xi1> to vector<256x1xi1>
    %80 = vector.broadcast %79 : vector<256x1xi1> to vector<256x16xi1>
    %81 = vector.broadcast %cst_27 : f32 to vector<256x16xf32>
    %82 = arith.select %80, %78, %81 : vector<256x16xi1>, vector<256x16xf32>
    %83 = vector.extract_strided_slice %34 {offsets = [40, 0], sizes = [256, 16], strides = [1, 1]} : vector<304x16xf32> to vector<256x16xf32>
    %84 = vector.extract_strided_slice %34 {offsets = [41, 0], sizes = [256, 16], strides = [1, 1]} : vector<304x16xf32> to vector<256x16xf32>
    %cst_28 = arith.constant 0.000000e+00 : f32
    %85 = vector.shape_cast %55 : vector<256x1xi1> to vector<256x1xi1>
    %86 = vector.broadcast %85 : vector<256x1xi1> to vector<256x16xi1>
    %87 = vector.broadcast %cst_28 : f32 to vector<256x16xf32>
    %88 = arith.select %86, %84, %87 : vector<256x16xi1>, vector<256x16xf32>
    %89 = tpu.concatenate %60, %61, %66, %71, %72, %77, %82, %83, %88 in 1 : vector<256x16xf32>, vector<256x16xf32>, vector<256x16xf32>, vector<256x16xf32>, vector<256x16xf32>, vector<256x16xf32>, vector<256x16xf32>, vector<256x16xf32>, vector<256x16xf32> -> vector<256x144xf32>
    %90 = arith.truncf %89 : vector<256x144xf32> to vector<256x144xbf16>
    %c0_29 = arith.constant 0 : index
    %c0_30 = arith.constant 0 : index
    %91 = vector.load %arg4[%c0_29, %c0_30] : memref<144x16xbf16, #tpu.memory_space<vmem>>, vector<144x16xbf16>
    %cst_31 = arith.constant dense<0.000000e+00> : vector<256x16xf32>
    %92 = tpu.matmul %90, %91, %cst_31 {dimension_numbers = #tpu.dot_dimension_numbers<[1], [0], [0], [1], [0, 0, 1, 1], [], []>} : vector<256x144xbf16>, vector<144x16xbf16>, vector<256x16xf32> -> vector<256x16xf32>
    %c0_32 = arith.constant 0 : index
    %c0_33 = arith.constant 0 : index
    %93 = vector.load %arg5[%c0_32, %c0_33] : memref<1x16xf32, #tpu.memory_space<vmem>>, vector<1x16xf32>
    %94 = vector.broadcast %93 : vector<1x16xf32> to vector<256x16xf32>
    %95 = arith.addf %92, %94 : vector<256x16xf32>
    %c0_34 = arith.constant 0 : index
    %c0_35 = arith.constant 0 : index
    %c0_36 = arith.constant 0 : index
    %96 = vector.load %arg6[%c0_34, %c0_35, %c0_36] : memref<1x256x16xf32, #tpu.memory_space<vmem>>, vector<1x256x16xf32>
    %97 = vector.shape_cast %96 : vector<1x256x16xf32> to vector<256x16xf32>
    %98 = vector.shape_cast %95 : vector<256x16xf32> to vector<1x256x16xf32>
    tpu.vector_store %arg6[%c0_34, %c0_35, %c0_36], %98 {strides = array<i32>} : memref<1x256x16xf32, #tpu.memory_space<vmem>>, vector<1x256x16xf32>,
    %cst_37 = arith.constant dense<0.000000e+00> : vector<16xf32>
    %99 = vector.multi_reduction <add>, %95, %cst_37 [0] : vector<256x16xf32> to vector<16xf32>
    %100 = vector.shape_cast %99 : vector<16xf32> to vector<1x16xf32>
    %c0_38 = arith.constant 0 : index
    %c0_39 = arith.constant 0 : index
    %c0_40 = arith.constant 0 : index
    %101 = vector.load %arg7[%c0_38, %c0_39, %c0_40] : memref<1x1x16xf32, #tpu.memory_space<vmem>>, vector<1x1x16xf32>
    %102 = vector.shape_cast %101 : vector<1x1x16xf32> to vector<1x16xf32>
    %103 = vector.shape_cast %100 : vector<1x16xf32> to vector<1x1x16xf32>
    tpu.vector_store %arg7[%c0_38, %c0_39, %c0_40], %103 {strides = array<i32>} : memref<1x1x16xf32, #tpu.memory_space<vmem>>, vector<1x1x16xf32>,
    %104 = arith.mulf %95, %95 : vector<256x16xf32>
    %cst_41 = arith.constant dense<0.000000e+00> : vector<16xf32>
    %105 = vector.multi_reduction <add>, %104, %cst_41 [0] : vector<256x16xf32> to vector<16xf32>
    %106 = vector.shape_cast %105 : vector<16xf32> to vector<1x16xf32>
    %c0_42 = arith.constant 0 : index
    %c0_43 = arith.constant 0 : index
    %c0_44 = arith.constant 0 : index
    %107 = vector.load %arg8[%c0_42, %c0_43, %c0_44] : memref<1x1x16xf32, #tpu.memory_space<vmem>>, vector<1x1x16xf32>
    %108 = vector.shape_cast %107 : vector<1x1x16xf32> to vector<1x16xf32>
    %109 = vector.shape_cast %106 : vector<1x16xf32> to vector<1x1x16xf32>
    tpu.vector_store %arg8[%c0_42, %c0_43, %c0_44], %109 {strides = array<i32>} : memref<1x1x16xf32, #tpu.memory_space<vmem>>, vector<1x1x16xf32>,
    return
  }
  func.func @transform_0(%arg0: i32) -> (i32, i32, i32) {
    %c0_i32 = arith.constant 0 : i32
    %c0_i32_0 = arith.constant 0 : i32
    %c0_i32_1 = arith.constant 0 : i32
    return %arg0, %c0_i32, %c0_i32_0 : i32, i32, i32
  }
  func.func @transform_1(%arg0: i32) -> (i32, i32) {
    %c0_i32 = arith.constant 0 : i32
    %c0_i32_0 = arith.constant 0 : i32
    %c0_i32_1 = arith.constant 0 : i32
    return %c0_i32, %c0_i32_0 : i32, i32
  }
  func.func @transform_2(%arg0: i32) -> (i32, i32) {
    %c0_i32 = arith.constant 0 : i32
    %c0_i32_0 = arith.constant 0 : i32
    %c0_i32_1 = arith.constant 0 : i32
    return %c0_i32, %c0_i32_0 : i32, i32
  }
  func.func @transform_3(%arg0: i32) -> (i32, i32) {
    %c0_i32 = arith.constant 0 : i32
    %c0_i32_0 = arith.constant 0 : i32
    %c0_i32_1 = arith.constant 0 : i32
    return %c0_i32, %c0_i32_0 : i32, i32
  }
  func.func @transform_4(%arg0: i32) -> (i32, i32) {
    %c0_i32 = arith.constant 0 : i32
    %c0_i32_0 = arith.constant 0 : i32
    %c0_i32_1 = arith.constant 0 : i32
    return %c0_i32, %c0_i32_0 : i32, i32
  }
  func.func @transform_5(%arg0: i32) -> (i32, i32, i32) {
    %c0_i32 = arith.constant 0 : i32
    %c0_i32_0 = arith.constant 0 : i32
    %c0_i32_1 = arith.constant 0 : i32
    return %arg0, %c0_i32, %c0_i32_0 : i32, i32, i32
  }
  func.func @transform_6(%arg0: i32) -> (i32, i32, i32) {
    %c0_i32 = arith.constant 0 : i32
    %c0_i32_0 = arith.constant 0 : i32
    %c0_i32_1 = arith.constant 0 : i32
    return %arg0, %c0_i32, %c0_i32_0 : i32, i32, i32
  }
  func.func @transform_7(%arg0: i32) -> (i32, i32, i32) {
    %c0_i32 = arith.constant 0 : i32
    %c0_i32_0 = arith.constant 0 : i32
    %c0_i32_1 = arith.constant 0 : i32
    return %arg0, %c0_i32, %c0_i32_0 : i32, i32, i32
  }
}

module attributes {stable_mosaic.version = 11 : i64} {
  func.func @_bn_relu_res_kernel(%arg0: i32, %arg1: memref<64x128xf32, #tpu.memory_space<vmem>>, %arg2: memref<1x128xf32, #tpu.memory_space<vmem>>, %arg3: memref<1x128xf32, #tpu.memory_space<vmem>>, %arg4: memref<64x128xf32, #tpu.memory_space<vmem>>, %arg5: memref<64x128xf32, #tpu.memory_space<vmem>>) attributes {dimension_semantics = [#tpu.dimension_semantics<parallel>], iteration_bounds = array<i64: 1>, scalar_prefetch = 0 : i64, scratch_operands = 0 : i64, tpu.core_type = #tpu.core_type<tc>, window_params = [{transform_indices = @transform_0, window_bounds = array<i64: 64, 128>}, {pipeline_mode = #tpu.pipeline_mode<synchronous>, transform_indices = @transform_1, window_bounds = array<i64: 1, 128>}, {pipeline_mode = #tpu.pipeline_mode<synchronous>, transform_indices = @transform_2, window_bounds = array<i64: 1, 128>}, {transform_indices = @transform_3, window_bounds = array<i64: 64, 128>}, {transform_indices = @transform_4, window_bounds = array<i64: 64, 128>}]} {
    %c0 = arith.constant 0 : index
    %c0_0 = arith.constant 0 : index
    %0 = vector.load %arg1[%c0, %c0_0] : memref<64x128xf32, #tpu.memory_space<vmem>>, vector<64x128xf32>
    %c0_1 = arith.constant 0 : index
    %c0_2 = arith.constant 0 : index
    %1 = vector.load %arg2[%c0_1, %c0_2] : memref<1x128xf32, #tpu.memory_space<vmem>>, vector<1x128xf32>
    %2 = vector.broadcast %1 : vector<1x128xf32> to vector<64x128xf32>
    %3 = arith.mulf %0, %2 : vector<64x128xf32>
    %c0_3 = arith.constant 0 : index
    %c0_4 = arith.constant 0 : index
    %4 = vector.load %arg3[%c0_3, %c0_4] : memref<1x128xf32, #tpu.memory_space<vmem>>, vector<1x128xf32>
    %5 = vector.broadcast %4 : vector<1x128xf32> to vector<64x128xf32>
    %6 = arith.addf %3, %5 : vector<64x128xf32>
    %cst = arith.constant 0.000000e+00 : f32
    %7 = vector.broadcast %cst : f32 to vector<64x128xf32>
    %8 = arith.maximumf %6, %7 : vector<64x128xf32>
    %c0_5 = arith.constant 0 : index
    %c0_6 = arith.constant 0 : index
    %9 = vector.load %arg4[%c0_5, %c0_6] : memref<64x128xf32, #tpu.memory_space<vmem>>, vector<64x128xf32>
    %10 = arith.addf %8, %9 : vector<64x128xf32>
    %c0_7 = arith.constant 0 : index
    %c0_8 = arith.constant 0 : index
    %11 = vector.load %arg5[%c0_7, %c0_8] : memref<64x128xf32, #tpu.memory_space<vmem>>, vector<64x128xf32>
    tpu.vector_store %arg5[%c0_7, %c0_8], %10 {strides = array<i32>} : memref<64x128xf32, #tpu.memory_space<vmem>>, vector<64x128xf32>,
    return
  }
  func.func @transform_0(%arg0: i32) -> (i32, i32) {
    %c0_i32 = arith.constant 0 : i32
    %c0_i32_0 = arith.constant 0 : i32
    return %arg0, %c0_i32 : i32, i32
  }
  func.func @transform_1(%arg0: i32) -> (i32, i32) {
    %c0_i32 = arith.constant 0 : i32
    %c0_i32_0 = arith.constant 0 : i32
    %c0_i32_1 = arith.constant 0 : i32
    return %c0_i32, %c0_i32_0 : i32, i32
  }
  func.func @transform_2(%arg0: i32) -> (i32, i32) {
    %c0_i32 = arith.constant 0 : i32
    %c0_i32_0 = arith.constant 0 : i32
    %c0_i32_1 = arith.constant 0 : i32
    return %c0_i32, %c0_i32_0 : i32, i32
  }
  func.func @transform_3(%arg0: i32) -> (i32, i32) {
    %c0_i32 = arith.constant 0 : i32
    %c0_i32_0 = arith.constant 0 : i32
    return %arg0, %c0_i32 : i32, i32
  }
  func.func @transform_4(%arg0: i32) -> (i32, i32) {
    %c0_i32 = arith.constant 0 : i32
    %c0_i32_0 = arith.constant 0 : i32
    return %arg0, %c0_i32 : i32, i32
  }
}

</mosaic_0001>

<llo_original>
// kernel: tile.13
$region0: #{tile.13}
  #allocation0 [shape = 's32[1]{0}', space=sflag, size = 0x4, scoped, tag = 'scoped memory for tile.13']
  %s0 = inlined_call_operand.vmem [shape: f32[16], index: 0, kind: input, shape index: {}]
  %s1 = inlined_call_operand.vmem [shape: f32[8,16], index: 1, kind: output, shape index: {}]
  // Predicated region
  $region2: #{tile.13} parent=0 // pred_check
    _
  $region3: #{tile.13} parent=0 // pred_check_branch
    %3 = sbr.rel (0) target = $region5
  $region4: #{tile.13} parent=0 // pred_region
    _
  $region5: #{tile.13} parent=0 // pred_fallthru
    _
  %v4 = vld [vmem:[%s0] ss:$0 sm:$0xff]
  %5 = vst [vmem:[%s1] sm:$0xff] %v4

// kernel: tile.14
$region0: #{tile.14}
  %s0 = inlined_call_operand.vmem [shape: f32[8,16], index: 0, kind: input, shape index: {}]
  %s1 = inlined_call_operand.vmem [shape: f32[1,128], index: 1, kind: output, shape index: {}]
  $region1: #{tile.14} parent=0
    #allocation0 [shape = 'u8[4096]{0}', space=vmem, size = 0x1000, scoped, tag = 'scoped mem for output reshape']
    %v2 = vld [vmem:[%s0] sm:$0x1]
    %vm3 = vcmask 130048
    %4 = vst.msk [vmem:[#allocation0] sm:$0x1] %vm3, %v2
    %s5 = scalar_lea.vmem %s0, 7
    %v6 = vld [vmem:[%s5] sm:$0x1]
    %7 = vrot.lane.b32.xlu0 %v6, 112
    %v8 = vpop.permute.xlu0 %7
    %vm9 = vcmask 1048448
    %10 = vst.msk [vmem:[#allocation0] sm:$0x1] %vm9, %v8
    %s11 = scalar_lea.vmem %s0, 6
    %v12 = vld [vmem:[%s11] sm:$0x1]
    %13 = vrot.lane.b32.xlu0 %v12, 96
    %v14 = vpop.permute.xlu0 %13
    %vm15 = vcmask 917248
    %16 = vst.msk [vmem:[#allocation0] sm:$0x1] %vm15, %v14
    %s17 = scalar_lea.vmem %s0, 5
    %v18 = vld [vmem:[%s17] sm:$0x1]
    %19 = vrot.lane.b32.xlu0 %v18, 80
    %v20 = vpop.permute.xlu0 %19
    %vm21 = vcmask 786048
    %22 = vst.msk [vmem:[#allocation0] sm:$0x1] %vm21, %v20
    %s23 = scalar_lea.vmem %s0, 4
    %v24 = vld [vmem:[%s23] sm:$0x1]
    %25 = vrot.lane.b32.xlu0 %v24, 64
    %v26 = vpop.permute.xlu0 %25
    %vm27 = vcmask 654848
    %28 = vst.msk [vmem:[#allocation0] sm:$0x1] %vm27, %v26
    %s29 = scalar_lea.vmem %s0, 3
    %v30 = vld [vmem:[%s29] sm:$0x1]
    %31 = vrot.lane.b32.xlu0 %v30, 48
    %v32 = vpop.permute.xlu0 %31
    %vm33 = vcmask 523648
    %34 = vst.msk [vmem:[#allocation0] sm:$0x1] %vm33, %v32
    %s35 = scalar_lea.vmem %s0, 2
    %v36 = vld [vmem:[%s35] sm:$0x1]
    %37 = vrot.lane.b32.xlu0 %v36, 32
    %v38 = vpop.permute.xlu0 %37
    %vm39 = vcmask 392448
    %40 = vst.msk [vmem:[#allocation0] sm:$0x1] %vm39, %v38
    %s41 = scalar_lea.vmem %s0, 1
    %v42 = vld [vmem:[%s41] sm:$0x1]
    %43 = vrot.lane.b32.xlu0 %v42, 16
    %v44 = vpop.permute.xlu0 %43
    %vm45 = vcmask 261248
    %46 = vst.msk [vmem:[#allocation0] sm:$0x1] %vm45, %v44
    %s48 = ssub.s32 2, 1
    %v49 = vld [vmem:[#allocation0] sm:%s48]
    %s51 = ssub.s32 2, 1
    %52 = vst [vmem:[%s1] sm:%s51] %v49

// kernel: sab_forward.3
$region0: #{sab_forward.3}
  #allocation0 [shape = 'u32[]', space=smem, size = 0x4, offset = 0x4, fixed_abs, tag = 'smem constant byte address 0x4 - core index']
  #allocation1 [shape = 'u32[72,128]{1,0:T(1,128)}', space=vmem, size = 0x9000, scoped, tag = 'internal scratch']
  %s0 = inlined_call_operand.vmem [shape: f32[64,128], index: 0, kind: input, shape index: {}, may-alias: {0,4}]
  %s1 = inlined_call_operand.vmem [shape: f32[1,128], index: 1, kind: input, shape index: {}]
  %s2 = inlined_call_operand.vmem [shape: f32[1,128], index: 2, kind: input, shape index: {}]
  %s3 = inlined_call_operand.vmem [shape: f32[64,128], index: 3, kind: input, shape index: {}]
  %s4 = inlined_call_operand.vmem [shape: f32[64,128], index: 4, kind: output, shape index: {}, may-alias: {0,4}]
  %s5 = sld [smem:[#allocation0]]
  $region26: #{sab_forward.3} parent=0
    _
  %s7 = ssub.s32 1, %s5
  %s8 = scalar_select 0, %s7, %s5
  // Predicated region
  $region2: #{sab_forward.3} parent=0 // pred_check
    _
  $region3: #{sab_forward.3} parent=0 // pred_check_branch
    %10 = sbr.rel (0) target = $region5
  $region4: #{sab_forward.3} parent=0 // pred_region
    _
  $region5: #{sab_forward.3} parent=0 // pred_fallthru
    _
  // Predicated region
  $region6: #{sab_forward.3} parent=0 // pred_check
    _
  $region7: #{sab_forward.3} parent=0 // pred_check_branch
    %12 = sbr.rel (0) target = $region9
  $region8: #{sab_forward.3} parent=0 // pred_region
    _
  $region9: #{sab_forward.3} parent=0 // pred_fallthru
    _
  // Predicated region
  $region10: #{sab_forward.3} parent=0 // pred_check
    _
  $region11: #{sab_forward.3} parent=0 // pred_check_branch
    %14 = sbr.rel (0) target = $region13
  $region12: #{sab_forward.3} parent=0 // pred_region
    _
  $region13: #{sab_forward.3} parent=0 // pred_fallthru
    _
  // Predicated region
  $region14: #{sab_forward.3} parent=0 // pred_check
    _
  $region15: #{sab_forward.3} parent=0 // pred_check_branch
    %16 = sbr.rel (0) target = $region17
  $region16: #{sab_forward.3} parent=0 // pred_region
    _
  $region17: #{sab_forward.3} parent=0 // pred_fallthru
    _
  %v17 = vld [vmem:[%s0] sm:$0xff]
  %v18 = vld [vmem:[%s0 + $0x8] sm:$0xff]
  %v19 = vld [vmem:[%s0 + $0x10] sm:$0xff]
  %v20 = vld [vmem:[%s0 + $0x18] sm:$0xff]
  %v21 = vld [vmem:[%s0 + $0x20] sm:$0xff]
  %v22 = vld [vmem:[%s0 + $0x28] sm:$0xff]
  %v23 = vld [vmem:[%s0 + $0x30] sm:$0xff]
  %v24 = vld [vmem:[%s0 + $0x38] sm:$0xff]
  %v25 = vld [vmem:[%s1] sm:$0x1]
  %v27 = vperm.slane %v25, 0
  %v29 = vmul.f32 %v17, %v27
  %v30 = vmul.f32 %v18, %v27
  %v31 = vmul.f32 %v19, %v27
  %v32 = vmul.f32 %v20, %v27
  %v33 = vmul.f32 %v21, %v27
  %v34 = vmul.f32 %v22, %v27
  %v35 = vmul.f32 %v23, %v27
  %v36 = vmul.f32 %v24, %v27
  %v37 = vld [vmem:[%s2] sm:$0x1]
  %v39 = vperm.slane %v37, 0
  %v41 = vadd.f32 %v29, %v39
  %v42 = vadd.f32 %v30, %v39
  %v43 = vadd.f32 %v31, %v39
  %v44 = vadd.f32 %v32, %v39
  %v45 = vadd.f32 %v33, %v39
  %v46 = vadd.f32 %v34, %v39
  %v47 = vadd.f32 %v35, %v39
  %v48 = vadd.f32 %v36, %v39
  %v49 = vmax.f32 %v41, 0.0
  %v50 = vmax.f32 %v42, 0.0
  %v51 = vmax.f32 %v43, 0.0
  %v52 = vmax.f32 %v44, 0.0
  %v53 = vmax.f32 %v45, 0.0
  %v54 = vmax.f32 %v46, 0.0
  %v55 = vmax.f32 %v47, 0.0
  %v56 = vmax.f32 %v48, 0.0
  %v57 = vld [vmem:[%s3] sm:$0xff]
  %v58 = vld [vmem:[%s3 + $0x8] sm:$0xff]
  %v59 = vld [vmem:[%s3 + $0x10] sm:$0xff]
  %v60 = vld [vmem:[%s3 + $0x18] sm:$0xff]
  %v61 = vld [vmem:[%s3 + $0x20] sm:$0xff]
  %v62 = vld [vmem:[%s3 + $0x28] sm:$0xff]
  %v63 = vld [vmem:[%s3 + $0x30] sm:$0xff]
  %v64 = vld [vmem:[%s3 + $0x38] sm:$0xff]
  %v65 = vadd.f32 %v49, %v57
  %v66 = vadd.f32 %v50, %v58
  %v67 = vadd.f32 %v51, %v59
  %v68 = vadd.f32 %v52, %v60
  %v69 = vadd.f32 %v53, %v61
  %v70 = vadd.f32 %v54, %v62
  %v71 = vadd.f32 %v55, %v63
  %v72 = vadd.f32 %v56, %v64
  %73 = vst [vmem:[%s4] sm:$0xff] %v65
  %74 = vst [vmem:[%s4 + $0x8] sm:$0xff] %v66
  %75 = vst [vmem:[%s4 + $0x10] sm:$0xff] %v67
  %76 = vst [vmem:[%s4 + $0x18] sm:$0xff] %v68
  %77 = vst [vmem:[%s4 + $0x20] sm:$0xff] %v69
  %78 = vst [vmem:[%s4 + $0x28] sm:$0xff] %v70
  %79 = vst [vmem:[%s4 + $0x30] sm:$0xff] %v71
  %80 = vst [vmem:[%s4 + $0x38] sm:$0xff] %v72
  // Predicated region
  $region18: #{sab_forward.3} parent=0 // pred_check
    _
  $region19: #{sab_forward.3} parent=0 // pred_check_branch
    %82 = sbr.rel (0) target = $region21
  $region20: #{sab_forward.3} parent=0 // pred_region
    _
  $region21: #{sab_forward.3} parent=0 // pred_fallthru
    _
  // Predicated region
  $region22: #{sab_forward.3} parent=0 // pred_check
    _
  $region23: #{sab_forward.3} parent=0 // pred_check_branch
    %84 = sbr.rel (0) target = $region25
  $region24: #{sab_forward.3} parent=0 // pred_region
    _
  $region25: #{sab_forward.3} parent=0 // pred_fallthru
    _

// kernel: sab_forward.2
$region0: #{sab_forward.2}
  #allocation0 [shape = 'u32[]', space=smem, size = 0x4, offset = 0x4, fixed_abs, tag = 'smem constant byte address 0x4 - core index']
  #allocation1 [shape = 'u32[72,128]{1,0:T(1,128)}', space=vmem, size = 0x9000, scoped, tag = 'internal scratch']
  #allocation2 [shape = 'f32[304,16]{1,0:T(8,128)}', space=vmem, size = 0x26000, scoped, tag = 'scratch operand']
  %s0 = inlined_call_operand.vmem [shape: f32[2,256,16], index: 0, kind: input, shape index: {}]
  %s1 = inlined_call_operand.vmem [shape: bf16[16,20], index: 1, kind: input, shape index: {}]
  %s2 = inlined_call_operand.vmem [shape: f32[1,20], index: 2, kind: input, shape index: {}]
  %s3 = inlined_call_operand.vmem [shape: bf16[144,16], index: 3, kind: input, shape index: {}]
  %s4 = inlined_call_operand.vmem [shape: f32[1,16], index: 4, kind: input, shape index: {}]
  %s5 = inlined_call_operand.vmem [shape: f32[2,256,16], index: 5, kind: output, shape index: {0}]
  %s6 = inlined_call_operand.vmem [shape: f32[2,1,16], index: 6, kind: output, shape index: {1}]
  %s7 = inlined_call_operand.vmem [shape: f32[2,1,16], index: 7, kind: output, shape index: {2}]
  %8 = xla_tuple %s5, %s6, %s7
  %s9 = sld [smem:[#allocation0]]
  $region69: #{sab_forward.2} parent=0
    _
  %s11 = ssub.s32 1, %s9
  %s12 = scalar_select 0, %s11, %s9
  loop: start=0, step=1, limit=4
  $region2: #{sab_forward.2} parent=0 // loop_pre_header
    _
  $region3: #{sab_forward.2} parent=0 // loop_header
    %s14 = sphi 0, %s18
    %p15 = scmp.ge.s32.totalorder %s14, 4
    %s24 = sphi 0, %s26
    %s27 = sphi 0, %s24
    %s28 = sphi 0, %s27
    %s44 = sphi 0, %s28
    %s48 = sphi 0, %s48
    %s50 = sphi 0, %s48
    %s51 = sphi 0, %s50
    %s65 = sphi 0, %s51
    %s69 = sphi 0, %s69
    %s71 = sphi 0, %s69
    %s72 = sphi 0, %s71
    %s86 = sphi 0, %s72
    %s90 = sphi 0, %s90
    %s92 = sphi 0, %s90
    %s93 = sphi 0, %s92
    %s107 = sphi 0, %s93
    %s111 = sphi 0, %s111
    %s113 = sphi 0, %s111
    %s114 = sphi 0, %s113
    %s128 = sphi 0, %s114
    %s134 = sphi 0, %s136
    %s137 = sphi 0, %s134
    %s138 = sphi 0, %s137
    %s154 = sphi 0, %s138
    %s160 = sphi 0, %s162
    %s163 = sphi 0, %s160
    %s164 = sphi 0, %s163
    %s180 = sphi 0, %s164
    %s186 = sphi 0, %s188
    %s189 = sphi 0, %s186
    %s190 = sphi 0, %s189
    %s206 = sphi 0, %s190
  $region4: #{sab_forward.2} parent=0 // loop_header_branch
    %17 = sbr.rel (%p15) target = $region8
  $region5: #{sab_forward.2} parent=0 // loop_body
    %s19 = ssub.s32 %s14, 1
    %s20 = ssub.s32 %s14, 2
    %s21 = sadd.s32 %s14, 1
    %s22 = ssub.s32 %s14, %s21
    %p23 = scmp.eq.s32.totalorder %s22, 0
    %s25 = sadd.s32 %s24, 1
    %s26 = scalar_select %p23, %s24, %s25
    %p29 = pneg %p23
    %p30 = scmp.eq.s32.totalorder %s14, 1
    %p31 = por %p29, %p30
    %p32 = scmp.ne.s32.totalorder %s24, %s27
    %p33 = scmp.eq.s32.totalorder %s14, 0
    %p34 = por %p32, %p33
    %p35 = scmp.ne.s32.totalorder %s24, %s27
    %p36 = scmp.eq.s32.totalorder %s19, 1
    %p37 = por %p35, %p36
    %p38 = scmp.ne.s32.totalorder %s27, %s28
    %p39 = scmp.eq.s32.totalorder %s19, 0
    %p40 = por %p38, %p39
    %p41 = scmp.ne.s32.totalorder %s27, %s28
    %p42 = scmp.eq.s32.totalorder %s20, 1
    %p43 = por %p41, %p42
    %p45 = scmp.ne.s32.totalorder %s28, %s44
    %p46 = scmp.eq.s32.totalorder %s20, 0
    %p47 = por %p45, %p46
    %s49 = sadd.s32 %s48, 1
    %p52 = scmp.eq.s32.totalorder %s14, 1
    %p53 = scmp.ne.s32.totalorder %s48, %s50
    %p54 = scmp.eq.s32.totalorder %s14, 0
    %p55 = por %p53, %p54
    %p56 = scmp.ne.s32.totalorder %s48, %s50
    %p57 = scmp.eq.s32.totalorder %s19, 1
    %p58 = por %p56, %p57
    %p59 = scmp.ne.s32.totalorder %s50, %s51
    %p60 = scmp.eq.s32.totalorder %s19, 0
    %p61 = por %p59, %p60
    %p62 = scmp.ne.s32.totalorder %s50, %s51
    %p63 = scmp.eq.s32.totalorder %s20, 1
    %p64 = por %p62, %p63
    %p66 = scmp.ne.s32.totalorder %s51, %s65
    %p67 = scmp.eq.s32.totalorder %s20, 0
    %p68 = por %p66, %p67
    %s70 = sadd.s32 %s69, 1
    %p73 = scmp.eq.s32.totalorder %s14, 1
    %p74 = scmp.ne.s32.totalorder %s69, %s71
    %p75 = scmp.eq.s32.totalorder %s14, 0
    %p76 = por %p74, %p75
    %p77 = scmp.ne.s32.totalorder %s69, %s71
    %p78 = scmp.eq.s32.totalorder %s19, 1
    %p79 = por %p77, %p78
    %p80 = scmp.ne.s32.totalorder %s71, %s72
    %p81 = scmp.eq.s32.totalorder %s19, 0
    %p82 = por %p80, %p81
    %p83 = scmp.ne.s32.totalorder %s71, %s72
    %p84 = scmp.eq.s32.totalorder %s20, 1
    %p85 = por %p83, %p84
    %p87 = scmp.ne.s32.totalorder %s72, %s86
    %p88 = scmp.eq.s32.totalorder %s20, 0
    %p89 = por %p87, %p88
    %s91 = sadd.s32 %s90, 1
    %p94 = scmp.eq.s32.totalorder %s14, 1
    %p95 = scmp.ne.s32.totalorder %s90, %s92
    %p96 = scmp.eq.s32.totalorder %s14, 0
    %p97 = por %p95, %p96
    %p98 = scmp.ne.s32.totalorder %s90, %s92
    %p99 = scmp.eq.s32.totalorder %s19, 1
    %p100 = por %p98, %p99
    %p101 = scmp.ne.s32.totalorder %s92, %s93
    %p102 = scmp.eq.s32.totalorder %s19, 0
    %p103 = por %p101, %p102
    %p104 = scmp.ne.s32.totalorder %s92, %s93
    %p105 = scmp.eq.s32.totalorder %s20, 1
    %p106 = por %p104, %p105
    %p108 = scmp.ne.s32.totalorder %s93, %s107
    %p109 = scmp.eq.s32.totalorder %s20, 0
    %p110 = por %p108, %p109
    %s112 = sadd.s32 %s111, 1
    %p115 = scmp.eq.s32.totalorder %s14, 1
    %p116 = scmp.ne.s32.totalorder %s111, %s113
    %p117 = scmp.eq.s32.totalorder %s14, 0
    %p118 = por %p116, %p117
    %p119 = scmp.ne.s32.totalorder %s111, %s113
    %p120 = scmp.eq.s32.totalorder %s19, 1
    %p121 = por %p119, %p120
    %p122 = scmp.ne.s32.totalorder %s113, %s114
    %p123 = scmp.eq.s32.totalorder %s19, 0
    %p124 = por %p122, %p123
    %p125 = scmp.ne.s32.totalorder %s113, %s114
    %p126 = scmp.eq.s32.totalorder %s20, 1
    %p127 = por %p125, %p126
    %p129 = scmp.ne.s32.totalorder %s114, %s128
    %p130 = scmp.eq.s32.totalorder %s20, 0
    %p131 = por %p129, %p130
    %s132 = ssub.s32 %s14, %s21
    %p133 = scmp.eq.s32.totalorder %s132, 0
    %s135 = sadd.s32 %s134, 1
    %s136 = scalar_select %p133, %s134, %s135
    %p139 = pneg %p133
    %p140 = scmp.eq.s32.totalorder %s14, 1
    %p141 = por %p139, %p140
    %p142 = scmp.ne.s32.totalorder %s134, %s137
    %p143 = scmp.eq.s32.totalorder %s14, 0
    %p144 = por %p142, %p143
    %p145 = scmp.ne.s32.totalorder %s134, %s137
    %p146 = scmp.eq.s32.totalorder %s19, 1
    %p147 = por %p145, %p146
    %p148 = scmp.ne.s32.totalorder %s137, %s138
    %p149 = scmp.eq.s32.totalorder %s19, 0
    %p150 = por %p148, %p149
    %p151 = scmp.ne.s32.totalorder %s137, %s138
    %p152 = scmp.eq.s32.totalorder %s20, 1
    %p153 = por %p151, %p152
    %p155 = scmp.ne.s32.totalorder %s138, %s154
    %p156 = scmp.eq.s32.totalorder %s20, 0
    %p157 = por %p155, %p156
    %s158 = ssub.s32 %s14, %s21
    %p159 = scmp.eq.s32.totalorder %s158, 0
    %s161 = sadd.s32 %s160, 1
    %s162 = scalar_select %p159, %s160, %s161
    %p165 = pneg %p159
    %p166 = scmp.eq.s32.totalorder %s14, 1
    %p167 = por %p165, %p166
    %p168 = scmp.ne.s32.totalorder %s160, %s163
    %p169 = scmp.eq.s32.totalorder %s14, 0
    %p170 = por %p168, %p169
    %p171 = scmp.ne.s32.totalorder %s160, %s163
    %p172 = scmp.eq.s32.totalorder %s19, 1
    %p173 = por %p171, %p172
    %p174 = scmp.ne.s32.totalorder %s163, %s164
    %p175 = scmp.eq.s32.totalorder %s19, 0
    %p176 = por %p174, %p175
    %p177 = scmp.ne.s32.totalorder %s163, %s164
    %p178 = scmp.eq.s32.totalorder %s20, 1
    %p179 = por %p177, %p178
    %p181 = scmp.ne.s32.totalorder %s164, %s180
    %p182 = scmp.eq.s32.totalorder %s20, 0
    %p183 = por %p181, %p182
    %s184 = ssub.s32 %s14, %s21
    %p185 = scmp.eq.s32.totalorder %s184, 0
    %s187 = sadd.s32 %s186, 1
    %s188 = scalar_select %p185, %s186, %s187
    %p191 = pneg %p185
    %p192 = scmp.eq.s32.totalorder %s14, 1
    %p193 = por %p191, %p192
    %p194 = scmp.ne.s32.totalorder %s186, %s189
    %p195 = scmp.eq.s32.totalorder %s14, 0
    %p196 = por %p194, %p195
    %p197 = scmp.ne.s32.totalorder %s186, %s189
    %p198 = scmp.eq.s32.totalorder %s19, 1
    %p199 = por %p197, %p198
    %p200 = scmp.ne.s32.totalorder %s189, %s190
    %p201 = scmp.eq.s32.totalorder %s19, 0
    %p202 = por %p200, %p201
    %p203 = scmp.ne.s32.totalorder %s189, %s190
    %p204 = scmp.eq.s32.totalorder %s20, 1
    %p205 = por %p203, %p204
    %p207 = scmp.ne.s32.totalorder %s190, %s206
    %p208 = scmp.eq.s32.totalorder %s20, 0
    %p209 = por %p207, %p208
    %p210 = scmp.le.s32.totalorder 1, %s14
    %p211 = scmp.lt.s32.totalorder %s14, 3
    %p212 = pnand %p210, %p211
    %p213 = pneg %p212
    // Predicated region
    $region9: #{sab_forward.2} parent=5 // pred_check
      _
    $region10: #{sab_forward.2} parent=5 // pred_check_branch
      %215 = sbr.rel (%p212) target = $region12
    $region11: #{sab_forward.2} parent=5 // pred_region
      %s216 = ssub.s32 %s14, 1
      // Predicated region
      $region13: #{sab_forward.2} parent=11 // pred_check
        %p217 = pneg %p61
      $region14: #{sab_forward.2} parent=11 // pred_check_branch
        %219 = sbr.rel (%p217) target = $region16
      $region15: #{sab_forward.2} parent=11 // pred_region
        _
      $region16: #{sab_forward.2} parent=11 // pred_fallthru
        _
      // Predicated region
      $region17: #{sab_forward.2} parent=11 // pred_check
        %p220 = pneg %p82
      $region18: #{sab_forward.2} parent=11 // pred_check_branch
        %222 = sbr.rel (%p220) target = $region20
      $region19: #{sab_forward.2} parent=11 // pred_region
        _
      $region20: #{sab_forward.2} parent=11 // pred_fallthru
        _
      // Predicated region
      $region21: #{sab_forward.2} parent=11 // pred_check
        %p223 = pneg %p103
      $region22: #{sab_forward.2} parent=11 // pred_check_branch
        %225 = sbr.rel (%p223) target = $region24
      $region23: #{sab_forward.2} parent=11 // pred_region
        _
      $region24: #{sab_forward.2} parent=11 // pred_fallthru
        _
      // Predicated region
      $region25: #{sab_forward.2} parent=11 // pred_check
        %p226 = pneg %p124
      $region26: #{sab_forward.2} parent=11 // pred_check_branch
        %228 = sbr.rel (%p226) target = $region28
      $region27: #{sab_forward.2} parent=11 // pred_region
        _
      $region28: #{sab_forward.2} parent=11 // pred_fallthru
        _
    $region12: #{sab_forward.2} parent=5 // pred_fallthru
      _
    %p229 = scmp.lt.s32.totalorder %s14, 2
    // Predicated region
    $region29: #{sab_forward.2} parent=5 // pred_check
      %p230 = pneg %p229
    $region30: #{sab_forward.2} parent=5 // pred_check_branch
      %232 = sbr.rel (%p230) target = $region32
    $region31: #{sab_forward.2} parent=5 // pred_region
      // Predicated region
      $region33: #{sab_forward.2} parent=31 // pred_check
        %p233 = pneg %p34
      $region34: #{sab_forward.2} parent=31 // pred_check_branch
        %235 = sbr.rel (%p233) target = $region36
      $region35: #{sab_forward.2} parent=31 // pred_region
        %p236 = scmp.lt.s32.totalorder %s14, 1
        %s237 = scalar_select %p236, %s14, 1
        %s238 = smul.addr %s237, 32
        %s239 = smul.addr %s238, 8
        %s240 = scalar_lea.vmem %s0, %s239
      $region36: #{sab_forward.2} parent=31 // pred_fallthru
        _
    $region32: #{sab_forward.2} parent=5 // pred_fallthru
      _
    %p241 = scmp.le.s32.totalorder 1, %s14
    %p242 = scmp.lt.s32.totalorder %s14, 3
    %p243 = pnand %p241, %p242
    %p244 = pneg %p243
    // Predicated region
    $region37: #{sab_forward.2} parent=5 // pred_check
      _
    $region38: #{sab_forward.2} parent=5 // pred_check_branch
      %246 = sbr.rel (%p243) target = $region40
    $region39: #{sab_forward.2} parent=5 // pred_region
      %s247 = ssub.s32 %s14, 1
      %p248 = scmp.lt.s32.totalorder %s19, 1
      %s249 = scalar_select %p248, %s19, 1
      %s250 = smul.addr %s249, 32
      %s251 = smul.addr %s250, 8
      %s252 = scalar_lea.vmem %s0, %s251
      %p253 = pneg %p40
      %p254 = pneg %p37
      %p255 = pneg %p61
      %p256 = pneg %p58
      %p257 = pneg %p82
      %p258 = pneg %p79
      %p259 = pneg %p103
      %p260 = pneg %p100
      %p261 = pneg %p124
      %p262 = pneg %p121
      %p263 = pneg %p150
      %p264 = pneg %p147
      %p265 = scmp.lt.s32.totalorder %s19, 1
      %s266 = scalar_select %p265, %s19, 1
      %s267 = smul.addr %s266, 32
      %s268 = smul.addr %s267, 8
      %s269 = scalar_lea.vmem %s5, %s268
      %p270 = pneg %p176
      %p271 = pneg %p173
      %p272 = scmp.lt.s32.totalorder %s19, 1
      %s273 = scalar_select %p272, %s19, 1
      %s274 = scalar_lea.vmem %s6, %s273
      %p275 = pneg %p202
      %p276 = pneg %p199
      %p277 = scmp.lt.s32.totalorder %s19, 1
      %s278 = scalar_select %p277, %s19, 1
      %s279 = scalar_lea.vmem %s7, %s278
      %p280 = scmp.lt.s32.totalorder %s19, 1
      %s281 = scalar_select %p280, %s19, 1
      %s282 = smul.addr %s281, 32
      %s283 = smul.addr %s282, 8
      %s284 = scalar_lea.vmem %s0, %s283
      %p285 = scmp.lt.s32.totalorder %s19, 1
      %s286 = scalar_select %p285, %s19, 1
      %s287 = smul.addr %s286, 32
      %s288 = smul.addr %s287, 8
      %s289 = scalar_lea.vmem %s5, %s288
      %p290 = scmp.lt.s32.totalorder %s19, 1
      %s291 = scalar_select %p290, %s19, 1
      %s292 = scalar_lea.vmem %s6, %s291
      %p293 = scmp.lt.s32.totalorder %s19, 1
      %s294 = scalar_select %p293, %s19, 1
      %s295 = scalar_lea.vmem %s7, %s294
      %v297 = vld [vmem:[%s284] sm:$0xff]
      %v298 = vld [vmem:[%s284 + $0x8] sm:$0xff]
      %v299 = vld [vmem:[%s284 + $0x10] sm:$0xff]
      %v300 = vld [vmem:[%s284 + $0x18] sm:$0xff]
      %v301 = vld [vmem:[%s284 + $0x20] sm:$0xff]
      %v302 = vld [vmem:[%s284 + $0x28] sm:$0xff]
      %v303 = vld [vmem:[%s284 + $0x30] sm:$0xff]
      %v304 = vld [vmem:[%s284 + $0x38] sm:$0xff]
      %v305 = vld [vmem:[%s284 + $0x40] sm:$0xff]
      %v306 = vld [vmem:[%s284 + $0x48] sm:$0xff]
      %v307 = vld [vmem:[%s284 + $0x50] sm:$0xff]
      %v308 = vld [vmem:[%s284 + $0x58] sm:$0xff]
      %v309 = vld [vmem:[%s284 + $0x60] sm:$0xff]
      %v310 = vld [vmem:[%s284 + $0x68] sm:$0xff]
      %v311 = vld [vmem:[%s284 + $0x70] sm:$0xff]
      %v312 = vld [vmem:[%s284 + $0x78] sm:$0xff]
      %v313 = vld [vmem:[%s284 + $0x80] sm:$0xff]
      %v314 = vld [vmem:[%s284 + $0x88] sm:$0xff]
      %v315 = vld [vmem:[%s284 + $0x90] sm:$0xff]
      %v316 = vld [vmem:[%s284 + $0x98] sm:$0xff]
      %v317 = vld [vmem:[%s284 + $0xa0] sm:$0xff]
      %v318 = vld [vmem:[%s284 + $0xa8] sm:$0xff]
      %v319 = vld [vmem:[%s284 + $0xb0] sm:$0xff]
      %v320 = vld [vmem:[%s284 + $0xb8] sm:$0xff]
      %v321 = vld [vmem:[%s284 + $0xc0] sm:$0xff]
      %v322 = vld [vmem:[%s284 + $0xc8] sm:$0xff]
      %v323 = vld [vmem:[%s284 + $0xd0] sm:$0xff]
      %v324 = vld [vmem:[%s284 + $0xd8] sm:$0xff]
      %v325 = vld [vmem:[%s284 + $0xe0] sm:$0xff]
      %v326 = vld [vmem:[%s284 + $0xe8] sm:$0xff]
      %v327 = vld [vmem:[%s284 + $0xf0] sm:$0xff]
      %v328 = vld [vmem:[%s284 + $0xf8] sm:$0xff]
      %v329 = vpack.c.bf16 %v298, %v297
      %v330 = vpack.c.bf16 %v300, %v299
      %v331 = vpack.c.bf16 %v302, %v301
      %v332 = vpack.c.bf16 %v304, %v303
      %v333 = vpack.c.bf16 %v306, %v305
      %v334 = vpack.c.bf16 %v308, %v307
      %v335 = vpack.c.bf16 %v310, %v309
      %v336 = vpack.c.bf16 %v312, %v311
      %v337 = vpack.c.bf16 %v314, %v313
      %v338 = vpack.c.bf16 %v316, %v315
      %v339 = vpack.c.bf16 %v318, %v317
      %v340 = vpack.c.bf16 %v320, %v319
      %v341 = vpack.c.bf16 %v322, %v321
      %v342 = vpack.c.bf16 %v324, %v323
      %v343 = vpack.c.bf16 %v326, %v325
      %v344 = vpack.c.bf16 %v328, %v327
      %v345 = vld [vmem:[%s1] sm:$0xf]
      %v346 = vld [vmem:[%s1 + $0x4] sm:$0xf]
      %v347 = vld [vmem:[%s2] sm:$0x1]
      %v349 = vperm.slane %v347, 0
      %v353 = vunpack.c.l.b16 %v345
      %v354 = vunpack.c.l.b16 %v346
      %v355 = vpack.c.b16 %v354, %v353
      %vm357 = vcmask 130048
      %v359 = vsel %vm357, %v329, 0
      %v362 = vsel %vm357, %v330, 0
      %v365 = vsel %vm357, %v331, 0
      %v368 = vsel %vm357, %v332, 0
      %v371 = vsel %vm357, %v333, 0
      %v374 = vsel %vm357, %v334, 0
      %v377 = vsel %vm357, %v335, 0
      %v380 = vsel %vm357, %v336, 0
      %v383 = vsel %vm357, %v337, 0
      %v386 = vsel %vm357, %v338, 0
      %v389 = vsel %vm357, %v339, 0
      %v392 = vsel %vm357, %v340, 0
      %v395 = vsel %vm357, %v341, 0
      %v398 = vsel %vm357, %v342, 0
      %v401 = vsel %vm357, %v343, 0
      %v404 = vsel %vm357, %v344, 0
      %406 = vmatpush.bf16.msra.mxu0 0
      %407 = vmatpush.bf16.msra.mxu0 0
      %408 = vmatpush.bf16.msra.mxu0 0
      %409 = vmatpush.bf16.msra.mxu0 0
      %410 = vmatpush.bf16.msra.mxu0 0
      %411 = vmatpush.bf16.msra.mxu0 0
      %412 = vmatpush.bf16.msra.mxu0 0
      %413 = vmatpush.bf16.msra.mxu0 %v355
      %414 = vmatmul.bf16.gmra.mxu0 %v359
      %v415 = vpop.f32.mrf.mxu0
      %v416 = vadd.f32 %v349, %v415
      %v417 = vpop.f32.mrf.mxu0
      %v418 = vadd.f32 %v349, %v417
      %419 = vmatmul.bf16.gmra.mxu0 %v362
      %v420 = vpop.f32.mrf.mxu0
      %v421 = vadd.f32 %v349, %v420
      %v422 = vpop.f32.mrf.mxu0
      %v423 = vadd.f32 %v349, %v422
      %424 = vmatmul.bf16.gmra.mxu0 %v365
      %v425 = vpop.f32.mrf.mxu0
      %v426 = vadd.f32 %v349, %v425
      %v427 = vpop.f32.mrf.mxu0
      %v428 = vadd.f32 %v349, %v427
      %429 = vmatmul.bf16.gmra.mxu0 %v368
      %v430 = vpop.f32.mrf.mxu0
      %v431 = vadd.f32 %v349, %v430
      %v432 = vpop.f32.mrf.mxu0
      %v433 = vadd.f32 %v349, %v432
      %434 = vmatmul.bf16.gmra.mxu0 %v371
      %v435 = vpop.f32.mrf.mxu0
      %v436 = vadd.f32 %v349, %v435
      %v437 = vpop.f32.mrf.mxu0
      %v438 = vadd.f32 %v349, %v437
      %439 = vmatmul.bf16.gmra.mxu0 %v374
      %v440 = vpop.f32.mrf.mxu0
      %v441 = vadd.f32 %v349, %v440
      %v442 = vpop.f32.mrf.mxu0
      %v443 = vadd.f32 %v349, %v442
      %444 = vmatmul.bf16.gmra.mxu0 %v377
      %v445 = vpop.f32.mrf.mxu0
      %v446 = vadd.f32 %v349, %v445
      %v447 = vpop.f32.mrf.mxu0
      %v448 = vadd.f32 %v349, %v447
      %449 = vmatmul.bf16.gmra.mxu0 %v380
      %v450 = vpop.f32.mrf.mxu0
      %v451 = vadd.f32 %v349, %v450
      %v452 = vpop.f32.mrf.mxu0
      %v453 = vadd.f32 %v349, %v452
      %454 = vmatmul.bf16.gmra.mxu0 %v383
      %v455 = vpop.f32.mrf.mxu0
      %v456 = vadd.f32 %v349, %v455
      %v457 = vpop.f32.mrf.mxu0
      %v458 = vadd.f32 %v349, %v457
      %459 = vmatmul.bf16.gmra.mxu0 %v386
      %v460 = vpop.f32.mrf.mxu0
      %v461 = vadd.f32 %v349, %v460
      %v462 = vpop.f32.mrf.mxu0
      %v463 = vadd.f32 %v349, %v462
      %464 = vmatmul.bf16.gmra.mxu0 %v389
      %v465 = vpop.f32.mrf.mxu0
      %v466 = vadd.f32 %v349, %v465
      %v467 = vpop.f32.mrf.mxu0
      %v468 = vadd.f32 %v349, %v467
      %469 = vmatmul.bf16.gmra.mxu0 %v392
      %v470 = vpop.f32.mrf.mxu0
      %v471 = vadd.f32 %v349, %v470
      %v472 = vpop.f32.mrf.mxu0
      %v473 = vadd.f32 %v349, %v472
      %474 = vmatmul.bf16.gmra.mxu0 %v395
      %v475 = vpop.f32.mrf.mxu0
      %v476 = vadd.f32 %v349, %v475
      %v477 = vpop.f32.mrf.mxu0
      %v478 = vadd.f32 %v349, %v477
      %479 = vmatmul.bf16.gmra.mxu0 %v398
      %v480 = vpop.f32.mrf.mxu0
      %v481 = vadd.f32 %v349, %v480
      %v482 = vpop.f32.mrf.mxu0
      %v483 = vadd.f32 %v349, %v482
      %484 = vmatmul.bf16.gmra.mxu0 %v401
      %v485 = vpop.f32.mrf.mxu0
      %v486 = vadd.f32 %v349, %v485
      %v487 = vpop.f32.mrf.mxu0
      %v488 = vadd.f32 %v349, %v487
      %489 = vmatmul.bf16.gmra.mxu0 %v404
      %v490 = vpop.f32.mrf.mxu0
      %v491 = vadd.f32 %v349, %v490
      %v492 = vpop.f32.mrf.mxu0
      %v493 = vadd.f32 %v349, %v492
      %494 = vdwg.mxu0
      %v495 = vpack.c.bf16 %v418, %v416
      %v496 = vpack.c.bf16 %v423, %v421
      %v497 = vpack.c.bf16 %v428, %v426
      %v498 = vpack.c.bf16 %v433, %v431
      %v499 = vpack.c.bf16 %v438, %v436
      %v500 = vpack.c.bf16 %v443, %v441
      %v501 = vpack.c.bf16 %v448, %v446
      %v502 = vpack.c.bf16 %v453, %v451
      %v503 = vpack.c.bf16 %v458, %v456
      %v504 = vpack.c.bf16 %v463, %v461
      %v505 = vpack.c.bf16 %v468, %v466
      %v506 = vpack.c.bf16 %v473, %v471
      %v507 = vpack.c.bf16 %v478, %v476
      %v508 = vpack.c.bf16 %v483, %v481
      %v509 = vpack.c.bf16 %v488, %v486
      %v510 = vpack.c.bf16 %v493, %v491
      %v511 = vmul.f32 %v416, 0.70710677
      %v512 = vmul.f32 %v418, 0.70710677
      %v513 = vmul.f32 %v421, 0.70710677
      %v514 = vmul.f32 %v423, 0.70710677
      %v515 = vmul.f32 %v426, 0.70710677
      %v516 = vmul.f32 %v428, 0.70710677
      %v517 = vmul.f32 %v431, 0.70710677
      %v518 = vmul.f32 %v433, 0.70710677
      %v519 = vmul.f32 %v436, 0.70710677
      %v520 = vmul.f32 %v438, 0.70710677
      %v521 = vmul.f32 %v441, 0.70710677
      %v522 = vmul.f32 %v443, 0.70710677
      %v523 = vmul.f32 %v446, 0.70710677
      %v524 = vmul.f32 %v448, 0.70710677
      %v525 = vmul.f32 %v451, 0.70710677
      %v526 = vmul.f32 %v453, 0.70710677
      %v527 = vmul.f32 %v456, 0.70710677
      %v528 = vmul.f32 %v458, 0.70710677
      %v529 = vmul.f32 %v461, 0.70710677
      %v530 = vmul.f32 %v463, 0.70710677
      %v531 = vmul.f32 %v466, 0.70710677
      %v532 = vmul.f32 %v468, 0.70710677
      %v533 = vmul.f32 %v471, 0.70710677
      %v534 = vmul.f32 %v473, 0.70710677
      %v535 = vmul.f32 %v476, 0.70710677
      %v536 = vmul.f32 %v478, 0.70710677
      %v537 = vmul.f32 %v481, 0.70710677
      %v538 = vmul.f32 %v483, 0.70710677
      %v539 = vmul.f32 %v486, 0.70710677
      %v540 = vmul.f32 %v488, 0.70710677
      %v541 = vmul.f32 %v491, 0.70710677
      %v542 = vmul.f32 %v493, 0.70710677
      %v543 = vpack.c.bf16 %v512, %v511
      %v544 = vpack.c.bf16 %v514, %v513
      %v545 = vpack.c.bf16 %v516, %v515
      %v546 = vpack.c.bf16 %v518, %v517
      %v547 = vpack.c.bf16 %v520, %v519
      %v548 = vpack.c.bf16 %v522, %v521
      %v549 = vpack.c.bf16 %v524, %v523
      %v550 = vpack.c.bf16 %v526, %v525
      %v551 = vpack.c.bf16 %v528, %v527
      %v552 = vpack.c.bf16 %v530, %v529
      %v553 = vpack.c.bf16 %v532, %v531
      %v554 = vpack.c.bf16 %v534, %v533
      %v555 = vpack.c.bf16 %v536, %v535
      %v556 = vpack.c.bf16 %v538, %v537
      %v557 = vpack.c.bf16 %v540, %v539
      %v558 = vpack.c.bf16 %v542, %v541
      %559 = vst.msk [vmem:[#allocation2] sm:$0xff] %vm357, 0.0
      %560 = vst.msk [vmem:[#allocation2 + $0x8] sm:$0xff] %vm357, 0.0
      %561 = vst.msk [vmem:[#allocation2 + $0x10] sm:$0xff] %vm357, 0.0
      %562 = vst.msk [vmem:[#allocation2 + $0x118] sm:$0xff] %vm357, 0.0
      %563 = vst.msk [vmem:[#allocation2 + $0x120] sm:$0xff] %vm357, 0.0
      %564 = vst.msk [vmem:[#allocation2 + $0x128] sm:$0xff] %vm357, 0.0
      %581 = vrot.lane.b32.xlu0 %v543, 112
      %v582 = vpop.permute.xlu0 %581
      %583 = vrot.lane.b32.xlu0 %v544, 112
      %v584 = vpop.permute.xlu0 %583
      %585 = vrot.lane.b32.xlu0 %v545, 112
      %v586 = vpop.permute.xlu0 %585
      %587 = vrot.lane.b32.xlu0 %v546, 112
      %v588 = vpop.permute.xlu0 %587
      %589 = vrot.lane.b32.xlu0 %v547, 112
      %v590 = vpop.permute.xlu0 %589
      %591 = vrot.lane.b32.xlu0 %v548, 112
      %v592 = vpop.permute.xlu0 %591
      %593 = vrot.lane.b32.xlu0 %v549, 112
      %v594 = vpop.permute.xlu0 %593
      %595 = vrot.lane.b32.xlu0 %v550, 112
      %v596 = vpop.permute.xlu0 %595
      %597 = vrot.lane.b32.xlu0 %v551, 112
      %v598 = vpop.permute.xlu0 %597
      %599 = vrot.lane.b32.xlu0 %v552, 112
      %v600 = vpop.permute.xlu0 %599
      %601 = vrot.lane.b32.xlu0 %v553, 112
      %v602 = vpop.permute.xlu0 %601
      %603 = vrot.lane.b32.xlu0 %v554, 112
      %v604 = vpop.permute.xlu0 %603
      %605 = vrot.lane.b32.xlu0 %v555, 112
      %v606 = vpop.permute.xlu0 %605
      %607 = vrot.lane.b32.xlu0 %v556, 112
      %v608 = vpop.permute.xlu0 %607
      %609 = vrot.lane.b32.xlu0 %v557, 112
      %v610 = vpop.permute.xlu0 %609
      %611 = vrot.lane.b32.xlu0 %v558, 112
      %v612 = vpop.permute.xlu0 %611
      %629 = vrot.lane.b32.xlu0 %v495, 110
      %v630 = vpop.permute.xlu0 %629
      %631 = vrot.lane.b32.xlu0 %v496, 110
      %v632 = vpop.permute.xlu0 %631
      %633 = vrot.lane.b32.xlu0 %v497, 110
      %v634 = vpop.permute.xlu0 %633
      %635 = vrot.lane.b32.xlu0 %v498, 110
      %v636 = vpop.permute.xlu0 %635
      %637 = vrot.lane.b32.xlu0 %v499, 110
      %v638 = vpop.permute.xlu0 %637
      %639 = vrot.lane.b32.xlu0 %v500, 110
      %v640 = vpop.permute.xlu0 %639
      %641 = vrot.lane.b32.xlu0 %v501, 110
      %v642 = vpop.permute.xlu0 %641
      %643 = vrot.lane.b32.xlu0 %v502, 110
      %v644 = vpop.permute.xlu0 %643
      %645 = vrot.lane.b32.xlu0 %v503, 110
      %v646 = vpop.permute.xlu0 %645
      %647 = vrot.lane.b32.xlu0 %v504, 110
      %v648 = vpop.permute.xlu0 %647
      %649 = vrot.lane.b32.xlu0 %v505, 110
      %v650 = vpop.permute.xlu0 %649
      %651 = vrot.lane.b32.xlu0 %v506, 110
      %v652 = vpop.permute.xlu0 %651
      %653 = vrot.lane.b32.xlu0 %v507, 110
      %v654 = vpop.permute.xlu0 %653
      %655 = vrot.lane.b32.xlu0 %v508, 110
      %v656 = vpop.permute.xlu0 %655
      %657 = vrot.lane.b32.xlu0 %v509, 110
      %v658 = vpop.permute.xlu0 %657
      %659 = vrot.lane.b32.xlu0 %v510, 110
      %v660 = vpop.permute.xlu0 %659
      %vm661 = vcmask 15360
      %v663 = vsel %vm661, %v582, 0
      %v666 = vsel %vm661, %v584, 0
      %v669 = vsel %vm661, %v586, 0
      %v672 = vsel %vm661, %v588, 0
      %v675 = vsel %vm661, %v590, 0
      %v678 = vsel %vm661, %v592, 0
      %v681 = vsel %vm661, %v594, 0
      %v684 = vsel %vm661, %v596, 0
      %v687 = vsel %vm661, %v598, 0
      %v690 = vsel %vm661, %v600, 0
      %v693 = vsel %vm661, %v602, 0
      %v696 = vsel %vm661, %v604, 0
      %v699 = vsel %vm661, %v606, 0
      %v702 = vsel %vm661, %v608, 0
      %v705 = vsel %vm661, %v610, 0
      %v708 = vsel %vm661, %v612, 0
      %v711 = vsel %vm661, %v630, 0
      %v714 = vsel %vm661, %v632, 0
      %v717 = vsel %vm661, %v634, 0
      %v720 = vsel %vm661, %v636, 0
      %v723 = vsel %vm661, %v638, 0
      %v726 = vsel %vm661, %v640, 0
      %v729 = vsel %vm661, %v642, 0
      %v732 = vsel %vm661, %v644, 0
      %v735 = vsel %vm661, %v646, 0
      %v738 = vsel %vm661, %v648, 0
      %v741 = vsel %vm661, %v650, 0
      %v744 = vsel %vm661, %v652, 0
      %v747 = vsel %vm661, %v654, 0
      %v750 = vsel %vm661, %v656, 0
      %v753 = vsel %vm661, %v658, 0
      %v756 = vsel %vm661, %v660, 0
      %758 = vmatpush.bf16.xpose.msra.mxu0 %v732
      %759 = vmatpush.bf16.xpose.msra.mxu0 %v729
      %760 = vmatpush.bf16.xpose.msra.mxu0 %v726
      %761 = vmatpush.bf16.xpose.msra.mxu0 %v723
      %762 = vmatpush.bf16.xpose.msra.mxu0 %v720
      %763 = vmatpush.bf16.xpose.msra.mxu0 %v717
      %764 = vmatpush.bf16.xpose.msra.mxu0 %v714
      %765 = vmatpush.bf16.xpose.msra.mxu0 %v711
      %766 = vmatmul.bf16.gmra.mxu0 %v663
      %v767 = vpop.f32.mrf.mxu0
      %v768 = vadd.f32 0.0, %v767
      %v769 = vpop.f32.mrf.mxu0
      %v770 = vadd.f32 0.0, %v769
      %771 = vmatmul.bf16.gmra.mxu0 %v666
      %v772 = vpop.f32.mrf.mxu0
      %v773 = vadd.f32 0.0, %v772
      %v774 = vpop.f32.mrf.mxu0
      %v775 = vadd.f32 0.0, %v774
      %776 = vmatmul.bf16.gmra.mxu0 %v669
      %v777 = vpop.f32.mrf.mxu0
      %v778 = vadd.f32 0.0, %v777
      %v779 = vpop.f32.mrf.mxu0
      %v780 = vadd.f32 0.0, %v779
      %781 = vmatmul.bf16.gmra.mxu0 %v672
      %v782 = vpop.f32.mrf.mxu0
      %v783 = vadd.f32 0.0, %v782
      %v784 = vpop.f32.mrf.mxu0
      %v785 = vadd.f32 0.0, %v784
      %786 = vmatmul.bf16.gmra.mxu0 %v675
      %v787 = vpop.f32.mrf.mxu0
      %v788 = vadd.f32 0.0, %v787
      %v789 = vpop.f32.mrf.mxu0
      %v790 = vadd.f32 0.0, %v789
      %791 = vmatmul.bf16.gmra.mxu0 %v678
      %v792 = vpop.f32.mrf.mxu0
      %v793 = vadd.f32 0.0, %v792
      %v794 = vpop.f32.mrf.mxu0
      %v795 = vadd.f32 0.0, %v794
      %796 = vmatmul.bf16.gmra.mxu0 %v681
      %v797 = vpop.f32.mrf.mxu0
      %v798 = vadd.f32 0.0, %v797
      %v799 = vpop.f32.mrf.mxu0
      %v800 = vadd.f32 0.0, %v799
      %801 = vmatmul.bf16.gmra.mxu0 %v684
      %v802 = vpop.f32.mrf.mxu0
      %v803 = vadd.f32 0.0, %v802
      %v804 = vpop.f32.mrf.mxu0
      %v805 = vadd.f32 0.0, %v804
      %806 = vmatmul.bf16.gmra.mxu0 %v687
      %v807 = vpop.f32.mrf.mxu0
      %v808 = vadd.f32 0.0, %v807
      %v809 = vpop.f32.mrf.mxu0
      %v810 = vadd.f32 0.0, %v809
      %811 = vmatmul.bf16.gmra.mxu0 %v690
      %v812 = vpop.f32.mrf.mxu0
      %v813 = vadd.f32 0.0, %v812
      %v814 = vpop.f32.mrf.mxu0
      %v815 = vadd.f32 0.0, %v814
      %816 = vmatmul.bf16.gmra.mxu0 %v693
      %v817 = vpop.f32.mrf.mxu0
      %v818 = vadd.f32 0.0, %v817
      %v819 = vpop.f32.mrf.mxu0
      %v820 = vadd.f32 0.0, %v819
      %821 = vmatmul.bf16.gmra.mxu0 %v696
      %v822 = vpop.f32.mrf.mxu0
      %v823 = vadd.f32 0.0, %v822
      %v824 = vpop.f32.mrf.mxu0
      %v825 = vadd.f32 0.0, %v824
      %826 = vmatmul.bf16.gmra.mxu0 %v699
      %v827 = vpop.f32.mrf.mxu0
      %v828 = vadd.f32 0.0, %v827
      %v829 = vpop.f32.mrf.mxu0
      %v830 = vadd.f32 0.0, %v829
      %831 = vmatmul.bf16.gmra.mxu0 %v702
      %v832 = vpop.f32.mrf.mxu0
      %v833 = vadd.f32 0.0, %v832
      %v834 = vpop.f32.mrf.mxu0
      %v835 = vadd.f32 0.0, %v834
      %836 = vmatmul.bf16.gmra.mxu0 %v705
      %v837 = vpop.f32.mrf.mxu0
      %v838 = vadd.f32 0.0, %v837
      %v839 = vpop.f32.mrf.mxu0
      %v840 = vadd.f32 0.0, %v839
      %841 = vmatmul.bf16.gmra.mxu0 %v708
      %v842 = vpop.f32.mrf.mxu0
      %v843 = vadd.f32 0.0, %v842
      %v844 = vpop.f32.mrf.mxu0
      %v845 = vadd.f32 0.0, %v844
      %846 = vdwg.mxu0
      %847 = vmatpush.bf16.xpose.msra.mxu0 %v756
      %848 = vmatpush.bf16.xpose.msra.mxu0 %v753
      %849 = vmatpush.bf16.xpose.msra.mxu0 %v750
      %850 = vmatpush.bf16.xpose.msra.mxu0 %v747
      %851 = vmatpush.bf16.xpose.msra.mxu0 %v744
      %852 = vmatpush.bf16.xpose.msra.mxu0 %v741
      %853 = vmatpush.bf16.xpose.msra.mxu0 %v738
      %854 = vmatpush.bf16.xpose.msra.mxu0 %v735
      %855 = vmatmul.bf16.gmra.mxu0 %v663
      %v856 = vpop.f32.mrf.mxu0
      %v857 = vadd.f32 0.0, %v856
      %v858 = vpop.f32.mrf.mxu0
      %v859 = vadd.f32 0.0, %v858
      %860 = vmatmul.bf16.gmra.mxu0 %v666
      %v861 = vpop.f32.mrf.mxu0
      %v862 = vadd.f32 0.0, %v861
      %v863 = vpop.f32.mrf.mxu0
      %v864 = vadd.f32 0.0, %v863
      %865 = vmatmul.bf16.gmra.mxu0 %v669
      %v866 = vpop.f32.mrf.mxu0
      %v867 = vadd.f32 0.0, %v866
      %v868 = vpop.f32.mrf.mxu0
      %v869 = vadd.f32 0.0, %v868
      %870 = vmatmul.bf16.gmra.mxu0 %v672
      %v871 = vpop.f32.mrf.mxu0
      %v872 = vadd.f32 0.0, %v871
      %v873 = vpop.f32.mrf.mxu0
      %v874 = vadd.f32 0.0, %v873
      %875 = vmatmul.bf16.gmra.mxu0 %v675
      %v876 = vpop.f32.mrf.mxu0
      %v877 = vadd.f32 0.0, %v876
      %v878 = vpop.f32.mrf.mxu0
      %v879 = vadd.f32 0.0, %v878
      %880 = vmatmul.bf16.gmra.mxu0 %v678
      %v881 = vpop.f32.mrf.mxu0
      %v882 = vadd.f32 0.0, %v881
      %v883 = vpop.f32.mrf.mxu0
      %v884 = vadd.f32 0.0, %v883
      %885 = vmatmul.bf16.gmra.mxu0 %v681
      %v886 = vpop.f32.mrf.mxu0
      %v887 = vadd.f32 0.0, %v886
      %v888 = vpop.f32.mrf.mxu0
      %v889 = vadd.f32 0.0, %v888
      %890 = vmatmul.bf16.gmra.mxu0 %v684
      %v891 = vpop.f32.mrf.mxu0
      %v892 = vadd.f32 0.0, %v891
      %v893 = vpop.f32.mrf.mxu0
      %v894 = vadd.f32 0.0, %v893
      %895 = vmatmul.bf16.gmra.mxu0 %v687
      %v896 = vpop.f32.mrf.mxu0
      %v897 = vadd.f32 0.0, %v896
      %v898 = vpop.f32.mrf.mxu0
      %v899 = vadd.f32 0.0, %v898
      %900 = vmatmul.bf16.gmra.mxu0 %v690
      %v901 = vpop.f32.mrf.mxu0
      %v902 = vadd.f32 0.0, %v901
      %v903 = vpop.f32.mrf.mxu0
      %v904 = vadd.f32 0.0, %v903
      %905 = vmatmul.bf16.gmra.mxu0 %v693
      %v906 = vpop.f32.mrf.mxu0
      %v907 = vadd.f32 0.0, %v906
      %v908 = vpop.f32.mrf.mxu0
      %v909 = vadd.f32 0.0, %v908
      %910 = vmatmul.bf16.gmra.mxu0 %v696
      %v911 = vpop.f32.mrf.mxu0
      %v912 = vadd.f32 0.0, %v911
      %v913 = vpop.f32.mrf.mxu0
      %v914 = vadd.f32 0.0, %v913
      %915 = vmatmul.bf16.gmra.mxu0 %v699
      %v916 = vpop.f32.mrf.mxu0
      %v917 = vadd.f32 0.0, %v916
      %v918 = vpop.f32.mrf.mxu0
      %v919 = vadd.f32 0.0, %v918
      %920 = vmatmul.bf16.gmra.mxu0 %v702
      %v921 = vpop.f32.mrf.mxu0
      %v922 = vadd.f32 0.0, %v921
      %v923 = vpop.f32.mrf.mxu0
      %v924 = vadd.f32 0.0, %v923
      %925 = vmatmul.bf16.gmra.mxu0 %v705
      %v926 = vpop.f32.mrf.mxu0
      %v927 = vadd.f32 0.0, %v926
      %v928 = vpop.f32.mrf.mxu0
      %v929 = vadd.f32 0.0, %v928
      %930 = vmatmul.bf16.gmra.mxu0 %v708
      %v931 = vpop.f32.mrf.mxu0
      %v932 = vadd.f32 0.0, %v931
      %v933 = vpop.f32.mrf.mxu0
      %v934 = vadd.f32 0.0, %v933
      %935 = vdwg.mxu0
      %v936 = vmax.f32 %v768, %v857
      %937 = vmax.xlane.f32.xlu0 %v936
      %v938 = vpop.xlane.xlu0 %937
      %v939 = vmax.f32 %v770, %v859
      %940 = vmax.xlane.f32.xlu0 %v939
      %v941 = vpop.xlane.xlu0 %940
      %v942 = vmax.f32 %v773, %v862
      %943 = vmax.xlane.f32.xlu0 %v942
      %v944 = vpop.xlane.xlu0 %943
      %v945 = vmax.f32 %v775, %v864
      %946 = vmax.xlane.f32.xlu0 %v945
      %v947 = vpop.xlane.xlu0 %946
      %v948 = vmax.f32 %v778, %v867
      %949 = vmax.xlane.f32.xlu0 %v948
      %v950 = vpop.xlane.xlu0 %949
      %v951 = vmax.f32 %v780, %v869
      %952 = vmax.xlane.f32.xlu0 %v951
      %v953 = vpop.xlane.xlu0 %952
      %v954 = vmax.f32 %v783, %v872
      %955 = vmax.xlane.f32.xlu0 %v954
      %v956 = vpop.xlane.xlu0 %955
      %v957 = vmax.f32 %v785, %v874
      %958 = vmax.xlane.f32.xlu0 %v957
      %v959 = vpop.xlane.xlu0 %958
      %v960 = vmax.f32 %v788, %v877
      %961 = vmax.xlane.f32.xlu0 %v960
      %v962 = vpop.xlane.xlu0 %961
      %v963 = vmax.f32 %v790, %v879
      %964 = vmax.xlane.f32.xlu0 %v963
      %v965 = vpop.xlane.xlu0 %964
      %v966 = vmax.f32 %v793, %v882
      %967 = vmax.xlane.f32.xlu0 %v966
      %v968 = vpop.xlane.xlu0 %967
      %v969 = vmax.f32 %v795, %v884
      %970 = vmax.xlane.f32.xlu0 %v969
      %v971 = vpop.xlane.xlu0 %970
      %v972 = vmax.f32 %v798, %v887
      %973 = vmax.xlane.f32.xlu0 %v972
      %v974 = vpop.xlane.xlu0 %973
      %v975 = vmax.f32 %v800, %v889
      %976 = vmax.xlane.f32.xlu0 %v975
      %v977 = vpop.xlane.xlu0 %976
      %v978 = vmax.f32 %v803, %v892
      %979 = vmax.xlane.f32.xlu0 %v978
      %v980 = vpop.xlane.xlu0 %979
      %v981 = vmax.f32 %v805, %v894
      %982 = vmax.xlane.f32.xlu0 %v981
      %v983 = vpop.xlane.xlu0 %982
      %v984 = vmax.f32 %v808, %v897
      %985 = vmax.xlane.f32.xlu0 %v984
      %v986 = vpop.xlane.xlu0 %985
      %v987 = vmax.f32 %v810, %v899
      %988 = vmax.xlane.f32.xlu0 %v987
      %v989 = vpop.xlane.xlu0 %988
      %v990 = vmax.f32 %v813, %v902
      %991 = vmax.xlane.f32.xlu0 %v990
      %v992 = vpop.xlane.xlu0 %991
      %v993 = vmax.f32 %v815, %v904
      %994 = vmax.xlane.f32.xlu0 %v993
      %v995 = vpop.xlane.xlu0 %994
      %v996 = vmax.f32 %v818, %v907
      %997 = vmax.xlane.f32.xlu0 %v996
      %v998 = vpop.xlane.xlu0 %997
      %v999 = vmax.f32 %v820, %v909
      %1000 = vmax.xlane.f32.xlu0 %v999
      %v1001 = vpop.xlane.xlu0 %1000
      %v1002 = vmax.f32 %v823, %v912
      %1003 = vmax.xlane.f32.xlu0 %v1002
      %v1004 = vpop.xlane.xlu0 %1003
      %v1005 = vmax.f32 %v825, %v914
      %1006 = vmax.xlane.f32.xlu0 %v1005
      %v1007 = vpop.xlane.xlu0 %1006
      %v1008 = vmax.f32 %v828, %v917
      %1009 = vmax.xlane.f32.xlu0 %v1008
      %v1010 = vpop.xlane.xlu0 %1009
      %v1011 = vmax.f32 %v830, %v919
      %1012 = vmax.xlane.f32.xlu0 %v1011
      %v1013 = vpop.xlane.xlu0 %1012
      %v1014 = vmax.f32 %v833, %v922
      %1015 = vmax.xlane.f32.xlu0 %v1014
      %v1016 = vpop.xlane.xlu0 %1015
      %v1017 = vmax.f32 %v835, %v924
      %1018 = vmax.xlane.f32.xlu0 %v1017
      %v1019 = vpop.xlane.xlu0 %1018
      %v1020 = vmax.f32 %v838, %v927
      %1021 = vmax.xlane.f32.xlu0 %v1020
      %v1022 = vpop.xlane.xlu0 %1021
      %v1023 = vmax.f32 %v840, %v929
      %1024 = vmax.xlane.f32.xlu0 %v1023
      %v1025 = vpop.xlane.xlu0 %1024
      %v1026 = vmax.f32 %v843, %v932
      %1027 = vmax.xlane.f32.xlu0 %v1026
      %v1028 = vpop.xlane.xlu0 %1027
      %v1029 = vmax.f32 %v845, %v934
      %1030 = vmax.xlane.f32.xlu0 %v1029
      %v1031 = vpop.xlane.xlu0 %1030
      %v1032 = vsub.f32 %v768, %v938
      %v1033 = vsub.f32 %v857, %v938
      %v1034 = vsub.f32 %v770, %v941
      %v1035 = vsub.f32 %v859, %v941
      %v1036 = vsub.f32 %v773, %v944
      %v1037 = vsub.f32 %v862, %v944
      %v1038 = vsub.f32 %v775, %v947
      %v1039 = vsub.f32 %v864, %v947
      %v1040 = vsub.f32 %v778, %v950
      %v1041 = vsub.f32 %v867, %v950
      %v1042 = vsub.f32 %v780, %v953
      %v1043 = vsub.f32 %v869, %v953
      %v1044 = vsub.f32 %v783, %v956
      %v1045 = vsub.f32 %v872, %v956
      %v1046 = vsub.f32 %v785, %v959
      %v1047 = vsub.f32 %v874, %v959
      %v1048 = vsub.f32 %v788, %v962
      %v1049 = vsub.f32 %v877, %v962
      %v1050 = vsub.f32 %v790, %v965
      %v1051 = vsub.f32 %v879, %v965
      %v1052 = vsub.f32 %v793, %v968
      %v1053 = vsub.f32 %v882, %v968
      %v1054 = vsub.f32 %v795, %v971
      %v1055 = vsub.f32 %v884, %v971
      %v1056 = vsub.f32 %v798, %v974
      %v1057 = vsub.f32 %v887, %v974
      %v1058 = vsub.f32 %v800, %v977
      %v1059 = vsub.f32 %v889, %v977
      %v1060 = vsub.f32 %v803, %v980
      %v1061 = vsub.f32 %v892, %v980
      %v1062 = vsub.f32 %v805, %v983
      %v1063 = vsub.f32 %v894, %v983
      %v1064 = vsub.f32 %v808, %v986
      %v1065 = vsub.f32 %v897, %v986
      %v1066 = vsub.f32 %v810, %v989
      %v1067 = vsub.f32 %v899, %v989
      %v1068 = vsub.f32 %v813, %v992
      %v1069 = vsub.f32 %v902, %v992
      %v1070 = vsub.f32 %v815, %v995
      %v1071 = vsub.f32 %v904, %v995
      %v1072 = vsub.f32 %v818, %v998
      %v1073 = vsub.f32 %v907, %v998
      %v1074 = vsub.f32 %v820, %v1001
      %v1075 = vsub.f32 %v909, %v1001
      %v1076 = vsub.f32 %v823, %v1004
      %v1077 = vsub.f32 %v912, %v1004
      %v1078 = vsub.f32 %v825, %v1007
      %v1079 = vsub.f32 %v914, %v1007
      %v1080 = vsub.f32 %v828, %v1010
      %v1081 = vsub.f32 %v917, %v1010
      %v1082 = vsub.f32 %v830, %v1013
      %v1083 = vsub.f32 %v919, %v1013
      %v1084 = vsub.f32 %v833, %v1016
      %v1085 = vsub.f32 %v922, %v1016
      %v1086 = vsub.f32 %v835, %v1019
      %v1087 = vsub.f32 %v924, %v1019
      %v1088 = vsub.f32 %v838, %v1022
      %v1089 = vsub.f32 %v927, %v1022
      %v1090 = vsub.f32 %v840, %v1025
      %v1091 = vsub.f32 %v929, %v1025
      %v1092 = vsub.f32 %v843, %v1028
      %v1093 = vsub.f32 %v932, %v1028
      %v1094 = vsub.f32 %v845, %v1031
      %v1095 = vsub.f32 %v934, %v1031
      %v1096 = vmul.f32 %v1032, 1.442695
      %v1097 = vpow.pop %v1096
      %v1098 = vmul.f32 %v1033, 1.442695
      %v1099 = vpow.pop %v1098
      %v1100 = vmul.f32 %v1034, 1.442695
      %v1101 = vpow.pop %v1100
      %v1102 = vmul.f32 %v1035, 1.442695
      %v1103 = vpow.pop %v1102
      %v1104 = vmul.f32 %v1036, 1.442695
      %v1105 = vpow.pop %v1104
      %v1106 = vmul.f32 %v1037, 1.442695
      %v1107 = vpow.pop %v1106
      %v1108 = vmul.f32 %v1038, 1.442695
      %v1109 = vpow.pop %v1108
      %v1110 = vmul.f32 %v1039, 1.442695
      %v1111 = vpow.pop %v1110
      %v1112 = vmul.f32 %v1040, 1.442695
      %v1113 = vpow.pop %v1112
      %v1114 = vmul.f32 %v1041, 1.442695
      %v1115 = vpow.pop %v1114
      %v1116 = vmul.f32 %v1042, 1.442695
      %v1117 = vpow.pop %v1116
      %v1118 = vmul.f32 %v1043, 1.442695
      %v1119 = vpow.pop %v1118
      %v1120 = vmul.f32 %v1044, 1.442695
      %v1121 = vpow.pop %v1120
      %v1122 = vmul.f32 %v1045, 1.442695
      %v1123 = vpow.pop %v1122
      %v1124 = vmul.f32 %v1046, 1.442695
      %v1125 = vpow.pop %v1124
      %v1126 = vmul.f32 %v1047, 1.442695
      %v1127 = vpow.pop %v1126
      %v1128 = vmul.f32 %v1048, 1.442695
      %v1129 = vpow.pop %v1128
      %v1130 = vmul.f32 %v1049, 1.442695
      %v1131 = vpow.pop %v1130
      %v1132 = vmul.f32 %v1050, 1.442695
      %v1133 = vpow.pop %v1132
      %v1134 = vmul.f32 %v1051, 1.442695
      %v1135 = vpow.pop %v1134
      %v1136 = vmul.f32 %v1052, 1.442695
      %v1137 = vpow.pop %v1136
      %v1138 = vmul.f32 %v1053, 1.442695
      %v1139 = vpow.pop %v1138
      %v1140 = vmul.f32 %v1054, 1.442695
      %v1141 = vpow.pop %v1140
      %v1142 = vmul.f32 %v1055, 1.442695
      %v1143 = vpow.pop %v1142
      %v1144 = vmul.f32 %v1056, 1.442695
      %v1145 = vpow.pop %v1144
      %v1146 = vmul.f32 %v1057, 1.442695
      %v1147 = vpow.pop %v1146
      %v1148 = vmul.f32 %v1058, 1.442695
      %v1149 = vpow.pop %v1148
      %v1150 = vmul.f32 %v1059, 1.442695
      %v1151 = vpow.pop %v1150
      %v1152 = vmul.f32 %v1060, 1.442695
      %v1153 = vpow.pop %v1152
      %v1154 = vmul.f32 %v1061, 1.442695
      %v1155 = vpow.pop %v1154
      %v1156 = vmul.f32 %v1062, 1.442695
      %v1157 = vpow.pop %v1156
      %v1158 = vmul.f32 %v1063, 1.442695
      %v1159 = vpow.pop %v1158
      %v1160 = vmul.f32 %v1064, 1.442695
      %v1161 = vpow.pop %v1160
      %v1162 = vmul.f32 %v1065, 1.442695
      %v1163 = vpow.pop %v1162
      %v1164 = vmul.f32 %v1066, 1.442695
      %v1165 = vpow.pop %v1164
      %v1166 = vmul.f32 %v1067, 1.442695
      %v1167 = vpow.pop %v1166
      %v1168 = vmul.f32 %v1068, 1.442695
      %v1169 = vpow.pop %v1168
      %v1170 = vmul.f32 %v1069, 1.442695
      %v1171 = vpow.pop %v1170
      %v1172 = vmul.f32 %v1070, 1.442695
      %v1173 = vpow.pop %v1172
      %v1174 = vmul.f32 %v1071, 1.442695
      %v1175 = vpow.pop %v1174
      %v1176 = vmul.f32 %v1072, 1.442695
      %v1177 = vpow.pop %v1176
      %v1178 = vmul.f32 %v1073, 1.442695
      %v1179 = vpow.pop %v1178
      %v1180 = vmul.f32 %v1074, 1.442695
      %v1181 = vpow.pop %v1180
      %v1182 = vmul.f32 %v1075, 1.442695
      %v1183 = vpow.pop %v1182
      %v1184 = vmul.f32 %v1076, 1.442695
      %v1185 = vpow.pop %v1184
      %v1186 = vmul.f32 %v1077, 1.442695
      %v1187 = vpow.pop %v1186
      %v1188 = vmul.f32 %v1078, 1.442695
      %v1189 = vpow.pop %v1188
      %v1190 = vmul.f32 %v1079, 1.442695
      %v1191 = vpow.pop %v1190
      %v1192 = vmul.f32 %v1080, 1.442695
      %v1193 = vpow.pop %v1192
      %v1194 = vmul.f32 %v1081, 1.442695
      %v1195 = vpow.pop %v1194
      %v1196 = vmul.f32 %v1082, 1.442695
      %v1197 = vpow.pop %v1196
      %v1198 = vmul.f32 %v1083, 1.442695
      %v1199 = vpow.pop %v1198
      %v1200 = vmul.f32 %v1084, 1.442695
      %v1201 = vpow.pop %v1200
      %v1202 = vmul.f32 %v1085, 1.442695
      %v1203 = vpow.pop %v1202
      %v1204 = vmul.f32 %v1086, 1.442695
      %v1205 = vpow.pop %v1204
      %v1206 = vmul.f32 %v1087, 1.442695
      %v1207 = vpow.pop %v1206
      %v1208 = vmul.f32 %v1088, 1.442695
      %v1209 = vpow.pop %v1208
      %v1210 = vmul.f32 %v1089, 1.442695
      %v1211 = vpow.pop %v1210
      %v1212 = vmul.f32 %v1090, 1.442695
      %v1213 = vpow.pop %v1212
      %v1214 = vmul.f32 %v1091, 1.442695
      %v1215 = vpow.pop %v1214
      %v1216 = vmul.f32 %v1092, 1.442695
      %v1217 = vpow.pop %v1216
      %v1218 = vmul.f32 %v1093, 1.442695
      %v1219 = vpow.pop %v1218
      %v1220 = vmul.f32 %v1094, 1.442695
      %v1221 = vpow.pop %v1220
      %v1222 = vmul.f32 %v1095, 1.442695
      %v1223 = vpow.pop %v1222
      %v1224 = vadd.f32 %v1097, %v1099
      %1225 = vadd.xlane.f32.xlu0 %v1224
      %v1226 = vpop.xlane.xlu0 %1225
      %v1227 = vadd.f32 %v1101, %v1103
      %1228 = vadd.xlane.f32.xlu0 %v1227
      %v1229 = vpop.xlane.xlu0 %1228
      %v1230 = vadd.f32 %v1105, %v1107
      %1231 = vadd.xlane.f32.xlu0 %v1230
      %v1232 = vpop.xlane.xlu0 %1231
      %v1233 = vadd.f32 %v1109, %v1111
      %1234 = vadd.xlane.f32.xlu0 %v1233
      %v1235 = vpop.xlane.xlu0 %1234
      %v1236 = vadd.f32 %v1113, %v1115
      %1237 = vadd.xlane.f32.xlu0 %v1236
      %v1238 = vpop.xlane.xlu0 %1237
      %v1239 = vadd.f32 %v1117, %v1119
      %1240 = vadd.xlane.f32.xlu0 %v1239
      %v1241 = vpop.xlane.xlu0 %1240
      %v1242 = vadd.f32 %v1121, %v1123
      %1243 = vadd.xlane.f32.xlu0 %v1242
      %v1244 = vpop.xlane.xlu0 %1243
      %v1245 = vadd.f32 %v1125, %v1127
      %1246 = vadd.xlane.f32.xlu0 %v1245
      %v1247 = vpop.xlane.xlu0 %1246
      %v1248 = vadd.f32 %v1129, %v1131
      %1249 = vadd.xlane.f32.xlu0 %v1248
      %v1250 = vpop.xlane.xlu0 %1249
      %v1251 = vadd.f32 %v1133, %v1135
      %1252 = vadd.xlane.f32.xlu0 %v1251
      %v1253 = vpop.xlane.xlu0 %1252
      %v1254 = vadd.f32 %v1137, %v1139
      %1255 = vadd.xlane.f32.xlu0 %v1254
      %v1256 = vpop.xlane.xlu0 %1255
      %v1257 = vadd.f32 %v1141, %v1143
      %1258 = vadd.xlane.f32.xlu0 %v1257
      %v1259 = vpop.xlane.xlu0 %1258
      %v1260 = vadd.f32 %v1145, %v1147
      %1261 = vadd.xlane.f32.xlu0 %v1260
      %v1262 = vpop.xlane.xlu0 %1261
      %v1263 = vadd.f32 %v1149, %v1151
      %1264 = vadd.xlane.f32.xlu0 %v1263
      %v1265 = vpop.xlane.xlu0 %1264
      %v1266 = vadd.f32 %v1153, %v1155
      %1267 = vadd.xlane.f32.xlu0 %v1266
      %v1268 = vpop.xlane.xlu0 %1267
      %v1269 = vadd.f32 %v1157, %v1159
      %1270 = vadd.xlane.f32.xlu0 %v1269
      %v1271 = vpop.xlane.xlu0 %1270
      %v1272 = vadd.f32 %v1161, %v1163
      %1273 = vadd.xlane.f32.xlu0 %v1272
      %v1274 = vpop.xlane.xlu0 %1273
      %v1275 = vadd.f32 %v1165, %v1167
      %1276 = vadd.xlane.f32.xlu0 %v1275
      %v1277 = vpop.xlane.xlu0 %1276
      %v1278 = vadd.f32 %v1169, %v1171
      %1279 = vadd.xlane.f32.xlu0 %v1278
      %v1280 = vpop.xlane.xlu0 %1279
      %v1281 = vadd.f32 %v1173, %v1175
      %1282 = vadd.xlane.f32.xlu0 %v1281
      %v1283 = vpop.xlane.xlu0 %1282
      %v1284 = vadd.f32 %v1177, %v1179
      %1285 = vadd.xlane.f32.xlu0 %v1284
      %v1286 = vpop.xlane.xlu0 %1285
      %v1287 = vadd.f32 %v1181, %v1183
      %1288 = vadd.xlane.f32.xlu0 %v1287
      %v1289 = vpop.xlane.xlu0 %1288
      %v1290 = vadd.f32 %v1185, %v1187
      %1291 = vadd.xlane.f32.xlu0 %v1290
      %v1292 = vpop.xlane.xlu0 %1291
      %v1293 = vadd.f32 %v1189, %v1191
      %1294 = vadd.xlane.f32.xlu0 %v1293
      %v1295 = vpop.xlane.xlu0 %1294
      %v1296 = vadd.f32 %v1193, %v1195
      %1297 = vadd.xlane.f32.xlu0 %v1296
      %v1298 = vpop.xlane.xlu0 %1297
      %v1299 = vadd.f32 %v1197, %v1199
      %1300 = vadd.xlane.f32.xlu0 %v1299
      %v1301 = vpop.xlane.xlu0 %1300
      %v1302 = vadd.f32 %v1201, %v1203
      %1303 = vadd.xlane.f32.xlu0 %v1302
      %v1304 = vpop.xlane.xlu0 %1303
      %v1305 = vadd.f32 %v1205, %v1207
      %1306 = vadd.xlane.f32.xlu0 %v1305
      %v1307 = vpop.xlane.xlu0 %1306
      %v1308 = vadd.f32 %v1209, %v1211
      %1309 = vadd.xlane.f32.xlu0 %v1308
      %v1310 = vpop.xlane.xlu0 %1309
      %v1311 = vadd.f32 %v1213, %v1215
      %1312 = vadd.xlane.f32.xlu0 %v1311
      %v1313 = vpop.xlane.xlu0 %1312
      %v1314 = vadd.f32 %v1217, %v1219
      %1315 = vadd.xlane.f32.xlu0 %v1314
      %v1316 = vpop.xlane.xlu0 %1315
      %v1317 = vadd.f32 %v1221, %v1223
      %1318 = vadd.xlane.f32.xlu0 %v1317
      %v1319 = vpop.xlane.xlu0 %1318
      %v1320 = vrcp.pop %v1226
      %v1321 = vrcp.pop %v1229
      %v1322 = vrcp.pop %v1232
      %v1323 = vrcp.pop %v1235
      %v1324 = vrcp.pop %v1238
      %v1325 = vrcp.pop %v1241
      %v1326 = vrcp.pop %v1244
      %v1327 = vrcp.pop %v1247
      %v1328 = vrcp.pop %v1250
      %v1329 = vrcp.pop %v1253
      %v1330 = vrcp.pop %v1256
      %v1331 = vrcp.pop %v1259
      %v1332 = vrcp.pop %v1262
      %v1333 = vrcp.pop %v1265
      %v1334 = vrcp.pop %v1268
      %v1335 = vrcp.pop %v1271
      %v1336 = vrcp.pop %v1274
      %v1337 = vrcp.pop %v1277
      %v1338 = vrcp.pop %v1280
      %v1339 = vrcp.pop %v1283
      %v1340 = vrcp.pop %v1286
      %v1341 = vrcp.pop %v1289
      %v1342 = vrcp.pop %v1292
      %v1343 = vrcp.pop %v1295
      %v1344 = vrcp.pop %v1298
      %v1345 = vrcp.pop %v1301
      %v1346 = vrcp.pop %v1304
      %v1347 = vrcp.pop %v1307
      %v1348 = vrcp.pop %v1310
      %v1349 = vrcp.pop %v1313
      %v1350 = vrcp.pop %v1316
      %v1351 = vrcp.pop %v1319
      %v1352 = vmul.f32 %v1097, %v1320
      %v1353 = vmul.f32 %v1099, %v1320
      %v1354 = vmul.f32 %v1101, %v1321
      %v1355 = vmul.f32 %v1103, %v1321
      %v1356 = vmul.f32 %v1105, %v1322
      %v1357 = vmul.f32 %v1107, %v1322
      %v1358 = vmul.f32 %v1109, %v1323
      %v1359 = vmul.f32 %v1111, %v1323
      %v1360 = vmul.f32 %v1113, %v1324
      %v1361 = vmul.f32 %v1115, %v1324
      %v1362 = vmul.f32 %v1117, %v1325
      %v1363 = vmul.f32 %v1119, %v1325
      %v1364 = vmul.f32 %v1121, %v1326
      %v1365 = vmul.f32 %v1123, %v1326
      %v1366 = vmul.f32 %v1125, %v1327
      %v1367 = vmul.f32 %v1127, %v1327
      %v1368 = vmul.f32 %v1129, %v1328
      %v1369 = vmul.f32 %v1131, %v1328
      %v1370 = vmul.f32 %v1133, %v1329
      %v1371 = vmul.f32 %v1135, %v1329
      %v1372 = vmul.f32 %v1137, %v1330
      %v1373 = vmul.f32 %v1139, %v1330
      %v1374 = vmul.f32 %v1141, %v1331
      %v1375 = vmul.f32 %v1143, %v1331
      %v1376 = vmul.f32 %v1145, %v1332
      %v1377 = vmul.f32 %v1147, %v1332
      %v1378 = vmul.f32 %v1149, %v1333
      %v1379 = vmul.f32 %v1151, %v1333
      %v1380 = vmul.f32 %v1153, %v1334
      %v1381 = vmul.f32 %v1155, %v1334
      %v1382 = vmul.f32 %v1157, %v1335
      %v1383 = vmul.f32 %v1159, %v1335
      %v1384 = vmul.f32 %v1161, %v1336
      %v1385 = vmul.f32 %v1163, %v1336
      %v1386 = vmul.f32 %v1165, %v1337
      %v1387 = vmul.f32 %v1167, %v1337
      %v1388 = vmul.f32 %v1169, %v1338
      %v1389 = vmul.f32 %v1171, %v1338
      %v1390 = vmul.f32 %v1173, %v1339
      %v1391 = vmul.f32 %v1175, %v1339
      %v1392 = vmul.f32 %v1177, %v1340
      %v1393 = vmul.f32 %v1179, %v1340
      %v1394 = vmul.f32 %v1181, %v1341
      %v1395 = vmul.f32 %v1183, %v1341
      %v1396 = vmul.f32 %v1185, %v1342
      %v1397 = vmul.f32 %v1187, %v1342
      %v1398 = vmul.f32 %v1189, %v1343
      %v1399 = vmul.f32 %v1191, %v1343
      %v1400 = vmul.f32 %v1193, %v1344
      %v1401 = vmul.f32 %v1195, %v1344
      %v1402 = vmul.f32 %v1197, %v1345
      %v1403 = vmul.f32 %v1199, %v1345
      %v1404 = vmul.f32 %v1201, %v1346
      %v1405 = vmul.f32 %v1203, %v1346
      %v1406 = vmul.f32 %v1205, %v1347
      %v1407 = vmul.f32 %v1207, %v1347
      %v1408 = vmul.f32 %v1209, %v1348
      %v1409 = vmul.f32 %v1211, %v1348
      %v1410 = vmul.f32 %v1213, %v1349
      %v1411 = vmul.f32 %v1215, %v1349
      %v1412 = vmul.f32 %v1217, %v1350
      %v1413 = vmul.f32 %v1219, %v1350
      %v1414 = vmul.f32 %v1221, %v1351
      %v1415 = vmul.f32 %v1223, %v1351
      %v1416 = vpack.c.bf16 %v1354, %v1352
      %v1417 = vpack.c.bf16 %v1355, %v1353
      %v1418 = vpack.c.bf16 %v1358, %v1356
      %v1419 = vpack.c.bf16 %v1359, %v1357
      %v1420 = vpack.c.bf16 %v1362, %v1360
      %v1421 = vpack.c.bf16 %v1363, %v1361
      %v1422 = vpack.c.bf16 %v1366, %v1364
      %v1423 = vpack.c.bf16 %v1367, %v1365
      %v1424 = vpack.c.bf16 %v1370, %v1368
      %v1425 = vpack.c.bf16 %v1371, %v1369
      %v1426 = vpack.c.bf16 %v1374, %v1372
      %v1427 = vpack.c.bf16 %v1375, %v1373
      %v1428 = vpack.c.bf16 %v1378, %v1376
      %v1429 = vpack.c.bf16 %v1379, %v1377
      %v1430 = vpack.c.bf16 %v1382, %v1380
      %v1431 = vpack.c.bf16 %v1383, %v1381
      %v1432 = vpack.c.bf16 %v1386, %v1384
      %v1433 = vpack.c.bf16 %v1387, %v1385
      %v1434 = vpack.c.bf16 %v1390, %v1388
      %v1435 = vpack.c.bf16 %v1391, %v1389
      %v1436 = vpack.c.bf16 %v1394, %v1392
      %v1437 = vpack.c.bf16 %v1395, %v1393
      %v1438 = vpack.c.bf16 %v1398, %v1396
      %v1439 = vpack.c.bf16 %v1399, %v1397
      %v1440 = vpack.c.bf16 %v1402, %v1400
      %v1441 = vpack.c.bf16 %v1403, %v1401
      %v1442 = vpack.c.bf16 %v1406, %v1404
      %v1443 = vpack.c.bf16 %v1407, %v1405
      %v1444 = vpack.c.bf16 %v1410, %v1408
      %v1445 = vpack.c.bf16 %v1411, %v1409
      %v1446 = vpack.c.bf16 %v1414, %v1412
      %v1447 = vpack.c.bf16 %v1415, %v1413
      %1448 = vmatpush.bf16.msra.mxu0 %v502
      %1449 = vmatpush.bf16.msra.mxu0 %v501
      %1450 = vmatpush.bf16.msra.mxu0 %v500
      %1451 = vmatpush.bf16.msra.mxu0 %v499
      %1452 = vmatpush.bf16.msra.mxu0 %v498
      %1453 = vmatpush.bf16.msra.mxu0 %v497
      %1454 = vmatpush.bf16.msra.mxu0 %v496
      %1455 = vmatpush.bf16.msra.mxu0 %v495
      %1456 = vmatmul.bf16.gmra.mxu0 %v1416
      %v1457 = vpop.f32.mrf.mxu0
      %v1458 = vadd.f32 0.0, %v1457
      %v1459 = vpop.f32.mrf.mxu0
      %v1460 = vadd.f32 0.0, %v1459
      %1461 = vmatmul.bf16.gmra.mxu0 %v1418
      %v1462 = vpop.f32.mrf.mxu0
      %v1463 = vadd.f32 0.0, %v1462
      %v1464 = vpop.f32.mrf.mxu0
      %v1465 = vadd.f32 0.0, %v1464
      %1466 = vmatmul.bf16.gmra.mxu0 %v1420
      %v1467 = vpop.f32.mrf.mxu0
      %v1468 = vadd.f32 0.0, %v1467
      %v1469 = vpop.f32.mrf.mxu0
      %v1470 = vadd.f32 0.0, %v1469
      %1471 = vmatmul.bf16.gmra.mxu0 %v1422
      %v1472 = vpop.f32.mrf.mxu0
      %v1473 = vadd.f32 0.0, %v1472
      %v1474 = vpop.f32.mrf.mxu0
      %v1475 = vadd.f32 0.0, %v1474
      %1476 = vmatmul.bf16.gmra.mxu0 %v1424
      %v1477 = vpop.f32.mrf.mxu0
      %v1478 = vadd.f32 0.0, %v1477
      %v1479 = vpop.f32.mrf.mxu0
      %v1480 = vadd.f32 0.0, %v1479
      %1481 = vmatmul.bf16.gmra.mxu0 %v1426
      %v1482 = vpop.f32.mrf.mxu0
      %v1483 = vadd.f32 0.0, %v1482
      %v1484 = vpop.f32.mrf.mxu0
      %v1485 = vadd.f32 0.0, %v1484
      %1486 = vmatmul.bf16.gmra.mxu0 %v1428
      %v1487 = vpop.f32.mrf.mxu0
      %v1488 = vadd.f32 0.0, %v1487
      %v1489 = vpop.f32.mrf.mxu0
      %v1490 = vadd.f32 0.0, %v1489
      %1491 = vmatmul.bf16.gmra.mxu0 %v1430
      %v1492 = vpop.f32.mrf.mxu0
      %v1493 = vadd.f32 0.0, %v1492
      %v1494 = vpop.f32.mrf.mxu0
      %v1495 = vadd.f32 0.0, %v1494
      %1496 = vmatmul.bf16.gmra.mxu0 %v1432
      %v1497 = vpop.f32.mrf.mxu0
      %v1498 = vadd.f32 0.0, %v1497
      %v1499 = vpop.f32.mrf.mxu0
      %v1500 = vadd.f32 0.0, %v1499
      %1501 = vmatmul.bf16.gmra.mxu0 %v1434
      %v1502 = vpop.f32.mrf.mxu0
      %v1503 = vadd.f32 0.0, %v1502
      %v1504 = vpop.f32.mrf.mxu0
      %v1505 = vadd.f32 0.0, %v1504
      %1506 = vmatmul.bf16.gmra.mxu0 %v1436
      %v1507 = vpop.f32.mrf.mxu0
      %v1508 = vadd.f32 0.0, %v1507
      %v1509 = vpop.f32.mrf.mxu0
      %v1510 = vadd.f32 0.0, %v1509
      %1511 = vmatmul.bf16.gmra.mxu0 %v1438
      %v1512 = vpop.f32.mrf.mxu0
      %v1513 = vadd.f32 0.0, %v1512
      %v1514 = vpop.f32.mrf.mxu0
      %v1515 = vadd.f32 0.0, %v1514
      %1516 = vmatmul.bf16.gmra.mxu0 %v1440
      %v1517 = vpop.f32.mrf.mxu0
      %v1518 = vadd.f32 0.0, %v1517
      %v1519 = vpop.f32.mrf.mxu0
      %v1520 = vadd.f32 0.0, %v1519
      %1521 = vmatmul.bf16.gmra.mxu0 %v1442
      %v1522 = vpop.f32.mrf.mxu0
      %v1523 = vadd.f32 0.0, %v1522
      %v1524 = vpop.f32.mrf.mxu0
      %v1525 = vadd.f32 0.0, %v1524
      %1526 = vmatmul.bf16.gmra.mxu0 %v1444
      %v1527 = vpop.f32.mrf.mxu0
      %v1528 = vadd.f32 0.0, %v1527
      %v1529 = vpop.f32.mrf.mxu0
      %v1530 = vadd.f32 0.0, %v1529
      %1531 = vmatmul.bf16.gmra.mxu0 %v1446
      %v1532 = vpop.f32.mrf.mxu0
      %v1533 = vadd.f32 0.0, %v1532
      %v1534 = vpop.f32.mrf.mxu0
      %v1535 = vadd.f32 0.0, %v1534
      %1536 = vdwg.mxu0
      %1537 = vmatpush.bf16.msra.mxu0 %v510
      %1538 = vmatpush.bf16.msra.mxu0 %v509
      %1539 = vmatpush.bf16.msra.mxu0 %v508
      %1540 = vmatpush.bf16.msra.mxu0 %v507
      %1541 = vmatpush.bf16.msra.mxu0 %v506
      %1542 = vmatpush.bf16.msra.mxu0 %v505
      %1543 = vmatpush.bf16.msra.mxu0 %v504
      %1544 = vmatpush.bf16.msra.mxu0 %v503
      %1545 = vmatmul.bf16.gmra.mxu0 %v1417
      %v1546 = vpop.f32.mrf.mxu0
      %v1547 = vadd.f32 %v1458, %v1546
      %v1548 = vpop.f32.mrf.mxu0
      %v1549 = vadd.f32 %v1460, %v1548
      %1550 = vmatmul.bf16.gmra.mxu0 %v1419
      %v1551 = vpop.f32.mrf.mxu0
      %v1552 = vadd.f32 %v1463, %v1551
      %v1553 = vpop.f32.mrf.mxu0
      %v1554 = vadd.f32 %v1465, %v1553
      %1555 = vmatmul.bf16.gmra.mxu0 %v1421
      %v1556 = vpop.f32.mrf.mxu0
      %v1557 = vadd.f32 %v1468, %v1556
      %v1558 = vpop.f32.mrf.mxu0
      %v1559 = vadd.f32 %v1470, %v1558
      %1560 = vmatmul.bf16.gmra.mxu0 %v1423
      %v1561 = vpop.f32.mrf.mxu0
      %v1562 = vadd.f32 %v1473, %v1561
      %v1563 = vpop.f32.mrf.mxu0
      %v1564 = vadd.f32 %v1475, %v1563
      %1565 = vmatmul.bf16.gmra.mxu0 %v1425
      %v1566 = vpop.f32.mrf.mxu0
      %v1567 = vadd.f32 %v1478, %v1566
      %v1568 = vpop.f32.mrf.mxu0
      %v1569 = vadd.f32 %v1480, %v1568
      %1570 = vmatmul.bf16.gmra.mxu0 %v1427
      %v1571 = vpop.f32.mrf.mxu0
      %v1572 = vadd.f32 %v1483, %v1571
      %v1573 = vpop.f32.mrf.mxu0
      %v1574 = vadd.f32 %v1485, %v1573
      %1575 = vmatmul.bf16.gmra.mxu0 %v1429
      %v1576 = vpop.f32.mrf.mxu0
      %v1577 = vadd.f32 %v1488, %v1576
      %v1578 = vpop.f32.mrf.mxu0
      %v1579 = vadd.f32 %v1490, %v1578
      %1580 = vmatmul.bf16.gmra.mxu0 %v1431
      %v1581 = vpop.f32.mrf.mxu0
      %v1582 = vadd.f32 %v1493, %v1581
      %v1583 = vpop.f32.mrf.mxu0
      %v1584 = vadd.f32 %v1495, %v1583
      %1585 = vmatmul.bf16.gmra.mxu0 %v1433
      %v1586 = vpop.f32.mrf.mxu0
      %v1587 = vadd.f32 %v1498, %v1586
      %v1588 = vpop.f32.mrf.mxu0
      %v1589 = vadd.f32 %v1500, %v1588
      %1590 = vmatmul.bf16.gmra.mxu0 %v1435
      %v1591 = vpop.f32.mrf.mxu0
      %v1592 = vadd.f32 %v1503, %v1591
      %v1593 = vpop.f32.mrf.mxu0
      %v1594 = vadd.f32 %v1505, %v1593
      %1595 = vmatmul.bf16.gmra.mxu0 %v1437
      %v1596 = vpop.f32.mrf.mxu0
      %v1597 = vadd.f32 %v1508, %v1596
      %v1598 = vpop.f32.mrf.mxu0
      %v1599 = vadd.f32 %v1510, %v1598
      %1600 = vmatmul.bf16.gmra.mxu0 %v1439
      %v1601 = vpop.f32.mrf.mxu0
      %v1602 = vadd.f32 %v1513, %v1601
      %v1603 = vpop.f32.mrf.mxu0
      %v1604 = vadd.f32 %v1515, %v1603
      %1605 = vmatmul.bf16.gmra.mxu0 %v1441
      %v1606 = vpop.f32.mrf.mxu0
      %v1607 = vadd.f32 %v1518, %v1606
      %v1608 = vpop.f32.mrf.mxu0
      %v1609 = vadd.f32 %v1520, %v1608
      %1610 = vmatmul.bf16.gmra.mxu0 %v1443
      %v1611 = vpop.f32.mrf.mxu0
      %v1612 = vadd.f32 %v1523, %v1611
      %v1613 = vpop.f32.mrf.mxu0
      %v1614 = vadd.f32 %v1525, %v1613
      %1615 = vmatmul.bf16.gmra.mxu0 %v1445
      %v1616 = vpop.f32.mrf.mxu0
      %v1617 = vadd.f32 %v1528, %v1616
      %v1618 = vpop.f32.mrf.mxu0
      %v1619 = vadd.f32 %v1530, %v1618
      %1620 = vmatmul.bf16.gmra.mxu0 %v1447
      %v1621 = vpop.f32.mrf.mxu0
      %v1622 = vadd.f32 %v1533, %v1621
      %v1623 = vpop.f32.mrf.mxu0
      %v1624 = vadd.f32 %v1535, %v1623
      %1625 = vdwg.mxu0
      %1626 = vst.msk [vmem:[#allocation2 + $0x18] sm:$0xff] %vm357, %v1547
      %1627 = vst.msk [vmem:[#allocation2 + $0x20] sm:$0xff] %vm357, %v1549
      %1628 = vst.msk [vmem:[#allocation2 + $0x28] sm:$0xff] %vm357, %v1552
      %1629 = vst.msk [vmem:[#allocation2 + $0x30] sm:$0xff] %vm357, %v1554
      %1630 = vst.msk [vmem:[#allocation2 + $0x38] sm:$0xff] %vm357, %v1557
      %1631 = vst.msk [vmem:[#allocation2 + $0x40] sm:$0xff] %vm357, %v1559
      %1632 = vst.msk [vmem:[#allocation2 + $0x48] sm:$0xff] %vm357, %v1562
      %1633 = vst.msk [vmem:[#allocation2 + $0x50] sm:$0xff] %vm357, %v1564
      %1634 = vst.msk [vmem:[#allocation2 + $0x58] sm:$0xff] %vm357, %v1567
      %1635 = vst.msk [vmem:[#allocation2 + $0x60] sm:$0xff] %vm357, %v1569
      %1636 = vst.msk [vmem:[#allocation2 + $0x68] sm:$0xff] %vm357, %v1572
      %1637 = vst.msk [vmem:[#allocation2 + $0x70] sm:$0xff] %vm357, %v1574
      %1638 = vst.msk [vmem:[#allocation2 + $0x78] sm:$0xff] %vm357, %v1577
      %1639 = vst.msk [vmem:[#allocation2 + $0x80] sm:$0xff] %vm357, %v1579
      %1640 = vst.msk [vmem:[#allocation2 + $0x88] sm:$0xff] %vm357, %v1582
      %1641 = vst.msk [vmem:[#allocation2 + $0x90] sm:$0xff] %vm357, %v1584
      %1642 = vst.msk [vmem:[#allocation2 + $0x98] sm:$0xff] %vm357, %v1587
      %1643 = vst.msk [vmem:[#allocation2 + $0xa0] sm:$0xff] %vm357, %v1589
      %1644 = vst.msk [vmem:[#allocation2 + $0xa8] sm:$0xff] %vm357, %v1592
      %1645 = vst.msk [vmem:[#allocation2 + $0xb0] sm:$0xff] %vm357, %v1594
      %1646 = vst.msk [vmem:[#allocation2 + $0xb8] sm:$0xff] %vm357, %v1597
      %1647 = vst.msk [vmem:[#allocation2 + $0xc0] sm:$0xff] %vm357, %v1599
      %1648 = vst.msk [vmem:[#allocation2 + $0xc8] sm:$0xff] %vm357, %v1602
      %1649 = vst.msk [vmem:[#allocation2 + $0xd0] sm:$0xff] %vm357, %v1604
      %1650 = vst.msk [vmem:[#allocation2 + $0xd8] sm:$0xff] %vm357, %v1607
      %1651 = vst.msk [vmem:[#allocation2 + $0xe0] sm:$0xff] %vm357, %v1609
      %1652 = vst.msk [vmem:[#allocation2 + $0xe8] sm:$0xff] %vm357, %v1612
      %1653 = vst.msk [vmem:[#allocation2 + $0xf0] sm:$0xff] %vm357, %v1614
      %1654 = vst.msk [vmem:[#allocation2 + $0xf8] sm:$0xff] %vm357, %v1617
      %1655 = vst.msk [vmem:[#allocation2 + $0x100] sm:$0xff] %vm357, %v1619
      %1656 = vst.msk [vmem:[#allocation2 + $0x108] sm:$0xff] %vm357, %v1622
      %1657 = vst.msk [vmem:[#allocation2 + $0x110] sm:$0xff] %vm357, %v1624
      %v1658 = vld [vmem:[#allocation2] sm:$0xff]
      %v1659 = vld [vmem:[#allocation2 + $0x8] sm:$0xff]
      %v1660 = vld [vmem:[#allocation2 + $0x10] sm:$0xff]
      %v1661 = vld [vmem:[#allocation2 + $0x18] sm:$0xff]
      %v1662 = vld [vmem:[#allocation2 + $0x20] sm:$0xff]
      %v1663 = vld [vmem:[#allocation2 + $0x28] sm:$0xff]
      %v1664 = vld [vmem:[#allocation2 + $0x30] sm:$0xff]
      %v1665 = vld [vmem:[#allocation2 + $0x38] sm:$0xff]
      %v1666 = vld [vmem:[#allocation2 + $0x40] sm:$0xff]
      %v1667 = vld [vmem:[#allocation2 + $0x48] sm:$0xff]
      %v1668 = vld [vmem:[#allocation2 + $0x50] sm:$0xff]
      %v1669 = vld [vmem:[#allocation2 + $0x58] sm:$0xff]
      %v1670 = vld [vmem:[#allocation2 + $0x60] sm:$0xff]
      %v1671 = vld [vmem:[#allocation2 + $0x68] sm:$0xff]
      %v1672 = vld [vmem:[#allocation2 + $0x70] sm:$0xff]
      %v1673 = vld [vmem:[#allocation2 + $0x78] sm:$0xff]
      %v1674 = vld [vmem:[#allocation2 + $0x80] sm:$0xff]
      %v1675 = vld [vmem:[#allocation2 + $0x88] sm:$0xff]
      %v1676 = vld [vmem:[#allocation2 + $0x90] sm:$0xff]
      %v1677 = vld [vmem:[#allocation2 + $0x98] sm:$0xff]
      %v1678 = vld [vmem:[#allocation2 + $0xa0] sm:$0xff]
      %v1679 = vld [vmem:[#allocation2 + $0xa8] sm:$0xff]
      %v1680 = vld [vmem:[#allocation2 + $0xb0] sm:$0xff]
      %v1681 = vld [vmem:[#allocation2 + $0xb8] sm:$0xff]
      %v1682 = vld [vmem:[#allocation2 + $0xc0] sm:$0xff]
      %v1683 = vld [vmem:[#allocation2 + $0xc8] sm:$0xff]
      %v1684 = vld [vmem:[#allocation2 + $0xd0] sm:$0xff]
      %v1685 = vld [vmem:[#allocation2 + $0xd8] sm:$0xff]
      %v1686 = vld [vmem:[#allocation2 + $0xe0] sm:$0xff]
      %v1687 = vld [vmem:[#allocation2 + $0xe8] sm:$0xff]
      %v1688 = vld [vmem:[#allocation2 + $0xf0] sm:$0xff]
      %v1689 = vld [vmem:[#allocation2 + $0xf8] sm:$0xff]
      %v1690 = vld [vmem:[#allocation2 + $0x100] sm:$0xff]
      %v1691 = vld [vmem:[#allocation2 + $0x108] sm:$0xff]
      %v1692 = vld [vmem:[#allocation2 + $0x110] sm:$0xff]
      %v1693 = vld [vmem:[#allocation2 + $0x118] sm:$0xff]
      %v1694 = vld [vmem:[#allocation2 + $0x120] sm:$0xff]
      %v1695 = vld [vmem:[#allocation2 + $0x128] sm:$0xff]
      %v1696 = vlaneseq
      %v1697 = vshrl.u32 %v1696, 7
      %v1698 = vadd.s32 %v1697, 8
      %v1699 = vadd.s32 %v1697, 16
      %v1700 = vadd.s32 %v1697, 24
      %v1701 = vadd.s32 %v1697, 32
      %v1702 = vadd.s32 %v1697, 40
      %v1703 = vadd.s32 %v1697, 48
      %v1704 = vadd.s32 %v1697, 56
      %v1705 = vadd.s32 %v1697, 64
      %v1706 = vadd.s32 %v1697, 72
      %v1707 = vadd.s32 %v1697, 80
      %v1708 = vadd.s32 %v1697, 88
      %v1709 = vadd.s32 %v1697, 96
      %v1710 = vadd.s32 %v1697, 104
      %v1711 = vadd.s32 %v1697, 112
      %v1712 = vadd.s32 %v1697, 120
      %v1713 = vadd.s32 %v1697, 128
      %v1714 = vadd.s32 %v1697, 136
      %v1715 = vadd.s32 %v1697, 144
      %v1716 = vadd.s32 %v1697, 152
      %v1717 = vadd.s32 %v1697, 160
      %v1718 = vadd.s32 %v1697, 168
      %v1719 = vadd.s32 %v1697, 176
      %v1720 = vadd.s32 %v1697, 184
      %v1721 = vadd.s32 %v1697, 192
      %v1722 = vadd.s32 %v1697, 200
      %v1723 = vadd.s32 %v1697, 208
      %v1724 = vadd.s32 %v1697, 216
      %v1725 = vadd.s32 %v1697, 224
      %v1726 = vadd.s32 %v1697, 232
      %v1727 = vadd.s32 %v1697, 240
      %v1728 = vadd.s32 %v1697, 248
      %vm1729 = vcmp.lt.s32.totalorder %v1697, 0
      %v1730 = vsub.s32 0, %v1697
      %v1731 = vsel %vm1729, %v1730, %v1697
      %v1732 = vshrl.u32 %v1731, 4
      %v1733 = vand.u32 %v1731, 15
      %v1734 = vsub.s32 0, %v1733
      %v1735 = vsel %vm1729, %v1734, %v1733
      %vm1736 = vcmp.lt.s32.totalorder %v1698, 0
      %v1737 = vsub.s32 0, %v1698
      %v1738 = vsel %vm1736, %v1737, %v1698
      %v1739 = vshrl.u32 %v1738, 4
      %v1740 = vand.u32 %v1738, 15
      %v1741 = vsub.s32 0, %v1740
      %v1742 = vsel %vm1736, %v1741, %v1740
      %vm1743 = vcmp.lt.s32.totalorder %v1699, 0
      %v1744 = vsub.s32 0, %v1699
      %v1745 = vsel %vm1743, %v1744, %v1699
      %v1746 = vshrl.u32 %v1745, 4
      %v1747 = vand.u32 %v1745, 15
      %v1748 = vsub.s32 0, %v1747
      %v1749 = vsel %vm1743, %v1748, %v1747
      %vm1750 = vcmp.lt.s32.totalorder %v1700, 0
      %v1751 = vsub.s32 0, %v1700
      %v1752 = vsel %vm1750, %v1751, %v1700
      %v1753 = vshrl.u32 %v1752, 4
      %v1754 = vand.u32 %v1752, 15
      %v1755 = vsub.s32 0, %v1754
      %v1756 = vsel %vm1750, %v1755, %v1754
      %vm1757 = vcmp.lt.s32.totalorder %v1701, 0
      %v1758 = vsub.s32 0, %v1701
      %v1759 = vsel %vm1757, %v1758, %v1701
      %v1760 = vshrl.u32 %v1759, 4
      %v1761 = vand.u32 %v1759, 15
      %v1762 = vsub.s32 0, %v1761
      %v1763 = vsel %vm1757, %v1762, %v1761
      %vm1764 = vcmp.lt.s32.totalorder %v1702, 0
      %v1765 = vsub.s32 0, %v1702
      %v1766 = vsel %vm1764, %v1765, %v1702
      %v1767 = vshrl.u32 %v1766, 4
      %v1768 = vand.u32 %v1766, 15
      %v1769 = vsub.s32 0, %v1768
      %v1770 = vsel %vm1764, %v1769, %v1768
      %vm1771 = vcmp.lt.s32.totalorder %v1703, 0
      %v1772 = vsub.s32 0, %v1703
      %v1773 = vsel %vm1771, %v1772, %v1703
      %v1774 = vshrl.u32 %v1773, 4
      %v1775 = vand.u32 %v1773, 15
      %v1776 = vsub.s32 0, %v1775
      %v1777 = vsel %vm1771, %v1776, %v1775
      %vm1778 = vcmp.lt.s32.totalorder %v1704, 0
      %v1779 = vsub.s32 0, %v1704
      %v1780 = vsel %vm1778, %v1779, %v1704
      %v1781 = vshrl.u32 %v1780, 4
      %v1782 = vand.u32 %v1780, 15
      %v1783 = vsub.s32 0, %v1782
      %v1784 = vsel %vm1778, %v1783, %v1782
      %vm1785 = vcmp.lt.s32.totalorder %v1705, 0
      %v1786 = vsub.s32 0, %v1705
      %v1787 = vsel %vm1785, %v1786, %v1705
      %v1788 = vshrl.u32 %v1787, 4
      %v1789 = vand.u32 %v1787, 15
      %v1790 = vsub.s32 0, %v1789
      %v1791 = vsel %vm1785, %v1790, %v1789
      %vm1792 = vcmp.lt.s32.totalorder %v1706, 0
      %v1793 = vsub.s32 0, %v1706
      %v1794 = vsel %vm1792, %v1793, %v1706
      %v1795 = vshrl.u32 %v1794, 4
      %v1796 = vand.u32 %v1794, 15
      %v1797 = vsub.s32 0, %v1796
      %v1798 = vsel %vm1792, %v1797, %v1796
      %vm1799 = vcmp.lt.s32.totalorder %v1707, 0
      %v1800 = vsub.s32 0, %v1707
      %v1801 = vsel %vm1799, %v1800, %v1707
      %v1802 = vshrl.u32 %v1801, 4
      %v1803 = vand.u32 %v1801, 15
      %v1804 = vsub.s32 0, %v1803
      %v1805 = vsel %vm1799, %v1804, %v1803
      %vm1806 = vcmp.lt.s32.totalorder %v1708, 0
      %v1807 = vsub.s32 0, %v1708
      %v1808 = vsel %vm1806, %v1807, %v1708
      %v1809 = vshrl.u32 %v1808, 4
      %v1810 = vand.u32 %v1808, 15
      %v1811 = vsub.s32 0, %v1810
      %v1812 = vsel %vm1806, %v1811, %v1810
      %vm1813 = vcmp.lt.s32.totalorder %v1709, 0
      %v1814 = vsub.s32 0, %v1709
      %v1815 = vsel %vm1813, %v1814, %v1709
      %v1816 = vshrl.u32 %v1815, 4
      %v1817 = vand.u32 %v1815, 15
      %v1818 = vsub.s32 0, %v1817
      %v1819 = vsel %vm1813, %v1818, %v1817
      %vm1820 = vcmp.lt.s32.totalorder %v1710, 0
      %v1821 = vsub.s32 0, %v1710
      %v1822 = vsel %vm1820, %v1821, %v1710
      %v1823 = vshrl.u32 %v1822, 4
      %v1824 = vand.u32 %v1822, 15
      %v1825 = vsub.s32 0, %v1824
      %v1826 = vsel %vm1820, %v1825, %v1824
      %vm1827 = vcmp.lt.s32.totalorder %v1711, 0
      %v1828 = vsub.s32 0, %v1711
      %v1829 = vsel %vm1827, %v1828, %v1711
      %v1830 = vshrl.u32 %v1829, 4
      %v1831 = vand.u32 %v1829, 15
      %v1832 = vsub.s32 0, %v1831
      %v1833 = vsel %vm1827, %v1832, %v1831
      %vm1834 = vcmp.lt.s32.totalorder %v1712, 0
      %v1835 = vsub.s32 0, %v1712
      %v1836 = vsel %vm1834, %v1835, %v1712
      %v1837 = vshrl.u32 %v1836, 4
      %v1838 = vand.u32 %v1836, 15
      %v1839 = vsub.s32 0, %v1838
      %v1840 = vsel %vm1834, %v1839, %v1838
      %vm1841 = vcmp.lt.s32.totalorder %v1713, 0
      %v1842 = vsub.s32 0, %v1713
      %v1843 = vsel %vm1841, %v1842, %v1713
      %v1844 = vshrl.u32 %v1843, 4
      %v1845 = vand.u32 %v1843, 15
      %v1846 = vsub.s32 0, %v1845
      %v1847 = vsel %vm1841, %v1846, %v1845
      %vm1848 = vcmp.lt.s32.totalorder %v1714, 0
      %v1849 = vsub.s32 0, %v1714
      %v1850 = vsel %vm1848, %v1849, %v1714
      %v1851 = vshrl.u32 %v1850, 4
      %v1852 = vand.u32 %v1850, 15
      %v1853 = vsub.s32 0, %v1852
      %v1854 = vsel %vm1848, %v1853, %v1852
      %vm1855 = vcmp.lt.s32.totalorder %v1715, 0
      %v1856 = vsub.s32 0, %v1715
      %v1857 = vsel %vm1855, %v1856, %v1715
      %v1858 = vshrl.u32 %v1857, 4
      %v1859 = vand.u32 %v1857, 15
      %v1860 = vsub.s32 0, %v1859
      %v1861 = vsel %vm1855, %v1860, %v1859
      %vm1862 = vcmp.lt.s32.totalorder %v1716, 0
      %v1863 = vsub.s32 0, %v1716
      %v1864 = vsel %vm1862, %v1863, %v1716
      %v1865 = vshrl.u32 %v1864, 4
      %v1866 = vand.u32 %v1864, 15
      %v1867 = vsub.s32 0, %v1866
      %v1868 = vsel %vm1862, %v1867, %v1866
      %vm1869 = vcmp.lt.s32.totalorder %v1717, 0
      %v1870 = vsub.s32 0, %v1717
      %v1871 = vsel %vm1869, %v1870, %v1717
      %v1872 = vshrl.u32 %v1871, 4
      %v1873 = vand.u32 %v1871, 15
      %v1874 = vsub.s32 0, %v1873
      %v1875 = vsel %vm1869, %v1874, %v1873
      %vm1876 = vcmp.lt.s32.totalorder %v1718, 0
      %v1877 = vsub.s32 0, %v1718
      %v1878 = vsel %vm1876, %v1877, %v1718
      %v1879 = vshrl.u32 %v1878, 4
      %v1880 = vand.u32 %v1878, 15
      %v1881 = vsub.s32 0, %v1880
      %v1882 = vsel %vm1876, %v1881, %v1880
      %vm1883 = vcmp.lt.s32.totalorder %v1719, 0
      %v1884 = vsub.s32 0, %v1719
      %v1885 = vsel %vm1883, %v1884, %v1719
      %v1886 = vshrl.u32 %v1885, 4
      %v1887 = vand.u32 %v1885, 15
      %v1888 = vsub.s32 0, %v1887
      %v1889 = vsel %vm1883, %v1888, %v1887
      %vm1890 = vcmp.lt.s32.totalorder %v1720, 0
      %v1891 = vsub.s32 0, %v1720
      %v1892 = vsel %vm1890, %v1891, %v1720
      %v1893 = vshrl.u32 %v1892, 4
      %v1894 = vand.u32 %v1892, 15
      %v1895 = vsub.s32 0, %v1894
      %v1896 = vsel %vm1890, %v1895, %v1894
      %vm1897 = vcmp.lt.s32.totalorder %v1721, 0
      %v1898 = vsub.s32 0, %v1721
      %v1899 = vsel %vm1897, %v1898, %v1721
      %v1900 = vshrl.u32 %v1899, 4
      %v1901 = vand.u32 %v1899, 15
      %v1902 = vsub.s32 0, %v1901
      %v1903 = vsel %vm1897, %v1902, %v1901
      %vm1904 = vcmp.lt.s32.totalorder %v1722, 0
      %v1905 = vsub.s32 0, %v1722
      %v1906 = vsel %vm1904, %v1905, %v1722
      %v1907 = vshrl.u32 %v1906, 4
      %v1908 = vand.u32 %v1906, 15
      %v1909 = vsub.s32 0, %v1908
      %v1910 = vsel %vm1904, %v1909, %v1908
      %vm1911 = vcmp.lt.s32.totalorder %v1723, 0
      %v1912 = vsub.s32 0, %v1723
      %v1913 = vsel %vm1911, %v1912, %v1723
      %v1914 = vshrl.u32 %v1913, 4
      %v1915 = vand.u32 %v1913, 15
      %v1916 = vsub.s32 0, %v1915
      %v1917 = vsel %vm1911, %v1916, %v1915
      %vm1918 = vcmp.lt.s32.totalorder %v1724, 0
      %v1919 = vsub.s32 0, %v1724
      %v1920 = vsel %vm1918, %v1919, %v1724
      %v1921 = vshrl.u32 %v1920, 4
      %v1922 = vand.u32 %v1920, 15
      %v1923 = vsub.s32 0, %v1922
      %v1924 = vsel %vm1918, %v1923, %v1922
      %vm1925 = vcmp.lt.s32.totalorder %v1725, 0
      %v1926 = vsub.s32 0, %v1725
      %v1927 = vsel %vm1925, %v1926, %v1725
      %v1928 = vshrl.u32 %v1927, 4
      %v1929 = vand.u32 %v1927, 15
      %v1930 = vsub.s32 0, %v1929
      %v1931 = vsel %vm1925, %v1930, %v1929
      %vm1932 = vcmp.lt.s32.totalorder %v1726, 0
      %v1933 = vsub.s32 0, %v1726
      %v1934 = vsel %vm1932, %v1933, %v1726
      %v1935 = vshrl.u32 %v1934, 4
      %v1936 = vand.u32 %v1934, 15
      %v1937 = vsub.s32 0, %v1936
      %v1938 = vsel %vm1932, %v1937, %v1936
      %vm1939 = vcmp.lt.s32.totalorder %v1727, 0
      %v1940 = vsub.s32 0, %v1727
      %v1941 = vsel %vm1939, %v1940, %v1727
      %v1942 = vshrl.u32 %v1941, 4
      %v1943 = vand.u32 %v1941, 15
      %v1944 = vsub.s32 0, %v1943
      %v1945 = vsel %vm1939, %v1944, %v1943
      %vm1946 = vcmp.lt.s32.totalorder %v1728, 0
      %v1947 = vsub.s32 0, %v1728
      %v1948 = vsel %vm1946, %v1947, %v1728
      %v1949 = vshrl.u32 %v1948, 4
      %v1950 = vand.u32 %v1948, 15
      %v1951 = vsub.s32 0, %v1950
      %v1952 = vsel %vm1946, %v1951, %v1950
      %vm1953 = vcmp.ne.s32.totalorder %v1735, 0
      %vm1954 = vcmp.ne.s32.totalorder %v1742, 0
      %vm1955 = vcmp.ne.s32.totalorder %v1749, 0
      %vm1956 = vcmp.ne.s32.totalorder %v1756, 0
      %vm1957 = vcmp.ne.s32.totalorder %v1763, 0
      %vm1958 = vcmp.ne.s32.totalorder %v1770, 0
      %vm1959 = vcmp.ne.s32.totalorder %v1777, 0
      %vm1960 = vcmp.ne.s32.totalorder %v1784, 0
      %vm1961 = vcmp.ne.s32.totalorder %v1791, 0
      %vm1962 = vcmp.ne.s32.totalorder %v1798, 0
      %vm1963 = vcmp.ne.s32.totalorder %v1805, 0
      %vm1964 = vcmp.ne.s32.totalorder %v1812, 0
      %vm1965 = vcmp.ne.s32.totalorder %v1819, 0
      %vm1966 = vcmp.ne.s32.totalorder %v1826, 0
      %vm1967 = vcmp.ne.s32.totalorder %v1833, 0
      %vm1968 = vcmp.ne.s32.totalorder %v1840, 0
      %vm1969 = vcmp.ne.s32.totalorder %v1847, 0
      %vm1970 = vcmp.ne.s32.totalorder %v1854, 0
      %vm1971 = vcmp.ne.s32.totalorder %v1861, 0
      %vm1972 = vcmp.ne.s32.totalorder %v1868, 0
      %vm1973 = vcmp.ne.s32.totalorder %v1875, 0
      %vm1974 = vcmp.ne.s32.totalorder %v1882, 0
      %vm1975 = vcmp.ne.s32.totalorder %v1889, 0
      %vm1976 = vcmp.ne.s32.totalorder %v1896, 0
      %vm1977 = vcmp.ne.s32.totalorder %v1903, 0
      %vm1978 = vcmp.ne.s32.totalorder %v1910, 0
      %vm1979 = vcmp.ne.s32.totalorder %v1917, 0
      %vm1980 = vcmp.ne.s32.totalorder %v1924, 0
      %vm1981 = vcmp.ne.s32.totalorder %v1931, 0
      %vm1982 = vcmp.ne.s32.totalorder %v1938, 0
      %vm1983 = vcmp.ne.s32.totalorder %v1945, 0
      %vm1984 = vcmp.ne.s32.totalorder %v1952, 0
      %vm1985 = vcmp.lt.s32.totalorder %v1735, 0
      %vm1986 = vcmp.lt.s32.totalorder %v1742, 0
      %vm1987 = vcmp.lt.s32.totalorder %v1749, 0
      %vm1988 = vcmp.lt.s32.totalorder %v1756, 0
      %vm1989 = vcmp.lt.s32.totalorder %v1763, 0
      %vm1990 = vcmp.lt.s32.totalorder %v1770, 0
      %vm1991 = vcmp.lt.s32.totalorder %v1777, 0
      %vm1992 = vcmp.lt.s32.totalorder %v1784, 0
      %vm1993 = vcmp.lt.s32.totalorder %v1791, 0
      %vm1994 = vcmp.lt.s32.totalorder %v1798, 0
      %vm1995 = vcmp.lt.s32.totalorder %v1805, 0
      %vm1996 = vcmp.lt.s32.totalorder %v1812, 0
      %vm1997 = vcmp.lt.s32.totalorder %v1819, 0
      %vm1998 = vcmp.lt.s32.totalorder %v1826, 0
      %vm1999 = vcmp.lt.s32.totalorder %v1833, 0
      %vm2000 = vcmp.lt.s32.totalorder %v1840, 0
      %vm2001 = vcmp.lt.s32.totalorder %v1847, 0
      %vm2002 = vcmp.lt.s32.totalorder %v1854, 0
      %vm2003 = vcmp.lt.s32.totalorder %v1861, 0
      %vm2004 = vcmp.lt.s32.totalorder %v1868, 0
      %vm2005 = vcmp.lt.s32.totalorder %v1875, 0
      %vm2006 = vcmp.lt.s32.totalorder %v1882, 0
      %vm2007 = vcmp.lt.s32.totalorder %v1889, 0
      %vm2008 = vcmp.lt.s32.totalorder %v1896, 0
      %vm2009 = vcmp.lt.s32.totalorder %v1903, 0
      %vm2010 = vcmp.lt.s32.totalorder %v1910, 0
      %vm2011 = vcmp.lt.s32.totalorder %v1917, 0
      %vm2012 = vcmp.lt.s32.totalorder %v1924, 0
      %vm2013 = vcmp.lt.s32.totalorder %v1931, 0
      %vm2014 = vcmp.lt.s32.totalorder %v1938, 0
      %vm2015 = vcmp.lt.s32.totalorder %v1945, 0
      %vm2016 = vcmp.lt.s32.totalorder %v1952, 0
      %vm2017 = vmand %vm1985, %vm1953
      %vm2018 = vmand %vm1986, %vm1954
      %vm2019 = vmand %vm1987, %vm1955
      %vm2020 = vmand %vm1988, %vm1956
      %vm2021 = vmand %vm1989, %vm1957
      %vm2022 = vmand %vm1990, %vm1958
      %vm2023 = vmand %vm1991, %vm1959
      %vm2024 = vmand %vm1992, %vm1960
      %vm2025 = vmand %vm1993, %vm1961
      %vm2026 = vmand %vm1994, %vm1962
      %vm2027 = vmand %vm1995, %vm1963
      %vm2028 = vmand %vm1996, %vm1964
      %vm2029 = vmand %vm1997, %vm1965
      %vm2030 = vmand %vm1998, %vm1966
      %vm2031 = vmand %vm1999, %vm1967
      %vm2032 = vmand %vm2000, %vm1968
      %vm2033 = vmand %vm2001, %vm1969
      %vm2034 = vmand %vm2002, %vm1970
      %vm2035 = vmand %vm2003, %vm1971
      %vm2036 = vmand %vm2004, %vm1972
      %vm2037 = vmand %vm2005, %vm1973
      %vm2038 = vmand %vm2006, %vm1974
      %vm2039 = vmand %vm2007, %vm1975
      %vm2040 = vmand %vm2008, %vm1976
      %vm2041 = vmand %vm2009, %vm1977
      %vm2042 = vmand %vm2010, %vm1978
      %vm2043 = vmand %vm2011, %vm1979
      %vm2044 = vmand %vm2012, %vm1980
      %vm2045 = vmand %vm2013, %vm1981
      %vm2046 = vmand %vm2014, %vm1982
      %vm2047 = vmand %vm2015, %vm1983
      %vm2048 = vmand %vm2016, %vm1984
      %v2049 = vadd.s32 %v1735, 16
      %v2050 = vadd.s32 %v1742, 16
      %v2051 = vadd.s32 %v1749, 16
      %v2052 = vadd.s32 %v1756, 16
      %v2053 = vadd.s32 %v1763, 16
      %v2054 = vadd.s32 %v1770, 16
      %v2055 = vadd.s32 %v1777, 16
      %v2056 = vadd.s32 %v1784, 16
      %v2057 = vadd.s32 %v1791, 16
      %v2058 = vadd.s32 %v1798, 16
      %v2059 = vadd.s32 %v1805, 16
      %v2060 = vadd.s32 %v1812, 16
      %v2061 = vadd.s32 %v1819, 16
      %v2062 = vadd.s32 %v1826, 16
      %v2063 = vadd.s32 %v1833, 16
      %v2064 = vadd.s32 %v1840, 16
      %v2065 = vadd.s32 %v1847, 16
      %v2066 = vadd.s32 %v1854, 16
      %v2067 = vadd.s32 %v1861, 16
      %v2068 = vadd.s32 %v1868, 16
      %v2069 = vadd.s32 %v1875, 16
      %v2070 = vadd.s32 %v1882, 16
      %v2071 = vadd.s32 %v1889, 16
      %v2072 = vadd.s32 %v1896, 16
      %v2073 = vadd.s32 %v1903, 16
      %v2074 = vadd.s32 %v1910, 16
      %v2075 = vadd.s32 %v1917, 16
      %v2076 = vadd.s32 %v1924, 16
      %v2077 = vadd.s32 %v1931, 16
      %v2078 = vadd.s32 %v1938, 16
      %v2079 = vadd.s32 %v1945, 16
      %v2080 = vadd.s32 %v1952, 16
      %v2081 = vsel %vm2017, %v2049, %v1735
      %v2082 = vsel %vm2018, %v2050, %v1742
      %v2083 = vsel %vm2019, %v2051, %v1749
      %v2084 = vsel %vm2020, %v2052, %v1756
      %v2085 = vsel %vm2021, %v2053, %v1763
      %v2086 = vsel %vm2022, %v2054, %v1770
      %v2087 = vsel %vm2023, %v2055, %v1777
      %v2088 = vsel %vm2024, %v2056, %v1784
      %v2089 = vsel %vm2025, %v2057, %v1791
      %v2090 = vsel %vm2026, %v2058, %v1798
      %v2091 = vsel %vm2027, %v2059, %v1805
      %v2092 = vsel %vm2028, %v2060, %v1812
      %v2093 = vsel %vm2029, %v2061, %v1819
      %v2094 = vsel %vm2030, %v2062, %v1826
      %v2095 = vsel %vm2031, %v2063, %v1833
      %v2096 = vsel %vm2032, %v2064, %v1840
      %v2097 = vsel %vm2033, %v2065, %v1847
      %v2098 = vsel %vm2034, %v2066, %v1854
      %v2099 = vsel %vm2035, %v2067, %v1861
      %v2100 = vsel %vm2036, %v2068, %v1868
      %v2101 = vsel %vm2037, %v2069, %v1875
      %v2102 = vsel %vm2038, %v2070, %v1882
      %v2103 = vsel %vm2039, %v2071, %v1889
      %v2104 = vsel %vm2040, %v2072, %v1896
      %v2105 = vsel %vm2041, %v2073, %v1903
      %v2106 = vsel %vm2042, %v2074, %v1910
      %v2107 = vsel %vm2043, %v2075, %v1917
      %v2108 = vsel %vm2044, %v2076, %v1924
      %v2109 = vsel %vm2045, %v2077, %v1931
      %v2110 = vsel %vm2046, %v2078, %v1938
      %v2111 = vsel %vm2047, %v2079, %v1945
      %v2112 = vsel %vm2048, %v2080, %v1952
      %vm2113 = vcmp.ge.s32.totalorder %v2081, 1
      %vm2114 = vcmp.ge.s32.totalorder %v2082, 1
      %vm2115 = vcmp.ge.s32.totalorder %v2083, 1
      %vm2116 = vcmp.ge.s32.totalorder %v2084, 1
      %vm2117 = vcmp.ge.s32.totalorder %v2085, 1
      %vm2118 = vcmp.ge.s32.totalorder %v2086, 1
      %vm2119 = vcmp.ge.s32.totalorder %v2087, 1
      %vm2120 = vcmp.ge.s32.totalorder %v2088, 1
      %vm2121 = vcmp.ge.s32.totalorder %v2089, 1
      %vm2122 = vcmp.ge.s32.totalorder %v2090, 1
      %vm2123 = vcmp.ge.s32.totalorder %v2091, 1
      %vm2124 = vcmp.ge.s32.totalorder %v2092, 1
      %vm2125 = vcmp.ge.s32.totalorder %v2093, 1
      %vm2126 = vcmp.ge.s32.totalorder %v2094, 1
      %vm2127 = vcmp.ge.s32.totalorder %v2095, 1
      %vm2128 = vcmp.ge.s32.totalorder %v2096, 1
      %vm2129 = vcmp.ge.s32.totalorder %v2097, 1
      %vm2130 = vcmp.ge.s32.totalorder %v2098, 1
      %vm2131 = vcmp.ge.s32.totalorder %v2099, 1
      %vm2132 = vcmp.ge.s32.totalorder %v2100, 1
      %vm2133 = vcmp.ge.s32.totalorder %v2101, 1
      %vm2134 = vcmp.ge.s32.totalorder %v2102, 1
      %vm2135 = vcmp.ge.s32.totalorder %v2103, 1
      %vm2136 = vcmp.ge.s32.totalorder %v2104, 1
      %vm2137 = vcmp.ge.s32.totalorder %v2105, 1
      %vm2138 = vcmp.ge.s32.totalorder %v2106, 1
      %vm2139 = vcmp.ge.s32.totalorder %v2107, 1
      %vm2140 = vcmp.ge.s32.totalorder %v2108, 1
      %vm2141 = vcmp.ge.s32.totalorder %v2109, 1
      %vm2142 = vcmp.ge.s32.totalorder %v2110, 1
      %vm2143 = vcmp.ge.s32.totalorder %v2111, 1
      %vm2144 = vcmp.ge.s32.totalorder %v2112, 1
      %vm2145 = vcmp.lt.s32.totalorder %v2081, 15
      %vm2146 = vcmp.lt.s32.totalorder %v2082, 15
      %vm2147 = vcmp.lt.s32.totalorder %v2083, 15
      %vm2148 = vcmp.lt.s32.totalorder %v2084, 15
      %vm2149 = vcmp.lt.s32.totalorder %v2085, 15
      %vm2150 = vcmp.lt.s32.totalorder %v2086, 15
      %vm2151 = vcmp.lt.s32.totalorder %v2087, 15
      %vm2152 = vcmp.lt.s32.totalorder %v2088, 15
      %vm2153 = vcmp.lt.s32.totalorder %v2089, 15
      %vm2154 = vcmp.lt.s32.totalorder %v2090, 15
      %vm2155 = vcmp.lt.s32.totalorder %v2091, 15
      %vm2156 = vcmp.lt.s32.totalorder %v2092, 15
      %vm2157 = vcmp.lt.s32.totalorder %v2093, 15
      %vm2158 = vcmp.lt.s32.totalorder %v2094, 15
      %vm2159 = vcmp.lt.s32.totalorder %v2095, 15
      %vm2160 = vcmp.lt.s32.totalorder %v2096, 15
      %vm2161 = vcmp.lt.s32.totalorder %v2097, 15
      %vm2162 = vcmp.lt.s32.totalorder %v2098, 15
      %vm2163 = vcmp.lt.s32.totalorder %v2099, 15
      %vm2164 = vcmp.lt.s32.totalorder %v2100, 15
      %vm2165 = vcmp.lt.s32.totalorder %v2101, 15
      %vm2166 = vcmp.lt.s32.totalorder %v2102, 15
      %vm2167 = vcmp.lt.s32.totalorder %v2103, 15
      %vm2168 = vcmp.lt.s32.totalorder %v2104, 15
      %vm2169 = vcmp.lt.s32.totalorder %v2105, 15
      %vm2170 = vcmp.lt.s32.totalorder %v2106, 15
      %vm2171 = vcmp.lt.s32.totalorder %v2107, 15
      %vm2172 = vcmp.lt.s32.totalorder %v2108, 15
      %vm2173 = vcmp.lt.s32.totalorder %v2109, 15
      %vm2174 = vcmp.lt.s32.totalorder %v2110, 15
      %vm2175 = vcmp.lt.s32.totalorder %v2111, 15
      %vm2176 = vcmp.lt.s32.totalorder %v2112, 15
      %v2177 = vsel %vm2113, 1, 0
      %v2178 = vsel %vm2114, 1, 0
      %v2179 = vsel %vm2115, 1, 0
      %v2180 = vsel %vm2116, 1, 0
      %v2181 = vsel %vm2117, 1, 0
      %v2182 = vsel %vm2118, 1, 0
      %v2183 = vsel %vm2119, 1, 0
      %v2184 = vsel %vm2120, 1, 0
      %v2185 = vsel %vm2121, 1, 0
      %v2186 = vsel %vm2122, 1, 0
      %v2187 = vsel %vm2123, 1, 0
      %v2188 = vsel %vm2124, 1, 0
      %v2189 = vsel %vm2125, 1, 0
      %v2190 = vsel %vm2126, 1, 0
      %v2191 = vsel %vm2127, 1, 0
      %v2192 = vsel %vm2128, 1, 0
      %v2193 = vsel %vm2129, 1, 0
      %v2194 = vsel %vm2130, 1, 0
      %v2195 = vsel %vm2131, 1, 0
      %v2196 = vsel %vm2132, 1, 0
      %v2197 = vsel %vm2133, 1, 0
      %v2198 = vsel %vm2134, 1, 0
      %v2199 = vsel %vm2135, 1, 0
      %v2200 = vsel %vm2136, 1, 0
      %v2201 = vsel %vm2137, 1, 0
      %v2202 = vsel %vm2138, 1, 0
      %v2203 = vsel %vm2139, 1, 0
      %v2204 = vsel %vm2140, 1, 0
      %v2205 = vsel %vm2141, 1, 0
      %v2206 = vsel %vm2142, 1, 0
      %v2207 = vsel %vm2143, 1, 0
      %v2208 = vsel %vm2144, 1, 0
      %vm2209 = vcmp.eq.s32.totalorder %v2177, 1
      %vm2210 = vcmp.eq.s32.totalorder %v2178, 1
      %vm2211 = vcmp.eq.s32.totalorder %v2179, 1
      %vm2212 = vcmp.eq.s32.totalorder %v2180, 1
      %vm2213 = vcmp.eq.s32.totalorder %v2181, 1
      %vm2214 = vcmp.eq.s32.totalorder %v2182, 1
      %vm2215 = vcmp.eq.s32.totalorder %v2183, 1
      %vm2216 = vcmp.eq.s32.totalorder %v2184, 1
      %vm2217 = vcmp.eq.s32.totalorder %v2185, 1
      %vm2218 = vcmp.eq.s32.totalorder %v2186, 1
      %vm2219 = vcmp.eq.s32.totalorder %v2187, 1
      %vm2220 = vcmp.eq.s32.totalorder %v2188, 1
      %vm2221 = vcmp.eq.s32.totalorder %v2189, 1
      %vm2222 = vcmp.eq.s32.totalorder %v2190, 1
      %vm2223 = vcmp.eq.s32.totalorder %v2191, 1
      %vm2224 = vcmp.eq.s32.totalorder %v2192, 1
      %vm2225 = vcmp.eq.s32.totalorder %v2193, 1
      %vm2226 = vcmp.eq.s32.totalorder %v2194, 1
      %vm2227 = vcmp.eq.s32.totalorder %v2195, 1
      %vm2228 = vcmp.eq.s32.totalorder %v2196, 1
      %vm2229 = vcmp.eq.s32.totalorder %v2197, 1
      %vm2230 = vcmp.eq.s32.totalorder %v2198, 1
      %vm2231 = vcmp.eq.s32.totalorder %v2199, 1
      %vm2232 = vcmp.eq.s32.totalorder %v2200, 1
      %vm2233 = vcmp.eq.s32.totalorder %v2201, 1
      %vm2234 = vcmp.eq.s32.totalorder %v2202, 1
      %vm2235 = vcmp.eq.s32.totalorder %v2203, 1
      %vm2236 = vcmp.eq.s32.totalorder %v2204, 1
      %vm2237 = vcmp.eq.s32.totalorder %v2205, 1
      %vm2238 = vcmp.eq.s32.totalorder %v2206, 1
      %vm2239 = vcmp.eq.s32.totalorder %v2207, 1
      %vm2240 = vcmp.eq.s32.totalorder %v2208, 1
      %vm2274 = vcmask 1040384
      %v2275 = vrot.slane %v1658, 7
      %v2276 = vrot.slane %v1659, 7
      %v2277 = vsel %vm2274, %v2275, %v2276
      %v2278 = vrot.slane %v1660, 7
      %v2279 = vsel %vm2274, %v2276, %v2278
      %v2280 = vrot.slane %v1661, 7
      %v2281 = vsel %vm2274, %v2278, %v2280
      %v2282 = vrot.slane %v1662, 7
      %v2283 = vsel %vm2274, %v2280, %v2282
      %v2284 = vrot.slane %v1663, 7
      %v2285 = vsel %vm2274, %v2282, %v2284
      %v2286 = vrot.slane %v1664, 7
      %v2287 = vsel %vm2274, %v2284, %v2286
      %v2288 = vrot.slane %v1665, 7
      %v2289 = vsel %vm2274, %v2286, %v2288
      %v2290 = vrot.slane %v1666, 7
      %v2291 = vsel %vm2274, %v2288, %v2290
      %v2292 = vrot.slane %v1667, 7
      %v2293 = vsel %vm2274, %v2290, %v2292
      %v2294 = vrot.slane %v1668, 7
      %v2295 = vsel %vm2274, %v2292, %v2294
      %v2296 = vrot.slane %v1669, 7
      %v2297 = vsel %vm2274, %v2294, %v2296
      %v2298 = vrot.slane %v1670, 7
      %v2299 = vsel %vm2274, %v2296, %v2298
      %v2300 = vrot.slane %v1671, 7
      %v2301 = vsel %vm2274, %v2298, %v2300
      %v2302 = vrot.slane %v1672, 7
      %v2303 = vsel %vm2274, %v2300, %v2302
      %v2304 = vrot.slane %v1673, 7
      %v2305 = vsel %vm2274, %v2302, %v2304
      %v2306 = vrot.slane %v1674, 7
      %v2307 = vsel %vm2274, %v2304, %v2306
      %v2308 = vrot.slane %v1675, 7
      %v2309 = vsel %vm2274, %v2306, %v2308
      %v2310 = vrot.slane %v1676, 7
      %v2311 = vsel %vm2274, %v2308, %v2310
      %v2312 = vrot.slane %v1677, 7
      %v2313 = vsel %vm2274, %v2310, %v2312
      %v2314 = vrot.slane %v1678, 7
      %v2315 = vsel %vm2274, %v2312, %v2314
      %v2316 = vrot.slane %v1679, 7
      %v2317 = vsel %vm2274, %v2314, %v2316
      %v2318 = vrot.slane %v1680, 7
      %v2319 = vsel %vm2274, %v2316, %v2318
      %v2320 = vrot.slane %v1681, 7
      %v2321 = vsel %vm2274, %v2318, %v2320
      %v2322 = vrot.slane %v1682, 7
      %v2323 = vsel %vm2274, %v2320, %v2322
      %v2324 = vrot.slane %v1683, 7
      %v2325 = vsel %vm2274, %v2322, %v2324
      %v2326 = vrot.slane %v1684, 7
      %v2327 = vsel %vm2274, %v2324, %v2326
      %v2328 = vrot.slane %v1685, 7
      %v2329 = vsel %vm2274, %v2326, %v2328
      %v2330 = vrot.slane %v1686, 7
      %v2331 = vsel %vm2274, %v2328, %v2330
      %v2332 = vrot.slane %v1687, 7
      %v2333 = vsel %vm2274, %v2330, %v2332
      %v2334 = vrot.slane %v1688, 7
      %v2335 = vsel %vm2274, %v2332, %v2334
      %v2336 = vrot.slane %v1689, 7
      %v2337 = vsel %vm2274, %v2334, %v2336
      %v2338 = vrot.slane %v1690, 7
      %v2339 = vsel %vm2274, %v2336, %v2338
      %v2372 = vsel %vm2209, %v2277, 0.0
      %v2373 = vsel %vm2210, %v2279, 0.0
      %v2374 = vsel %vm2211, %v2281, 0.0
      %v2375 = vsel %vm2212, %v2283, 0.0
      %v2376 = vsel %vm2213, %v2285, 0.0
      %v2377 = vsel %vm2214, %v2287, 0.0
      %v2378 = vsel %vm2215, %v2289, 0.0
      %v2379 = vsel %vm2216, %v2291, 0.0
      %v2380 = vsel %vm2217, %v2293, 0.0
      %v2381 = vsel %vm2218, %v2295, 0.0
      %v2382 = vsel %vm2219, %v2297, 0.0
      %v2383 = vsel %vm2220, %v2299, 0.0
      %v2384 = vsel %vm2221, %v2301, 0.0
      %v2385 = vsel %vm2222, %v2303, 0.0
      %v2386 = vsel %vm2223, %v2305, 0.0
      %v2387 = vsel %vm2224, %v2307, 0.0
      %v2388 = vsel %vm2225, %v2309, 0.0
      %v2389 = vsel %vm2226, %v2311, 0.0
      %v2390 = vsel %vm2227, %v2313, 0.0
      %v2391 = vsel %vm2228, %v2315, 0.0
      %v2392 = vsel %vm2229, %v2317, 0.0
      %v2393 = vsel %vm2230, %v2319, 0.0
      %v2394 = vsel %vm2231, %v2321, 0.0
      %v2395 = vsel %vm2232, %v2323, 0.0
      %v2396 = vsel %vm2233, %v2325, 0.0
      %v2397 = vsel %vm2234, %v2327, 0.0
      %v2398 = vsel %vm2235, %v2329, 0.0
      %v2399 = vsel %vm2236, %v2331, 0.0
      %v2400 = vsel %vm2237, %v2333, 0.0
      %v2401 = vsel %vm2238, %v2335, 0.0
      %v2402 = vsel %vm2239, %v2337, 0.0
      %v2403 = vsel %vm2240, %v2339, 0.0
      %v2404 = vsel %vm2145, 1, 0
      %v2405 = vsel %vm2146, 1, 0
      %v2406 = vsel %vm2147, 1, 0
      %v2407 = vsel %vm2148, 1, 0
      %v2408 = vsel %vm2149, 1, 0
      %v2409 = vsel %vm2150, 1, 0
      %v2410 = vsel %vm2151, 1, 0
      %v2411 = vsel %vm2152, 1, 0
      %v2412 = vsel %vm2153, 1, 0
      %v2413 = vsel %vm2154, 1, 0
      %v2414 = vsel %vm2155, 1, 0
      %v2415 = vsel %vm2156, 1, 0
      %v2416 = vsel %vm2157, 1, 0
      %v2417 = vsel %vm2158, 1, 0
      %v2418 = vsel %vm2159, 1, 0
      %v2419 = vsel %vm2160, 1, 0
      %v2420 = vsel %vm2161, 1, 0
      %v2421 = vsel %vm2162, 1, 0
      %v2422 = vsel %vm2163, 1, 0
      %v2423 = vsel %vm2164, 1, 0
      %v2424 = vsel %vm2165, 1, 0
      %v2425 = vsel %vm2166, 1, 0
      %v2426 = vsel %vm2167, 1, 0
      %v2427 = vsel %vm2168, 1, 0
      %v2428 = vsel %vm2169, 1, 0
      %v2429 = vsel %vm2170, 1, 0
      %v2430 = vsel %vm2171, 1, 0
      %v2431 = vsel %vm2172, 1, 0
      %v2432 = vsel %vm2173, 1, 0
      %v2433 = vsel %vm2174, 1, 0
      %v2434 = vsel %vm2175, 1, 0
      %v2435 = vsel %vm2176, 1, 0
      %vm2436 = vcmp.eq.s32.totalorder %v2404, 1
      %vm2437 = vcmp.eq.s32.totalorder %v2405, 1
      %vm2438 = vcmp.eq.s32.totalorder %v2406, 1
      %vm2439 = vcmp.eq.s32.totalorder %v2407, 1
      %vm2440 = vcmp.eq.s32.totalorder %v2408, 1
      %vm2441 = vcmp.eq.s32.totalorder %v2409, 1
      %vm2442 = vcmp.eq.s32.totalorder %v2410, 1
      %vm2443 = vcmp.eq.s32.totalorder %v2411, 1
      %vm2444 = vcmp.eq.s32.totalorder %v2412, 1
      %vm2445 = vcmp.eq.s32.totalorder %v2413, 1
      %vm2446 = vcmp.eq.s32.totalorder %v2414, 1
      %vm2447 = vcmp.eq.s32.totalorder %v2415, 1
      %vm2448 = vcmp.eq.s32.totalorder %v2416, 1
      %vm2449 = vcmp.eq.s32.totalorder %v2417, 1
      %vm2450 = vcmp.eq.s32.totalorder %v2418, 1
      %vm2451 = vcmp.eq.s32.totalorder %v2419, 1
      %vm2452 = vcmp.eq.s32.totalorder %v2420, 1
      %vm2453 = vcmp.eq.s32.totalorder %v2421, 1
      %vm2454 = vcmp.eq.s32.totalorder %v2422, 1
      %vm2455 = vcmp.eq.s32.totalorder %v2423, 1
      %vm2456 = vcmp.eq.s32.totalorder %v2424, 1
      %vm2457 = vcmp.eq.s32.totalorder %v2425, 1
      %vm2458 = vcmp.eq.s32.totalorder %v2426, 1
      %vm2459 = vcmp.eq.s32.totalorder %v2427, 1
      %vm2460 = vcmp.eq.s32.totalorder %v2428, 1
      %vm2461 = vcmp.eq.s32.totalorder %v2429, 1
      %vm2462 = vcmp.eq.s32.totalorder %v2430, 1
      %vm2463 = vcmp.eq.s32.totalorder %v2431, 1
      %vm2464 = vcmp.eq.s32.totalorder %v2432, 1
      %vm2465 = vcmp.eq.s32.totalorder %v2433, 1
      %vm2466 = vcmp.eq.s32.totalorder %v2434, 1
      %vm2467 = vcmp.eq.s32.totalorder %v2435, 1
      %vm2469 = vcmask 1046528
      %v2470 = vrot.slane %v1659, 1
      %v2471 = vrot.slane %v1660, 1
      %v2472 = vsel %vm2469, %v2470, %v2471
      %v2473 = vrot.slane %v1661, 1
      %v2474 = vsel %vm2469, %v2471, %v2473
      %v2475 = vrot.slane %v1662, 1
      %v2476 = vsel %vm2469, %v2473, %v2475
      %v2477 = vrot.slane %v1663, 1
      %v2478 = vsel %vm2469, %v2475, %v2477
      %v2479 = vrot.slane %v1664, 1
      %v2480 = vsel %vm2469, %v2477, %v2479
      %v2481 = vrot.slane %v1665, 1
      %v2482 = vsel %vm2469, %v2479, %v2481
      %v2483 = vrot.slane %v1666, 1
      %v2484 = vsel %vm2469, %v2481, %v2483
      %v2485 = vrot.slane %v1667, 1
      %v2486 = vsel %vm2469, %v2483, %v2485
      %v2487 = vrot.slane %v1668, 1
      %v2488 = vsel %vm2469, %v2485, %v2487
      %v2489 = vrot.slane %v1669, 1
      %v2490 = vsel %vm2469, %v2487, %v2489
      %v2491 = vrot.slane %v1670, 1
      %v2492 = vsel %vm2469, %v2489, %v2491
      %v2493 = vrot.slane %v1671, 1
      %v2494 = vsel %vm2469, %v2491, %v2493
      %v2495 = vrot.slane %v1672, 1
      %v2496 = vsel %vm2469, %v2493, %v2495
      %v2497 = vrot.slane %v1673, 1
      %v2498 = vsel %vm2469, %v2495, %v2497
      %v2499 = vrot.slane %v1674, 1
      %v2500 = vsel %vm2469, %v2497, %v2499
      %v2501 = vrot.slane %v1675, 1
      %v2502 = vsel %vm2469, %v2499, %v2501
      %v2503 = vrot.slane %v1676, 1
      %v2504 = vsel %vm2469, %v2501, %v2503
      %v2505 = vrot.slane %v1677, 1
      %v2506 = vsel %vm2469, %v2503, %v2505
      %v2507 = vrot.slane %v1678, 1
      %v2508 = vsel %vm2469, %v2505, %v2507
      %v2509 = vrot.slane %v1679, 1
      %v2510 = vsel %vm2469, %v2507, %v2509
      %v2511 = vrot.slane %v1680, 1
      %v2512 = vsel %vm2469, %v2509, %v2511
      %v2513 = vrot.slane %v1681, 1
      %v2514 = vsel %vm2469, %v2511, %v2513
      %v2515 = vrot.slane %v1682, 1
      %v2516 = vsel %vm2469, %v2513, %v2515
      %v2517 = vrot.slane %v1683, 1
      %v2518 = vsel %vm2469, %v2515, %v2517
      %v2519 = vrot.slane %v1684, 1
      %v2520 = vsel %vm2469, %v2517, %v2519
      %v2521 = vrot.slane %v1685, 1
      %v2522 = vsel %vm2469, %v2519, %v2521
      %v2523 = vrot.slane %v1686, 1
      %v2524 = vsel %vm2469, %v2521, %v2523
      %v2525 = vrot.slane %v1687, 1
      %v2526 = vsel %vm2469, %v2523, %v2525
      %v2527 = vrot.slane %v1688, 1
      %v2528 = vsel %vm2469, %v2525, %v2527
      %v2529 = vrot.slane %v1689, 1
      %v2530 = vsel %vm2469, %v2527, %v2529
      %v2531 = vrot.slane %v1690, 1
      %v2532 = vsel %vm2469, %v2529, %v2531
      %v2533 = vrot.slane %v1691, 1
      %v2534 = vsel %vm2469, %v2531, %v2533
      %v2567 = vsel %vm2436, %v2472, 0.0
      %v2568 = vsel %vm2437, %v2474, 0.0
      %v2569 = vsel %vm2438, %v2476, 0.0
      %v2570 = vsel %vm2439, %v2478, 0.0
      %v2571 = vsel %vm2440, %v2480, 0.0
      %v2572 = vsel %vm2441, %v2482, 0.0
      %v2573 = vsel %vm2442, %v2484, 0.0
      %v2574 = vsel %vm2443, %v2486, 0.0
      %v2575 = vsel %vm2444, %v2488, 0.0
      %v2576 = vsel %vm2445, %v2490, 0.0
      %v2577 = vsel %vm2446, %v2492, 0.0
      %v2578 = vsel %vm2447, %v2494, 0.0
      %v2579 = vsel %vm2448, %v2496, 0.0
      %v2580 = vsel %vm2449, %v2498, 0.0
      %v2581 = vsel %vm2450, %v2500, 0.0
      %v2582 = vsel %vm2451, %v2502, 0.0
      %v2583 = vsel %vm2452, %v2504, 0.0
      %v2584 = vsel %vm2453, %v2506, 0.0
      %v2585 = vsel %vm2454, %v2508, 0.0
      %v2586 = vsel %vm2455, %v2510, 0.0
      %v2587 = vsel %vm2456, %v2512, 0.0
      %v2588 = vsel %vm2457, %v2514, 0.0
      %v2589 = vsel %vm2458, %v2516, 0.0
      %v2590 = vsel %vm2459, %v2518, 0.0
      %v2591 = vsel %vm2460, %v2520, 0.0
      %v2592 = vsel %vm2461, %v2522, 0.0
      %v2593 = vsel %vm2462, %v2524, 0.0
      %v2594 = vsel %vm2463, %v2526, 0.0
      %v2595 = vsel %vm2464, %v2528, 0.0
      %v2596 = vsel %vm2465, %v2530, 0.0
      %v2597 = vsel %vm2466, %v2532, 0.0
      %v2598 = vsel %vm2467, %v2534, 0.0
      %v2600 = vrot.slane %v1691, 7
      %v2601 = vsel %vm2274, %v2338, %v2600
      %v2602 = vrot.slane %v1692, 7
      %v2603 = vsel %vm2274, %v2600, %v2602
      %v2606 = vsel %vm2209, %v2281, 0.0
      %v2607 = vsel %vm2210, %v2283, 0.0
      %v2608 = vsel %vm2211, %v2285, 0.0
      %v2609 = vsel %vm2212, %v2287, 0.0
      %v2610 = vsel %vm2213, %v2289, 0.0
      %v2611 = vsel %vm2214, %v2291, 0.0
      %v2612 = vsel %vm2215, %v2293, 0.0
      %v2613 = vsel %vm2216, %v2295, 0.0
      %v2614 = vsel %vm2217, %v2297, 0.0
      %v2615 = vsel %vm2218, %v2299, 0.0
      %v2616 = vsel %vm2219, %v2301, 0.0
      %v2617 = vsel %vm2220, %v2303, 0.0
      %v2618 = vsel %vm2221, %v2305, 0.0
      %v2619 = vsel %vm2222, %v2307, 0.0
      %v2620 = vsel %vm2223, %v2309, 0.0
      %v2621 = vsel %vm2224, %v2311, 0.0
      %v2622 = vsel %vm2225, %v2313, 0.0
      %v2623 = vsel %vm2226, %v2315, 0.0
      %v2624 = vsel %vm2227, %v2317, 0.0
      %v2625 = vsel %vm2228, %v2319, 0.0
      %v2626 = vsel %vm2229, %v2321, 0.0
      %v2627 = vsel %vm2230, %v2323, 0.0
      %v2628 = vsel %vm2231, %v2325, 0.0
      %v2629 = vsel %vm2232, %v2327, 0.0
      %v2630 = vsel %vm2233, %v2329, 0.0
      %v2631 = vsel %vm2234, %v2331, 0.0
      %v2632 = vsel %vm2235, %v2333, 0.0
      %v2633 = vsel %vm2236, %v2335, 0.0
      %v2634 = vsel %vm2237, %v2337, 0.0
      %v2635 = vsel %vm2238, %v2339, 0.0
      %v2636 = vsel %vm2239, %v2601, 0.0
      %v2637 = vsel %vm2240, %v2603, 0.0
      %v2639 = vrot.slane %v1692, 1
      %v2640 = vsel %vm2469, %v2533, %v2639
      %v2641 = vrot.slane %v1693, 1
      %v2642 = vsel %vm2469, %v2639, %v2641
      %v2645 = vsel %vm2436, %v2476, 0.0
      %v2646 = vsel %vm2437, %v2478, 0.0
      %v2647 = vsel %vm2438, %v2480, 0.0
      %v2648 = vsel %vm2439, %v2482, 0.0
      %v2649 = vsel %vm2440, %v2484, 0.0
      %v2650 = vsel %vm2441, %v2486, 0.0
      %v2651 = vsel %vm2442, %v2488, 0.0
      %v2652 = vsel %vm2443, %v2490, 0.0
      %v2653 = vsel %vm2444, %v2492, 0.0
      %v2654 = vsel %vm2445, %v2494, 0.0
      %v2655 = vsel %vm2446, %v2496, 0.0
      %v2656 = vsel %vm2447, %v2498, 0.0
      %v2657 = vsel %vm2448, %v2500, 0.0
      %v2658 = vsel %vm2449, %v2502, 0.0
      %v2659 = vsel %vm2450, %v2504, 0.0
      %v2660 = vsel %vm2451, %v2506, 0.0
      %v2661 = vsel %vm2452, %v2508, 0.0
      %v2662 = vsel %vm2453, %v2510, 0.0
      %v2663 = vsel %vm2454, %v2512, 0.0
      %v2664 = vsel %vm2455, %v2514, 0.0
      %v2665 = vsel %vm2456, %v2516, 0.0
      %v2666 = vsel %vm2457, %v2518, 0.0
      %v2667 = vsel %vm2458, %v2520, 0.0
      %v2668 = vsel %vm2459, %v2522, 0.0
      %v2669 = vsel %vm2460, %v2524, 0.0
      %v2670 = vsel %vm2461, %v2526, 0.0
      %v2671 = vsel %vm2462, %v2528, 0.0
      %v2672 = vsel %vm2463, %v2530, 0.0
      %v2673 = vsel %vm2464, %v2532, 0.0
      %v2674 = vsel %vm2465, %v2534, 0.0
      %v2675 = vsel %vm2466, %v2640, 0.0
      %v2676 = vsel %vm2467, %v2642, 0.0
      %v2678 = vrot.slane %v1693, 7
      %v2679 = vsel %vm2274, %v2602, %v2678
      %v2680 = vrot.slane %v1694, 7
      %v2681 = vsel %vm2274, %v2678, %v2680
      %v2684 = vsel %vm2209, %v2285, 0.0
      %v2685 = vsel %vm2210, %v2287, 0.0
      %v2686 = vsel %vm2211, %v2289, 0.0
      %v2687 = vsel %vm2212, %v2291, 0.0
      %v2688 = vsel %vm2213, %v2293, 0.0
      %v2689 = vsel %vm2214, %v2295, 0.0
      %v2690 = vsel %vm2215, %v2297, 0.0
      %v2691 = vsel %vm2216, %v2299, 0.0
      %v2692 = vsel %vm2217, %v2301, 0.0
      %v2693 = vsel %vm2218, %v2303, 0.0
      %v2694 = vsel %vm2219, %v2305, 0.0
      %v2695 = vsel %vm2220, %v2307, 0.0
      %v2696 = vsel %vm2221, %v2309, 0.0
      %v2697 = vsel %vm2222, %v2311, 0.0
      %v2698 = vsel %vm2223, %v2313, 0.0
      %v2699 = vsel %vm2224, %v2315, 0.0
      %v2700 = vsel %vm2225, %v2317, 0.0
      %v2701 = vsel %vm2226, %v2319, 0.0
      %v2702 = vsel %vm2227, %v2321, 0.0
      %v2703 = vsel %vm2228, %v2323, 0.0
      %v2704 = vsel %vm2229, %v2325, 0.0
      %v2705 = vsel %vm2230, %v2327, 0.0
      %v2706 = vsel %vm2231, %v2329, 0.0
      %v2707 = vsel %vm2232, %v2331, 0.0
      %v2708 = vsel %vm2233, %v2333, 0.0
      %v2709 = vsel %vm2234, %v2335, 0.0
      %v2710 = vsel %vm2235, %v2337, 0.0
      %v2711 = vsel %vm2236, %v2339, 0.0
      %v2712 = vsel %vm2237, %v2601, 0.0
      %v2713 = vsel %vm2238, %v2603, 0.0
      %v2714 = vsel %vm2239, %v2679, 0.0
      %v2715 = vsel %vm2240, %v2681, 0.0
      %v2717 = vrot.slane %v1694, 1
      %v2718 = vsel %vm2469, %v2641, %v2717
      %v2719 = vrot.slane %v1695, 1
      %v2720 = vsel %vm2469, %v2717, %v2719
      %v2723 = vsel %vm2436, %v2480, 0.0
      %v2724 = vsel %vm2437, %v2482, 0.0
      %v2725 = vsel %vm2438, %v2484, 0.0
      %v2726 = vsel %vm2439, %v2486, 0.0
      %v2727 = vsel %vm2440, %v2488, 0.0
      %v2728 = vsel %vm2441, %v2490, 0.0
      %v2729 = vsel %vm2442, %v2492, 0.0
      %v2730 = vsel %vm2443, %v2494, 0.0
      %v2731 = vsel %vm2444, %v2496, 0.0
      %v2732 = vsel %vm2445, %v2498, 0.0
      %v2733 = vsel %vm2446, %v2500, 0.0
      %v2734 = vsel %vm2447, %v2502, 0.0
      %v2735 = vsel %vm2448, %v2504, 0.0
      %v2736 = vsel %vm2449, %v2506, 0.0
      %v2737 = vsel %vm2450, %v2508, 0.0
      %v2738 = vsel %vm2451, %v2510, 0.0
      %v2739 = vsel %vm2452, %v2512, 0.0
      %v2740 = vsel %vm2453, %v2514, 0.0
      %v2741 = vsel %vm2454, %v2516, 0.0
      %v2742 = vsel %vm2455, %v2518, 0.0
      %v2743 = vsel %vm2456, %v2520, 0.0
      %v2744 = vsel %vm2457, %v2522, 0.0
      %v2745 = vsel %vm2458, %v2524, 0.0
      %v2746 = vsel %vm2459, %v2526, 0.0
      %v2747 = vsel %vm2460, %v2528, 0.0
      %v2748 = vsel %vm2461, %v2530, 0.0
      %v2749 = vsel %vm2462, %v2532, 0.0
      %v2750 = vsel %vm2463, %v2534, 0.0
      %v2751 = vsel %vm2464, %v2640, 0.0
      %v2752 = vsel %vm2465, %v2642, 0.0
      %v2753 = vsel %vm2466, %v2718, 0.0
      %v2754 = vsel %vm2467, %v2720, 0.0
      %2755 = vrot.lane.b32.xlu0 %v1659, 16
      %v2756 = vpop.permute.xlu0 %2755
      %2757 = vrot.lane.b32.xlu0 %v1660, 16
      %v2758 = vpop.permute.xlu0 %2757
      %2759 = vrot.lane.b32.xlu0 %v1661, 16
      %v2760 = vpop.permute.xlu0 %2759
      %2761 = vrot.lane.b32.xlu0 %v1662, 16
      %v2762 = vpop.permute.xlu0 %2761
      %2763 = vrot.lane.b32.xlu0 %v1663, 16
      %v2764 = vpop.permute.xlu0 %2763
      %2765 = vrot.lane.b32.xlu0 %v1664, 16
      %v2766 = vpop.permute.xlu0 %2765
      %2767 = vrot.lane.b32.xlu0 %v1665, 16
      %v2768 = vpop.permute.xlu0 %2767
      %2769 = vrot.lane.b32.xlu0 %v1666, 16
      %v2770 = vpop.permute.xlu0 %2769
      %2771 = vrot.lane.b32.xlu0 %v1667, 16
      %v2772 = vpop.permute.xlu0 %2771
      %2773 = vrot.lane.b32.xlu0 %v1668, 16
      %v2774 = vpop.permute.xlu0 %2773
      %2775 = vrot.lane.b32.xlu0 %v1669, 16
      %v2776 = vpop.permute.xlu0 %2775
      %2777 = vrot.lane.b32.xlu0 %v1670, 16
      %v2778 = vpop.permute.xlu0 %2777
      %2779 = vrot.lane.b32.xlu0 %v1671, 16
      %v2780 = vpop.permute.xlu0 %2779
      %2781 = vrot.lane.b32.xlu0 %v1672, 16
      %v2782 = vpop.permute.xlu0 %2781
      %2783 = vrot.lane.b32.xlu0 %v1673, 16
      %v2784 = vpop.permute.xlu0 %2783
      %2785 = vrot.lane.b32.xlu0 %v1674, 16
      %v2786 = vpop.permute.xlu0 %2785
      %2787 = vrot.lane.b32.xlu0 %v1675, 16
      %v2788 = vpop.permute.xlu0 %2787
      %2789 = vrot.lane.b32.xlu0 %v1676, 16
      %v2790 = vpop.permute.xlu0 %2789
      %2791 = vrot.lane.b32.xlu0 %v1677, 16
      %v2792 = vpop.permute.xlu0 %2791
      %2793 = vrot.lane.b32.xlu0 %v1678, 16
      %v2794 = vpop.permute.xlu0 %2793
      %2795 = vrot.lane.b32.xlu0 %v1679, 16
      %v2796 = vpop.permute.xlu0 %2795
      %2797 = vrot.lane.b32.xlu0 %v1680, 16
      %v2798 = vpop.permute.xlu0 %2797
      %2799 = vrot.lane.b32.xlu0 %v1681, 16
      %v2800 = vpop.permute.xlu0 %2799
      %2801 = vrot.lane.b32.xlu0 %v1682, 16
      %v2802 = vpop.permute.xlu0 %2801
      %2803 = vrot.lane.b32.xlu0 %v1683, 16
      %v2804 = vpop.permute.xlu0 %2803
      %2805 = vrot.lane.b32.xlu0 %v1684, 16
      %v2806 = vpop.permute.xlu0 %2805
      %2807 = vrot.lane.b32.xlu0 %v1685, 16
      %v2808 = vpop.permute.xlu0 %2807
      %2809 = vrot.lane.b32.xlu0 %v1686, 16
      %v2810 = vpop.permute.xlu0 %2809
      %2811 = vrot.lane.b32.xlu0 %v1687, 16
      %v2812 = vpop.permute.xlu0 %2811
      %2813 = vrot.lane.b32.xlu0 %v1688, 16
      %v2814 = vpop.permute.xlu0 %2813
      %2815 = vrot.lane.b32.xlu0 %v1689, 16
      %v2816 = vpop.permute.xlu0 %2815
      %2817 = vrot.lane.b32.xlu0 %v1690, 16
      %v2818 = vpop.permute.xlu0 %2817
      %2883 = vrot.lane.b32.xlu0 %v2567, 32
      %v2884 = vpop.permute.xlu0 %2883
      %2885 = vrot.lane.b32.xlu0 %v2568, 32
      %v2886 = vpop.permute.xlu0 %2885
      %2887 = vrot.lane.b32.xlu0 %v2569, 32
      %v2888 = vpop.permute.xlu0 %2887
      %2889 = vrot.lane.b32.xlu0 %v2570, 32
      %v2890 = vpop.permute.xlu0 %2889
      %2891 = vrot.lane.b32.xlu0 %v2571, 32
      %v2892 = vpop.permute.xlu0 %2891
      %2893 = vrot.lane.b32.xlu0 %v2572, 32
      %v2894 = vpop.permute.xlu0 %2893
      %2895 = vrot.lane.b32.xlu0 %v2573, 32
      %v2896 = vpop.permute.xlu0 %2895
      %2897 = vrot.lane.b32.xlu0 %v2574, 32
      %v2898 = vpop.permute.xlu0 %2897
      %2899 = vrot.lane.b32.xlu0 %v2575, 32
      %v2900 = vpop.permute.xlu0 %2899
      %2901 = vrot.lane.b32.xlu0 %v2576, 32
      %v2902 = vpop.permute.xlu0 %2901
      %2903 = vrot.lane.b32.xlu0 %v2577, 32
      %v2904 = vpop.permute.xlu0 %2903
      %2905 = vrot.lane.b32.xlu0 %v2578, 32
      %v2906 = vpop.permute.xlu0 %2905
      %2907 = vrot.lane.b32.xlu0 %v2579, 32
      %v2908 = vpop.permute.xlu0 %2907
      %2909 = vrot.lane.b32.xlu0 %v2580, 32
      %v2910 = vpop.permute.xlu0 %2909
      %2911 = vrot.lane.b32.xlu0 %v2581, 32
      %v2912 = vpop.permute.xlu0 %2911
      %2913 = vrot.lane.b32.xlu0 %v2582, 32
      %v2914 = vpop.permute.xlu0 %2913
      %2915 = vrot.lane.b32.xlu0 %v2583, 32
      %v2916 = vpop.permute.xlu0 %2915
      %2917 = vrot.lane.b32.xlu0 %v2584, 32
      %v2918 = vpop.permute.xlu0 %2917
      %2919 = vrot.lane.b32.xlu0 %v2585, 32
      %v2920 = vpop.permute.xlu0 %2919
      %2921 = vrot.lane.b32.xlu0 %v2586, 32
      %v2922 = vpop.permute.xlu0 %2921
      %2923 = vrot.lane.b32.xlu0 %v2587, 32
      %v2924 = vpop.permute.xlu0 %2923
      %2925 = vrot.lane.b32.xlu0 %v2588, 32
      %v2926 = vpop.permute.xlu0 %2925
      %2927 = vrot.lane.b32.xlu0 %v2589, 32
      %v2928 = vpop.permute.xlu0 %2927
      %2929 = vrot.lane.b32.xlu0 %v2590, 32
      %v2930 = vpop.permute.xlu0 %2929
      %2931 = vrot.lane.b32.xlu0 %v2591, 32
      %v2932 = vpop.permute.xlu0 %2931
      %2933 = vrot.lane.b32.xlu0 %v2592, 32
      %v2934 = vpop.permute.xlu0 %2933
      %2935 = vrot.lane.b32.xlu0 %v2593, 32
      %v2936 = vpop.permute.xlu0 %2935
      %2937 = vrot.lane.b32.xlu0 %v2594, 32
      %v2938 = vpop.permute.xlu0 %2937
      %2939 = vrot.lane.b32.xlu0 %v2595, 32
      %v2940 = vpop.permute.xlu0 %2939
      %2941 = vrot.lane.b32.xlu0 %v2596, 32
      %v2942 = vpop.permute.xlu0 %2941
      %2943 = vrot.lane.b32.xlu0 %v2597, 32
      %v2944 = vpop.permute.xlu0 %2943
      %2945 = vrot.lane.b32.xlu0 %v2598, 32
      %v2946 = vpop.permute.xlu0 %2945
      %3011 = vrot.lane.b32.xlu0 %v2606, 48
      %v3012 = vpop.permute.xlu0 %3011
      %3013 = vrot.lane.b32.xlu0 %v2607, 48
      %v3014 = vpop.permute.xlu0 %3013
      %3015 = vrot.lane.b32.xlu0 %v2608, 48
      %v3016 = vpop.permute.xlu0 %3015
      %3017 = vrot.lane.b32.xlu0 %v2609, 48
      %v3018 = vpop.permute.xlu0 %3017
      %3019 = vrot.lane.b32.xlu0 %v2610, 48
      %v3020 = vpop.permute.xlu0 %3019
      %3021 = vrot.lane.b32.xlu0 %v2611, 48
      %v3022 = vpop.permute.xlu0 %3021
      %3023 = vrot.lane.b32.xlu0 %v2612, 48
      %v3024 = vpop.permute.xlu0 %3023
      %3025 = vrot.lane.b32.xlu0 %v2613, 48
      %v3026 = vpop.permute.xlu0 %3025
      %3027 = vrot.lane.b32.xlu0 %v2614, 48
      %v3028 = vpop.permute.xlu0 %3027
      %3029 = vrot.lane.b32.xlu0 %v2615, 48
      %v3030 = vpop.permute.xlu0 %3029
      %3031 = vrot.lane.b32.xlu0 %v2616, 48
      %v3032 = vpop.permute.xlu0 %3031
      %3033 = vrot.lane.b32.xlu0 %v2617, 48
      %v3034 = vpop.permute.xlu0 %3033
      %3035 = vrot.lane.b32.xlu0 %v2618, 48
      %v3036 = vpop.permute.xlu0 %3035
      %3037 = vrot.lane.b32.xlu0 %v2619, 48
      %v3038 = vpop.permute.xlu0 %3037
      %3039 = vrot.lane.b32.xlu0 %v2620, 48
      %v3040 = vpop.permute.xlu0 %3039
      %3041 = vrot.lane.b32.xlu0 %v2621, 48
      %v3042 = vpop.permute.xlu0 %3041
      %3043 = vrot.lane.b32.xlu0 %v2622, 48
      %v3044 = vpop.permute.xlu0 %3043
      %3045 = vrot.lane.b32.xlu0 %v2623, 48
      %v3046 = vpop.permute.xlu0 %3045
      %3047 = vrot.lane.b32.xlu0 %v2624, 48
      %v3048 = vpop.permute.xlu0 %3047
      %3049 = vrot.lane.b32.xlu0 %v2625, 48
      %v3050 = vpop.permute.xlu0 %3049
      %3051 = vrot.lane.b32.xlu0 %v2626, 48
      %v3052 = vpop.permute.xlu0 %3051
      %3053 = vrot.lane.b32.xlu0 %v2627, 48
      %v3054 = vpop.permute.xlu0 %3053
      %3055 = vrot.lane.b32.xlu0 %v2628, 48
      %v3056 = vpop.permute.xlu0 %3055
      %3057 = vrot.lane.b32.xlu0 %v2629, 48
      %v3058 = vpop.permute.xlu0 %3057
      %3059 = vrot.lane.b32.xlu0 %v2630, 48
      %v3060 = vpop.permute.xlu0 %3059
      %3061 = vrot.lane.b32.xlu0 %v2631, 48
      %v3062 = vpop.permute.xlu0 %3061
      %3063 = vrot.lane.b32.xlu0 %v2632, 48
      %v3064 = vpop.permute.xlu0 %3063
      %3065 = vrot.lane.b32.xlu0 %v2633, 48
      %v3066 = vpop.permute.xlu0 %3065
      %3067 = vrot.lane.b32.xlu0 %v2634, 48
      %v3068 = vpop.permute.xlu0 %3067
      %3069 = vrot.lane.b32.xlu0 %v2635, 48
      %v3070 = vpop.permute.xlu0 %3069
      %3071 = vrot.lane.b32.xlu0 %v2636, 48
      %v3072 = vpop.permute.xlu0 %3071
      %3073 = vrot.lane.b32.xlu0 %v2637, 48
      %v3074 = vpop.permute.xlu0 %3073
      %3107 = vrot.lane.b32.xlu0 %v1661, 64
      %v3108 = vpop.permute.xlu0 %3107
      %3109 = vrot.lane.b32.xlu0 %v1662, 64
      %v3110 = vpop.permute.xlu0 %3109
      %3111 = vrot.lane.b32.xlu0 %v1663, 64
      %v3112 = vpop.permute.xlu0 %3111
      %3113 = vrot.lane.b32.xlu0 %v1664, 64
      %v3114 = vpop.permute.xlu0 %3113
      %3115 = vrot.lane.b32.xlu0 %v1665, 64
      %v3116 = vpop.permute.xlu0 %3115
      %3117 = vrot.lane.b32.xlu0 %v1666, 64
      %v3118 = vpop.permute.xlu0 %3117
      %3119 = vrot.lane.b32.xlu0 %v1667, 64
      %v3120 = vpop.permute.xlu0 %3119
      %3121 = vrot.lane.b32.xlu0 %v1668, 64
      %v3122 = vpop.permute.xlu0 %3121
      %3123 = vrot.lane.b32.xlu0 %v1669, 64
      %v3124 = vpop.permute.xlu0 %3123
      %3125 = vrot.lane.b32.xlu0 %v1670, 64
      %v3126 = vpop.permute.xlu0 %3125
      %3127 = vrot.lane.b32.xlu0 %v1671, 64
      %v3128 = vpop.permute.xlu0 %3127
      %3129 = vrot.lane.b32.xlu0 %v1672, 64
      %v3130 = vpop.permute.xlu0 %3129
      %3131 = vrot.lane.b32.xlu0 %v1673, 64
      %v3132 = vpop.permute.xlu0 %3131
      %3133 = vrot.lane.b32.xlu0 %v1674, 64
      %v3134 = vpop.permute.xlu0 %3133
      %3135 = vrot.lane.b32.xlu0 %v1675, 64
      %v3136 = vpop.permute.xlu0 %3135
      %3137 = vrot.lane.b32.xlu0 %v1676, 64
      %v3138 = vpop.permute.xlu0 %3137
      %3139 = vrot.lane.b32.xlu0 %v1677, 64
      %v3140 = vpop.permute.xlu0 %3139
      %3141 = vrot.lane.b32.xlu0 %v1678, 64
      %v3142 = vpop.permute.xlu0 %3141
      %3143 = vrot.lane.b32.xlu0 %v1679, 64
      %v3144 = vpop.permute.xlu0 %3143
      %3145 = vrot.lane.b32.xlu0 %v1680, 64
      %v3146 = vpop.permute.xlu0 %3145
      %3147 = vrot.lane.b32.xlu0 %v1681, 64
      %v3148 = vpop.permute.xlu0 %3147
      %3149 = vrot.lane.b32.xlu0 %v1682, 64
      %v3150 = vpop.permute.xlu0 %3149
      %3151 = vrot.lane.b32.xlu0 %v1683, 64
      %v3152 = vpop.permute.xlu0 %3151
      %3153 = vrot.lane.b32.xlu0 %v1684, 64
      %v3154 = vpop.permute.xlu0 %3153
      %3155 = vrot.lane.b32.xlu0 %v1685, 64
      %v3156 = vpop.permute.xlu0 %3155
      %3157 = vrot.lane.b32.xlu0 %v1686, 64
      %v3158 = vpop.permute.xlu0 %3157
      %3159 = vrot.lane.b32.xlu0 %v1687, 64
      %v3160 = vpop.permute.xlu0 %3159
      %3161 = vrot.lane.b32.xlu0 %v1688, 64
      %v3162 = vpop.permute.xlu0 %3161
      %3163 = vrot.lane.b32.xlu0 %v1689, 64
      %v3164 = vpop.permute.xlu0 %3163
      %3165 = vrot.lane.b32.xlu0 %v1690, 64
      %v3166 = vpop.permute.xlu0 %3165
      %3167 = vrot.lane.b32.xlu0 %v1691, 64
      %v3168 = vpop.permute.xlu0 %3167
      %3169 = vrot.lane.b32.xlu0 %v1692, 64
      %v3170 = vpop.permute.xlu0 %3169
      %3235 = vrot.lane.b32.xlu0 %v2645, 80
      %v3236 = vpop.permute.xlu0 %3235
      %3237 = vrot.lane.b32.xlu0 %v2646, 80
      %v3238 = vpop.permute.xlu0 %3237
      %3239 = vrot.lane.b32.xlu0 %v2647, 80
      %v3240 = vpop.permute.xlu0 %3239
      %3241 = vrot.lane.b32.xlu0 %v2648, 80
      %v3242 = vpop.permute.xlu0 %3241
      %3243 = vrot.lane.b32.xlu0 %v2649, 80
      %v3244 = vpop.permute.xlu0 %3243
      %3245 = vrot.lane.b32.xlu0 %v2650, 80
      %v3246 = vpop.permute.xlu0 %3245
      %3247 = vrot.lane.b32.xlu0 %v2651, 80
      %v3248 = vpop.permute.xlu0 %3247
      %3249 = vrot.lane.b32.xlu0 %v2652, 80
      %v3250 = vpop.permute.xlu0 %3249
      %3251 = vrot.lane.b32.xlu0 %v2653, 80
      %v3252 = vpop.permute.xlu0 %3251
      %3253 = vrot.lane.b32.xlu0 %v2654, 80
      %v3254 = vpop.permute.xlu0 %3253
      %3255 = vrot.lane.b32.xlu0 %v2655, 80
      %v3256 = vpop.permute.xlu0 %3255
      %3257 = vrot.lane.b32.xlu0 %v2656, 80
      %v3258 = vpop.permute.xlu0 %3257
      %3259 = vrot.lane.b32.xlu0 %v2657, 80
      %v3260 = vpop.permute.xlu0 %3259
      %3261 = vrot.lane.b32.xlu0 %v2658, 80
      %v3262 = vpop.permute.xlu0 %3261
      %3263 = vrot.lane.b32.xlu0 %v2659, 80
      %v3264 = vpop.permute.xlu0 %3263
      %3265 = vrot.lane.b32.xlu0 %v2660, 80
      %v3266 = vpop.permute.xlu0 %3265
      %3267 = vrot.lane.b32.xlu0 %v2661, 80
      %v3268 = vpop.permute.xlu0 %3267
      %3269 = vrot.lane.b32.xlu0 %v2662, 80
      %v3270 = vpop.permute.xlu0 %3269
      %3271 = vrot.lane.b32.xlu0 %v2663, 80
      %v3272 = vpop.permute.xlu0 %3271
      %3273 = vrot.lane.b32.xlu0 %v2664, 80
      %v3274 = vpop.permute.xlu0 %3273
      %3275 = vrot.lane.b32.xlu0 %v2665, 80
      %v3276 = vpop.permute.xlu0 %3275
      %3277 = vrot.lane.b32.xlu0 %v2666, 80
      %v3278 = vpop.permute.xlu0 %3277
      %3279 = vrot.lane.b32.xlu0 %v2667, 80
      %v3280 = vpop.permute.xlu0 %3279
      %3281 = vrot.lane.b32.xlu0 %v2668, 80
      %v3282 = vpop.permute.xlu0 %3281
      %3283 = vrot.lane.b32.xlu0 %v2669, 80
      %v3284 = vpop.permute.xlu0 %3283
      %3285 = vrot.lane.b32.xlu0 %v2670, 80
      %v3286 = vpop.permute.xlu0 %3285
      %3287 = vrot.lane.b32.xlu0 %v2671, 80
      %v3288 = vpop.permute.xlu0 %3287
      %3289 = vrot.lane.b32.xlu0 %v2672, 80
      %v3290 = vpop.permute.xlu0 %3289
      %3291 = vrot.lane.b32.xlu0 %v2673, 80
      %v3292 = vpop.permute.xlu0 %3291
      %3293 = vrot.lane.b32.xlu0 %v2674, 80
      %v3294 = vpop.permute.xlu0 %3293
      %3295 = vrot.lane.b32.xlu0 %v2675, 80
      %v3296 = vpop.permute.xlu0 %3295
      %3297 = vrot.lane.b32.xlu0 %v2676, 80
      %v3298 = vpop.permute.xlu0 %3297
      %3363 = vrot.lane.b32.xlu0 %v2684, 96
      %v3364 = vpop.permute.xlu0 %3363
      %3365 = vrot.lane.b32.xlu0 %v2685, 96
      %v3366 = vpop.permute.xlu0 %3365
      %3367 = vrot.lane.b32.xlu0 %v2686, 96
      %v3368 = vpop.permute.xlu0 %3367
      %3369 = vrot.lane.b32.xlu0 %v2687, 96
      %v3370 = vpop.permute.xlu0 %3369
      %3371 = vrot.lane.b32.xlu0 %v2688, 96
      %v3372 = vpop.permute.xlu0 %3371
      %3373 = vrot.lane.b32.xlu0 %v2689, 96
      %v3374 = vpop.permute.xlu0 %3373
      %3375 = vrot.lane.b32.xlu0 %v2690, 96
      %v3376 = vpop.permute.xlu0 %3375
      %3377 = vrot.lane.b32.xlu0 %v2691, 96
      %v3378 = vpop.permute.xlu0 %3377
      %3379 = vrot.lane.b32.xlu0 %v2692, 96
      %v3380 = vpop.permute.xlu0 %3379
      %3381 = vrot.lane.b32.xlu0 %v2693, 96
      %v3382 = vpop.permute.xlu0 %3381
      %3383 = vrot.lane.b32.xlu0 %v2694, 96
      %v3384 = vpop.permute.xlu0 %3383
      %3385 = vrot.lane.b32.xlu0 %v2695, 96
      %v3386 = vpop.permute.xlu0 %3385
      %3387 = vrot.lane.b32.xlu0 %v2696, 96
      %v3388 = vpop.permute.xlu0 %3387
      %3389 = vrot.lane.b32.xlu0 %v2697, 96
      %v3390 = vpop.permute.xlu0 %3389
      %3391 = vrot.lane.b32.xlu0 %v2698, 96
      %v3392 = vpop.permute.xlu0 %3391
      %3393 = vrot.lane.b32.xlu0 %v2699, 96
      %v3394 = vpop.permute.xlu0 %3393
      %3395 = vrot.lane.b32.xlu0 %v2700, 96
      %v3396 = vpop.permute.xlu0 %3395
      %3397 = vrot.lane.b32.xlu0 %v2701, 96
      %v3398 = vpop.permute.xlu0 %3397
      %3399 = vrot.lane.b32.xlu0 %v2702, 96
      %v3400 = vpop.permute.xlu0 %3399
      %3401 = vrot.lane.b32.xlu0 %v2703, 96
      %v3402 = vpop.permute.xlu0 %3401
      %3403 = vrot.lane.b32.xlu0 %v2704, 96
      %v3404 = vpop.permute.xlu0 %3403
      %3405 = vrot.lane.b32.xlu0 %v2705, 96
      %v3406 = vpop.permute.xlu0 %3405
      %3407 = vrot.lane.b32.xlu0 %v2706, 96
      %v3408 = vpop.permute.xlu0 %3407
      %3409 = vrot.lane.b32.xlu0 %v2707, 96
      %v3410 = vpop.permute.xlu0 %3409
      %3411 = vrot.lane.b32.xlu0 %v2708, 96
      %v3412 = vpop.permute.xlu0 %3411
      %3413 = vrot.lane.b32.xlu0 %v2709, 96
      %v3414 = vpop.permute.xlu0 %3413
      %3415 = vrot.lane.b32.xlu0 %v2710, 96
      %v3416 = vpop.permute.xlu0 %3415
      %3417 = vrot.lane.b32.xlu0 %v2711, 96
      %v3418 = vpop.permute.xlu0 %3417
      %3419 = vrot.lane.b32.xlu0 %v2712, 96
      %v3420 = vpop.permute.xlu0 %3419
      %3421 = vrot.lane.b32.xlu0 %v2713, 96
      %v3422 = vpop.permute.xlu0 %3421
      %3423 = vrot.lane.b32.xlu0 %v2714, 96
      %v3424 = vpop.permute.xlu0 %3423
      %3425 = vrot.lane.b32.xlu0 %v2715, 96
      %v3426 = vpop.permute.xlu0 %3425
      %3459 = vrot.lane.b32.xlu0 %v1663, 112
      %v3460 = vpop.permute.xlu0 %3459
      %3461 = vrot.lane.b32.xlu0 %v1664, 112
      %v3462 = vpop.permute.xlu0 %3461
      %3463 = vrot.lane.b32.xlu0 %v1665, 112
      %v3464 = vpop.permute.xlu0 %3463
      %3465 = vrot.lane.b32.xlu0 %v1666, 112
      %v3466 = vpop.permute.xlu0 %3465
      %3467 = vrot.lane.b32.xlu0 %v1667, 112
      %v3468 = vpop.permute.xlu0 %3467
      %3469 = vrot.lane.b32.xlu0 %v1668, 112
      %v3470 = vpop.permute.xlu0 %3469
      %3471 = vrot.lane.b32.xlu0 %v1669, 112
      %v3472 = vpop.permute.xlu0 %3471
      %3473 = vrot.lane.b32.xlu0 %v1670, 112
      %v3474 = vpop.permute.xlu0 %3473
      %3475 = vrot.lane.b32.xlu0 %v1671, 112
      %v3476 = vpop.permute.xlu0 %3475
      %3477 = vrot.lane.b32.xlu0 %v1672, 112
      %v3478 = vpop.permute.xlu0 %3477
      %3479 = vrot.lane.b32.xlu0 %v1673, 112
      %v3480 = vpop.permute.xlu0 %3479
      %3481 = vrot.lane.b32.xlu0 %v1674, 112
      %v3482 = vpop.permute.xlu0 %3481
      %3483 = vrot.lane.b32.xlu0 %v1675, 112
      %v3484 = vpop.permute.xlu0 %3483
      %3485 = vrot.lane.b32.xlu0 %v1676, 112
      %v3486 = vpop.permute.xlu0 %3485
      %3487 = vrot.lane.b32.xlu0 %v1677, 112
      %v3488 = vpop.permute.xlu0 %3487
      %3489 = vrot.lane.b32.xlu0 %v1678, 112
      %v3490 = vpop.permute.xlu0 %3489
      %3491 = vrot.lane.b32.xlu0 %v1679, 112
      %v3492 = vpop.permute.xlu0 %3491
      %3493 = vrot.lane.b32.xlu0 %v1680, 112
      %v3494 = vpop.permute.xlu0 %3493
      %3495 = vrot.lane.b32.xlu0 %v1681, 112
      %v3496 = vpop.permute.xlu0 %3495
      %3497 = vrot.lane.b32.xlu0 %v1682, 112
      %v3498 = vpop.permute.xlu0 %3497
      %3499 = vrot.lane.b32.xlu0 %v1683, 112
      %v3500 = vpop.permute.xlu0 %3499
      %3501 = vrot.lane.b32.xlu0 %v1684, 112
      %v3502 = vpop.permute.xlu0 %3501
      %3503 = vrot.lane.b32.xlu0 %v1685, 112
      %v3504 = vpop.permute.xlu0 %3503
      %3505 = vrot.lane.b32.xlu0 %v1686, 112
      %v3506 = vpop.permute.xlu0 %3505
      %3507 = vrot.lane.b32.xlu0 %v1687, 112
      %v3508 = vpop.permute.xlu0 %3507
      %3509 = vrot.lane.b32.xlu0 %v1688, 112
      %v3510 = vpop.permute.xlu0 %3509
      %3511 = vrot.lane.b32.xlu0 %v1689, 112
      %v3512 = vpop.permute.xlu0 %3511
      %3513 = vrot.lane.b32.xlu0 %v1690, 112
      %v3514 = vpop.permute.xlu0 %3513
      %3515 = vrot.lane.b32.xlu0 %v1691, 112
      %v3516 = vpop.permute.xlu0 %3515
      %3517 = vrot.lane.b32.xlu0 %v1692, 112
      %v3518 = vpop.permute.xlu0 %3517
      %3519 = vrot.lane.b32.xlu0 %v1693, 112
      %v3520 = vpop.permute.xlu0 %3519
      %3521 = vrot.lane.b32.xlu0 %v1694, 112
      %v3522 = vpop.permute.xlu0 %3521
      %v3555 = vsel %vm357, %v2372, %v2756
      %v3556 = vsel %vm357, %v2373, %v2758
      %v3557 = vsel %vm357, %v2374, %v2760
      %v3558 = vsel %vm357, %v2375, %v2762
      %v3559 = vsel %vm357, %v2376, %v2764
      %v3560 = vsel %vm357, %v2377, %v2766
      %v3561 = vsel %vm357, %v2378, %v2768
      %v3562 = vsel %vm357, %v2379, %v2770
      %v3563 = vsel %vm357, %v2380, %v2772
      %v3564 = vsel %vm357, %v2381, %v2774
      %v3565 = vsel %vm357, %v2382, %v2776
      %v3566 = vsel %vm357, %v2383, %v2778
      %v3567 = vsel %vm357, %v2384, %v2780
      %v3568 = vsel %vm357, %v2385, %v2782
      %v3569 = vsel %vm357, %v2386, %v2784
      %v3570 = vsel %vm357, %v2387, %v2786
      %v3571 = vsel %vm357, %v2388, %v2788
      %v3572 = vsel %vm357, %v2389, %v2790
      %v3573 = vsel %vm357, %v2390, %v2792
      %v3574 = vsel %vm357, %v2391, %v2794
      %v3575 = vsel %vm357, %v2392, %v2796
      %v3576 = vsel %vm357, %v2393, %v2798
      %v3577 = vsel %vm357, %v2394, %v2800
      %v3578 = vsel %vm357, %v2395, %v2802
      %v3579 = vsel %vm357, %v2396, %v2804
      %v3580 = vsel %vm357, %v2397, %v2806
      %v3581 = vsel %vm357, %v2398, %v2808
      %v3582 = vsel %vm357, %v2399, %v2810
      %v3583 = vsel %vm357, %v2400, %v2812
      %v3584 = vsel %vm357, %v2401, %v2814
      %v3585 = vsel %vm357, %v2402, %v2816
      %v3586 = vsel %vm357, %v2403, %v2818
      %vm3587 = vcmask 261120
      %v3588 = vsel %vm3587, %v3555, %v2884
      %v3589 = vsel %vm3587, %v3556, %v2886
      %v3590 = vsel %vm3587, %v3557, %v2888
      %v3591 = vsel %vm3587, %v3558, %v2890
      %v3592 = vsel %vm3587, %v3559, %v2892
      %v3593 = vsel %vm3587, %v3560, %v2894
      %v3594 = vsel %vm3587, %v3561, %v2896
      %v3595 = vsel %vm3587, %v3562, %v2898
      %v3596 = vsel %vm3587, %v3563, %v2900
      %v3597 = vsel %vm3587, %v3564, %v2902
      %v3598 = vsel %vm3587, %v3565, %v2904
      %v3599 = vsel %vm3587, %v3566, %v2906
      %v3600 = vsel %vm3587, %v3567, %v2908
      %v3601 = vsel %vm3587, %v3568, %v2910
      %v3602 = vsel %vm3587, %v3569, %v2912
      %v3603 = vsel %vm3587, %v3570, %v2914
      %v3604 = vsel %vm3587, %v3571, %v2916
      %v3605 = vsel %vm3587, %v3572, %v2918
      %v3606 = vsel %vm3587, %v3573, %v2920
      %v3607 = vsel %vm3587, %v3574, %v2922
      %v3608 = vsel %vm3587, %v3575, %v2924
      %v3609 = vsel %vm3587, %v3576, %v2926
      %v3610 = vsel %vm3587, %v3577, %v2928
      %v3611 = vsel %vm3587, %v3578, %v2930
      %v3612 = vsel %vm3587, %v3579, %v2932
      %v3613 = vsel %vm3587, %v3580, %v2934
      %v3614 = vsel %vm3587, %v3581, %v2936
      %v3615 = vsel %vm3587, %v3582, %v2938
      %v3616 = vsel %vm3587, %v3583, %v2940
      %v3617 = vsel %vm3587, %v3584, %v2942
      %v3618 = vsel %vm3587, %v3585, %v2944
      %v3619 = vsel %vm3587, %v3586, %v2946
      %vm3620 = vcmask 392192
      %v3621 = vsel %vm3620, %v3588, %v3012
      %v3622 = vsel %vm3620, %v3589, %v3014
      %v3623 = vsel %vm3620, %v3590, %v3016
      %v3624 = vsel %vm3620, %v3591, %v3018
      %v3625 = vsel %vm3620, %v3592, %v3020
      %v3626 = vsel %vm3620, %v3593, %v3022
      %v3627 = vsel %vm3620, %v3594, %v3024
      %v3628 = vsel %vm3620, %v3595, %v3026
      %v3629 = vsel %vm3620, %v3596, %v3028
      %v3630 = vsel %vm3620, %v3597, %v3030
      %v3631 = vsel %vm3620, %v3598, %v3032
      %v3632 = vsel %vm3620, %v3599, %v3034
      %v3633 = vsel %vm3620, %v3600, %v3036
      %v3634 = vsel %vm3620, %v3601, %v3038
      %v3635 = vsel %vm3620, %v3602, %v3040
      %v3636 = vsel %vm3620, %v3603, %v3042
      %v3637 = vsel %vm3620, %v3604, %v3044
      %v3638 = vsel %vm3620, %v3605, %v3046
      %v3639 = vsel %vm3620, %v3606, %v3048
      %v3640 = vsel %vm3620, %v3607, %v3050
      %v3641 = vsel %vm3620, %v3608, %v3052
      %v3642 = vsel %vm3620, %v3609, %v3054
      %v3643 = vsel %vm3620, %v3610, %v3056
      %v3644 = vsel %vm3620, %v3611, %v3058
      %v3645 = vsel %vm3620, %v3612, %v3060
      %v3646 = vsel %vm3620, %v3613, %v3062
      %v3647 = vsel %vm3620, %v3614, %v3064
      %v3648 = vsel %vm3620, %v3615, %v3066
      %v3649 = vsel %vm3620, %v3616, %v3068
      %v3650 = vsel %vm3620, %v3617, %v3070
      %v3651 = vsel %vm3620, %v3618, %v3072
      %v3652 = vsel %vm3620, %v3619, %v3074
      %vm3653 = vcmask 523264
      %v3654 = vsel %vm3653, %v3621, %v3108
      %v3655 = vsel %vm3653, %v3622, %v3110
      %v3656 = vsel %vm3653, %v3623, %v3112
      %v3657 = vsel %vm3653, %v3624, %v3114
      %v3658 = vsel %vm3653, %v3625, %v3116
      %v3659 = vsel %vm3653, %v3626, %v3118
      %v3660 = vsel %vm3653, %v3627, %v3120
      %v3661 = vsel %vm3653, %v3628, %v3122
      %v3662 = vsel %vm3653, %v3629, %v3124
      %v3663 = vsel %vm3653, %v3630, %v3126
      %v3664 = vsel %vm3653, %v3631, %v3128
      %v3665 = vsel %vm3653, %v3632, %v3130
      %v3666 = vsel %vm3653, %v3633, %v3132
      %v3667 = vsel %vm3653, %v3634, %v3134
      %v3668 = vsel %vm3653, %v3635, %v3136
      %v3669 = vsel %vm3653, %v3636, %v3138
      %v3670 = vsel %vm3653, %v3637, %v3140
      %v3671 = vsel %vm3653, %v3638, %v3142
      %v3672 = vsel %vm3653, %v3639, %v3144
      %v3673 = vsel %vm3653, %v3640, %v3146
      %v3674 = vsel %vm3653, %v3641, %v3148
      %v3675 = vsel %vm3653, %v3642, %v3150
      %v3676 = vsel %vm3653, %v3643, %v3152
      %v3677 = vsel %vm3653, %v3644, %v3154
      %v3678 = vsel %vm3653, %v3645, %v3156
      %v3679 = vsel %vm3653, %v3646, %v3158
      %v3680 = vsel %vm3653, %v3647, %v3160
      %v3681 = vsel %vm3653, %v3648, %v3162
      %v3682 = vsel %vm3653, %v3649, %v3164
      %v3683 = vsel %vm3653, %v3650, %v3166
      %v3684 = vsel %vm3653, %v3651, %v3168
      %v3685 = vsel %vm3653, %v3652, %v3170
      %vm3686 = vcmask 654336
      %v3687 = vsel %vm3686, %v3654, %v3236
      %v3688 = vsel %vm3686, %v3655, %v3238
      %v3689 = vsel %vm3686, %v3656, %v3240
      %v3690 = vsel %vm3686, %v3657, %v3242
      %v3691 = vsel %vm3686, %v3658, %v3244
      %v3692 = vsel %vm3686, %v3659, %v3246
      %v3693 = vsel %vm3686, %v3660, %v3248
      %v3694 = vsel %vm3686, %v3661, %v3250
      %v3695 = vsel %vm3686, %v3662, %v3252
      %v3696 = vsel %vm3686, %v3663, %v3254
      %v3697 = vsel %vm3686, %v3664, %v3256
      %v3698 = vsel %vm3686, %v3665, %v3258
      %v3699 = vsel %vm3686, %v3666, %v3260
      %v3700 = vsel %vm3686, %v3667, %v3262
      %v3701 = vsel %vm3686, %v3668, %v3264
      %v3702 = vsel %vm3686, %v3669, %v3266
      %v3703 = vsel %vm3686, %v3670, %v3268
      %v3704 = vsel %vm3686, %v3671, %v3270
      %v3705 = vsel %vm3686, %v3672, %v3272
      %v3706 = vsel %vm3686, %v3673, %v3274
      %v3707 = vsel %vm3686, %v3674, %v3276
      %v3708 = vsel %vm3686, %v3675, %v3278
      %v3709 = vsel %vm3686, %v3676, %v3280
      %v3710 = vsel %vm3686, %v3677, %v3282
      %v3711 = vsel %vm3686, %v3678, %v3284
      %v3712 = vsel %vm3686, %v3679, %v3286
      %v3713 = vsel %vm3686, %v3680, %v3288
      %v3714 = vsel %vm3686, %v3681, %v3290
      %v3715 = vsel %vm3686, %v3682, %v3292
      %v3716 = vsel %vm3686, %v3683, %v3294
      %v3717 = vsel %vm3686, %v3684, %v3296
      %v3718 = vsel %vm3686, %v3685, %v3298
      %vm3719 = vcmask 785408
      %v3720 = vsel %vm3719, %v3687, %v3364
      %v3721 = vsel %vm3719, %v3688, %v3366
      %v3722 = vsel %vm3719, %v3689, %v3368
      %v3723 = vsel %vm3719, %v3690, %v3370
      %v3724 = vsel %vm3719, %v3691, %v3372
      %v3725 = vsel %vm3719, %v3692, %v3374
      %v3726 = vsel %vm3719, %v3693, %v3376
      %v3727 = vsel %vm3719, %v3694, %v3378
      %v3728 = vsel %vm3719, %v3695, %v3380
      %v3729 = vsel %vm3719, %v3696, %v3382
      %v3730 = vsel %vm3719, %v3697, %v3384
      %v3731 = vsel %vm3719, %v3698, %v3386
      %v3732 = vsel %vm3719, %v3699, %v3388
      %v3733 = vsel %vm3719, %v3700, %v3390
      %v3734 = vsel %vm3719, %v3701, %v3392
      %v3735 = vsel %vm3719, %v3702, %v3394
      %v3736 = vsel %vm3719, %v3703, %v3396
      %v3737 = vsel %vm3719, %v3704, %v3398
      %v3738 = vsel %vm3719, %v3705, %v3400
      %v3739 = vsel %vm3719, %v3706, %v3402
      %v3740 = vsel %vm3719, %v3707, %v3404
      %v3741 = vsel %vm3719, %v3708, %v3406
      %v3742 = vsel %vm3719, %v3709, %v3408
      %v3743 = vsel %vm3719, %v3710, %v3410
      %v3744 = vsel %vm3719, %v3711, %v3412
      %v3745 = vsel %vm3719, %v3712, %v3414
      %v3746 = vsel %vm3719, %v3713, %v3416
      %v3747 = vsel %vm3719, %v3714, %v3418
      %v3748 = vsel %vm3719, %v3715, %v3420
      %v3749 = vsel %vm3719, %v3716, %v3422
      %v3750 = vsel %vm3719, %v3717, %v3424
      %v3751 = vsel %vm3719, %v3718, %v3426
      %vm3752 = vcmask 916480
      %v3753 = vsel %vm3752, %v3720, %v3460
      %v3754 = vsel %vm3752, %v3721, %v3462
      %v3755 = vsel %vm3752, %v3722, %v3464
      %v3756 = vsel %vm3752, %v3723, %v3466
      %v3757 = vsel %vm3752, %v3724, %v3468
      %v3758 = vsel %vm3752, %v3725, %v3470
      %v3759 = vsel %vm3752, %v3726, %v3472
      %v3760 = vsel %vm3752, %v3727, %v3474
      %v3761 = vsel %vm3752, %v3728, %v3476
      %v3762 = vsel %vm3752, %v3729, %v3478
      %v3763 = vsel %vm3752, %v3730, %v3480
      %v3764 = vsel %vm3752, %v3731, %v3482
      %v3765 = vsel %vm3752, %v3732, %v3484
      %v3766 = vsel %vm3752, %v3733, %v3486
      %v3767 = vsel %vm3752, %v3734, %v3488
      %v3768 = vsel %vm3752, %v3735, %v3490
      %v3769 = vsel %vm3752, %v3736, %v3492
      %v3770 = vsel %vm3752, %v3737, %v3494
      %v3771 = vsel %vm3752, %v3738, %v3496
      %v3772 = vsel %vm3752, %v3739, %v3498
      %v3773 = vsel %vm3752, %v3740, %v3500
      %v3774 = vsel %vm3752, %v3741, %v3502
      %v3775 = vsel %vm3752, %v3742, %v3504
      %v3776 = vsel %vm3752, %v3743, %v3506
      %v3777 = vsel %vm3752, %v3744, %v3508
      %v3778 = vsel %vm3752, %v3745, %v3510
      %v3779 = vsel %vm3752, %v3746, %v3512
      %v3780 = vsel %vm3752, %v3747, %v3514
      %v3781 = vsel %vm3752, %v3748, %v3516
      %v3782 = vsel %vm3752, %v3749, %v3518
      %v3783 = vsel %vm3752, %v3750, %v3520
      %v3784 = vsel %vm3752, %v3751, %v3522
      %v3785 = vpack.c.bf16 %v3754, %v3753
      %v3786 = vpack.c.bf16 %v2724, %v2723
      %v3787 = vpack.c.bf16 %v3756, %v3755
      %v3788 = vpack.c.bf16 %v2726, %v2725
      %v3789 = vpack.c.bf16 %v3758, %v3757
      %v3790 = vpack.c.bf16 %v2728, %v2727
      %v3791 = vpack.c.bf16 %v3760, %v3759
      %v3792 = vpack.c.bf16 %v2730, %v2729
      %v3793 = vpack.c.bf16 %v3762, %v3761
      %v3794 = vpack.c.bf16 %v2732, %v2731
      %v3795 = vpack.c.bf16 %v3764, %v3763
      %v3796 = vpack.c.bf16 %v2734, %v2733
      %v3797 = vpack.c.bf16 %v3766, %v3765
      %v3798 = vpack.c.bf16 %v2736, %v2735
      %v3799 = vpack.c.bf16 %v3768, %v3767
      %v3800 = vpack.c.bf16 %v2738, %v2737
      %v3801 = vpack.c.bf16 %v3770, %v3769
      %v3802 = vpack.c.bf16 %v2740, %v2739
      %v3803 = vpack.c.bf16 %v3772, %v3771
      %v3804 = vpack.c.bf16 %v2742, %v2741
      %v3805 = vpack.c.bf16 %v3774, %v3773
      %v3806 = vpack.c.bf16 %v2744, %v2743
      %v3807 = vpack.c.bf16 %v3776, %v3775
      %v3808 = vpack.c.bf16 %v2746, %v2745
      %v3809 = vpack.c.bf16 %v3778, %v3777
      %v3810 = vpack.c.bf16 %v2748, %v2747
      %v3811 = vpack.c.bf16 %v3780, %v3779
      %v3812 = vpack.c.bf16 %v2750, %v2749
      %v3813 = vpack.c.bf16 %v3782, %v3781
      %v3814 = vpack.c.bf16 %v2752, %v2751
      %v3815 = vpack.c.bf16 %v3784, %v3783
      %v3816 = vpack.c.bf16 %v2754, %v2753
      %v3817 = vld [vmem:[%s3] sm:$0xf]
      %v3818 = vld [vmem:[%s3 + $0x4] sm:$0xf]
      %v3819 = vld [vmem:[%s3 + $0x8] sm:$0xf]
      %v3820 = vld [vmem:[%s3 + $0xc] sm:$0xf]
      %v3821 = vld [vmem:[%s3 + $0x10] sm:$0xf]
      %v3822 = vld [vmem:[%s3 + $0x14] sm:$0xf]
      %v3823 = vld [vmem:[%s3 + $0x18] sm:$0xf]
      %v3824 = vld [vmem:[%s3 + $0x1c] sm:$0xf]
      %v3825 = vld [vmem:[%s3 + $0x20] sm:$0xf]
      %v3826 = vld [vmem:[%s3 + $0x24] sm:$0xf]
      %v3827 = vld [vmem:[%s3 + $0x28] sm:$0xf]
      %v3828 = vld [vmem:[%s3 + $0x2c] sm:$0xf]
      %v3829 = vld [vmem:[%s3 + $0x30] sm:$0xf]
      %v3830 = vld [vmem:[%s3 + $0x34] sm:$0xf]
      %v3831 = vld [vmem:[%s3 + $0x38] sm:$0xf]
      %v3832 = vld [vmem:[%s3 + $0x3c] sm:$0xf]
      %v3833 = vld [vmem:[%s3 + $0x40] sm:$0xf]
      %v3834 = vld [vmem:[%s3 + $0x44] sm:$0xf]
      %v3835 = vld [vmem:[%s4] sm:$0x1]
      %v3837 = vperm.slane %v3835, 0
      %v3857 = vunpack.c.l.b16 %v3817
      %v3858 = vunpack.c.l.b16 %v3818
      %v3859 = vunpack.c.l.b16 %v3819
      %v3860 = vunpack.c.l.b16 %v3820
      %v3861 = vunpack.c.l.b16 %v3821
      %v3862 = vunpack.c.l.b16 %v3822
      %v3863 = vunpack.c.l.b16 %v3823
      %v3864 = vunpack.c.l.b16 %v3824
      %v3865 = vunpack.c.l.b16 %v3825
      %v3866 = vunpack.c.l.b16 %v3826
      %v3867 = vunpack.c.l.b16 %v3827
      %v3868 = vunpack.c.l.b16 %v3828
      %v3869 = vunpack.c.l.b16 %v3829
      %v3870 = vunpack.c.l.b16 %v3830
      %v3871 = vunpack.c.l.b16 %v3831
      %v3872 = vunpack.c.l.b16 %v3832
      %v3873 = vunpack.c.l.b16 %v3833
      %v3874 = vunpack.c.l.b16 %v3834
      %v3875 = vpack.c.b16 %v3858, %v3857
      %v3876 = vpack.c.b16 %v3860, %v3859
      %v3877 = vpack.c.b16 %v3862, %v3861
      %v3878 = vpack.c.b16 %v3864, %v3863
      %v3879 = vpack.c.b16 %v3866, %v3865
      %v3880 = vpack.c.b16 %v3868, %v3867
      %v3881 = vpack.c.b16 %v3870, %v3869
      %v3882 = vpack.c.b16 %v3872, %v3871
      %v3883 = vpack.c.b16 %v3874, %v3873
      %v3894 = vsel %vm357, %v3786, 0
      %v3897 = vsel %vm357, %v3788, 0
      %v3900 = vsel %vm357, %v3790, 0
      %v3903 = vsel %vm357, %v3792, 0
      %v3906 = vsel %vm357, %v3794, 0
      %v3909 = vsel %vm357, %v3796, 0
      %v3912 = vsel %vm357, %v3798, 0
      %v3915 = vsel %vm357, %v3800, 0
      %v3918 = vsel %vm357, %v3802, 0
      %v3921 = vsel %vm357, %v3804, 0
      %v3924 = vsel %vm357, %v3806, 0
      %v3927 = vsel %vm357, %v3808, 0
      %v3930 = vsel %vm357, %v3810, 0
      %v3933 = vsel %vm357, %v3812, 0
      %v3936 = vsel %vm357, %v3814, 0
      %v3939 = vsel %vm357, %v3816, 0
      %3941 = vmatpush.bf16.msra.mxu0 %v3882
      %3942 = vmatpush.bf16.msra.mxu0 %v3881
      %3943 = vmatpush.bf16.msra.mxu0 %v3880
      %3944 = vmatpush.bf16.msra.mxu0 %v3879
      %3945 = vmatpush.bf16.msra.mxu0 %v3878
      %3946 = vmatpush.bf16.msra.mxu0 %v3877
      %3947 = vmatpush.bf16.msra.mxu0 %v3876
      %3948 = vmatpush.bf16.msra.mxu0 %v3875
      %3949 = vmatmul.bf16.gmra.mxu0 %v3785
      %v3950 = vpop.f32.mrf.mxu0
      %v3951 = vadd.f32 %v3837, %v3950
      %v3952 = vpop.f32.mrf.mxu0
      %v3953 = vadd.f32 %v3837, %v3952
      %3954 = vmatmul.bf16.gmra.mxu0 %v3787
      %v3955 = vpop.f32.mrf.mxu0
      %v3956 = vadd.f32 %v3837, %v3955
      %v3957 = vpop.f32.mrf.mxu0
      %v3958 = vadd.f32 %v3837, %v3957
      %3959 = vmatmul.bf16.gmra.mxu0 %v3789
      %v3960 = vpop.f32.mrf.mxu0
      %v3961 = vadd.f32 %v3837, %v3960
      %v3962 = vpop.f32.mrf.mxu0
      %v3963 = vadd.f32 %v3837, %v3962
      %3964 = vmatmul.bf16.gmra.mxu0 %v3791
      %v3965 = vpop.f32.mrf.mxu0
      %v3966 = vadd.f32 %v3837, %v3965
      %v3967 = vpop.f32.mrf.mxu0
      %v3968 = vadd.f32 %v3837, %v3967
      %3969 = vmatmul.bf16.gmra.mxu0 %v3793
      %v3970 = vpop.f32.mrf.mxu0
      %v3971 = vadd.f32 %v3837, %v3970
      %v3972 = vpop.f32.mrf.mxu0
      %v3973 = vadd.f32 %v3837, %v3972
      %3974 = vmatmul.bf16.gmra.mxu0 %v3795
      %v3975 = vpop.f32.mrf.mxu0
      %v3976 = vadd.f32 %v3837, %v3975
      %v3977 = vpop.f32.mrf.mxu0
      %v3978 = vadd.f32 %v3837, %v3977
      %3979 = vmatmul.bf16.gmra.mxu0 %v3797
      %v3980 = vpop.f32.mrf.mxu0
      %v3981 = vadd.f32 %v3837, %v3980
      %v3982 = vpop.f32.mrf.mxu0
      %v3983 = vadd.f32 %v3837, %v3982
      %3984 = vmatmul.bf16.gmra.mxu0 %v3799
      %v3985 = vpop.f32.mrf.mxu0
      %v3986 = vadd.f32 %v3837, %v3985
      %v3987 = vpop.f32.mrf.mxu0
      %v3988 = vadd.f32 %v3837, %v3987
      %3989 = vmatmul.bf16.gmra.mxu0 %v3801
      %v3990 = vpop.f32.mrf.mxu0
      %v3991 = vadd.f32 %v3837, %v3990
      %v3992 = vpop.f32.mrf.mxu0
      %v3993 = vadd.f32 %v3837, %v3992
      %3994 = vmatmul.bf16.gmra.mxu0 %v3803
      %v3995 = vpop.f32.mrf.mxu0
      %v3996 = vadd.f32 %v3837, %v3995
      %v3997 = vpop.f32.mrf.mxu0
      %v3998 = vadd.f32 %v3837, %v3997
      %3999 = vmatmul.bf16.gmra.mxu0 %v3805
      %v4000 = vpop.f32.mrf.mxu0
      %v4001 = vadd.f32 %v3837, %v4000
      %v4002 = vpop.f32.mrf.mxu0
      %v4003 = vadd.f32 %v3837, %v4002
      %4004 = vmatmul.bf16.gmra.mxu0 %v3807
      %v4005 = vpop.f32.mrf.mxu0
      %v4006 = vadd.f32 %v3837, %v4005
      %v4007 = vpop.f32.mrf.mxu0
      %v4008 = vadd.f32 %v3837, %v4007
      %4009 = vmatmul.bf16.gmra.mxu0 %v3809
      %v4010 = vpop.f32.mrf.mxu0
      %v4011 = vadd.f32 %v3837, %v4010
      %v4012 = vpop.f32.mrf.mxu0
      %v4013 = vadd.f32 %v3837, %v4012
      %4014 = vmatmul.bf16.gmra.mxu0 %v3811
      %v4015 = vpop.f32.mrf.mxu0
      %v4016 = vadd.f32 %v3837, %v4015
      %v4017 = vpop.f32.mrf.mxu0
      %v4018 = vadd.f32 %v3837, %v4017
      %4019 = vmatmul.bf16.gmra.mxu0 %v3813
      %v4020 = vpop.f32.mrf.mxu0
      %v4021 = vadd.f32 %v3837, %v4020
      %v4022 = vpop.f32.mrf.mxu0
      %v4023 = vadd.f32 %v3837, %v4022
      %4024 = vmatmul.bf16.gmra.mxu0 %v3815
      %v4025 = vpop.f32.mrf.mxu0
      %v4026 = vadd.f32 %v3837, %v4025
      %v4027 = vpop.f32.mrf.mxu0
      %v4028 = vadd.f32 %v3837, %v4027
      %4029 = vdwg.mxu0
      %4030 = vmatpush.bf16.msra.mxu0 0
      %4031 = vmatpush.bf16.msra.mxu0 0
      %4032 = vmatpush.bf16.msra.mxu0 0
      %4033 = vmatpush.bf16.msra.mxu0 0
      %4034 = vmatpush.bf16.msra.mxu0 0
      %4035 = vmatpush.bf16.msra.mxu0 0
      %4036 = vmatpush.bf16.msra.mxu0 0
      %4037 = vmatpush.bf16.msra.mxu0 %v3883
      %4038 = vmatmul.bf16.gmra.mxu0 %v3894
      %v4039 = vpop.f32.mrf.mxu0
      %v4040 = vadd.f32 %v3951, %v4039
      %v4041 = vpop.f32.mrf.mxu0
      %v4042 = vadd.f32 %v3953, %v4041
      %4043 = vmatmul.bf16.gmra.mxu0 %v3897
      %v4044 = vpop.f32.mrf.mxu0
      %v4045 = vadd.f32 %v3956, %v4044
      %v4046 = vpop.f32.mrf.mxu0
      %v4047 = vadd.f32 %v3958, %v4046
      %4048 = vmatmul.bf16.gmra.mxu0 %v3900
      %v4049 = vpop.f32.mrf.mxu0
      %v4050 = vadd.f32 %v3961, %v4049
      %v4051 = vpop.f32.mrf.mxu0
      %v4052 = vadd.f32 %v3963, %v4051
      %4053 = vmatmul.bf16.gmra.mxu0 %v3903
      %v4054 = vpop.f32.mrf.mxu0
      %v4055 = vadd.f32 %v3966, %v4054
      %v4056 = vpop.f32.mrf.mxu0
      %v4057 = vadd.f32 %v3968, %v4056
      %4058 = vmatmul.bf16.gmra.mxu0 %v3906
      %v4059 = vpop.f32.mrf.mxu0
      %v4060 = vadd.f32 %v3971, %v4059
      %v4061 = vpop.f32.mrf.mxu0
      %v4062 = vadd.f32 %v3973, %v4061
      %4063 = vmatmul.bf16.gmra.mxu0 %v3909
      %v4064 = vpop.f32.mrf.mxu0
      %v4065 = vadd.f32 %v3976, %v4064
      %v4066 = vpop.f32.mrf.mxu0
      %v4067 = vadd.f32 %v3978, %v4066
      %4068 = vmatmul.bf16.gmra.mxu0 %v3912
      %v4069 = vpop.f32.mrf.mxu0
      %v4070 = vadd.f32 %v3981, %v4069
      %v4071 = vpop.f32.mrf.mxu0
      %v4072 = vadd.f32 %v3983, %v4071
      %4073 = vmatmul.bf16.gmra.mxu0 %v3915
      %v4074 = vpop.f32.mrf.mxu0
      %v4075 = vadd.f32 %v3986, %v4074
      %v4076 = vpop.f32.mrf.mxu0
      %v4077 = vadd.f32 %v3988, %v4076
      %4078 = vmatmul.bf16.gmra.mxu0 %v3918
      %v4079 = vpop.f32.mrf.mxu0
      %v4080 = vadd.f32 %v3991, %v4079
      %v4081 = vpop.f32.mrf.mxu0
      %v4082 = vadd.f32 %v3993, %v4081
      %4083 = vmatmul.bf16.gmra.mxu0 %v3921
      %v4084 = vpop.f32.mrf.mxu0
      %v4085 = vadd.f32 %v3996, %v4084
      %v4086 = vpop.f32.mrf.mxu0
      %v4087 = vadd.f32 %v3998, %v4086
      %4088 = vmatmul.bf16.gmra.mxu0 %v3924
      %v4089 = vpop.f32.mrf.mxu0
      %v4090 = vadd.f32 %v4001, %v4089
      %v4091 = vpop.f32.mrf.mxu0
      %v4092 = vadd.f32 %v4003, %v4091
      %4093 = vmatmul.bf16.gmra.mxu0 %v3927
      %v4094 = vpop.f32.mrf.mxu0
      %v4095 = vadd.f32 %v4006, %v4094
      %v4096 = vpop.f32.mrf.mxu0
      %v4097 = vadd.f32 %v4008, %v4096
      %4098 = vmatmul.bf16.gmra.mxu0 %v3930
      %v4099 = vpop.f32.mrf.mxu0
      %v4100 = vadd.f32 %v4011, %v4099
      %v4101 = vpop.f32.mrf.mxu0
      %v4102 = vadd.f32 %v4013, %v4101
      %4103 = vmatmul.bf16.gmra.mxu0 %v3933
      %v4104 = vpop.f32.mrf.mxu0
      %v4105 = vadd.f32 %v4016, %v4104
      %v4106 = vpop.f32.mrf.mxu0
      %v4107 = vadd.f32 %v4018, %v4106
      %4108 = vmatmul.bf16.gmra.mxu0 %v3936
      %v4109 = vpop.f32.mrf.mxu0
      %v4110 = vadd.f32 %v4021, %v4109
      %v4111 = vpop.f32.mrf.mxu0
      %v4112 = vadd.f32 %v4023, %v4111
      %4113 = vmatmul.bf16.gmra.mxu0 %v3939
      %v4114 = vpop.f32.mrf.mxu0
      %v4115 = vadd.f32 %v4026, %v4114
      %v4116 = vpop.f32.mrf.mxu0
      %v4117 = vadd.f32 %v4028, %v4116
      %4118 = vdwg.mxu0
      %4119 = vst.msk [vmem:[%s289] sm:$0xff] %vm357, %v4040
      %4120 = vst.msk [vmem:[%s289 + $0x8] sm:$0xff] %vm357, %v4042
      %4121 = vst.msk [vmem:[%s289 + $0x10] sm:$0xff] %vm357, %v4045
      %4122 = vst.msk [vmem:[%s289 + $0x18] sm:$0xff] %vm357, %v4047
      %4123 = vst.msk [vmem:[%s289 + $0x20] sm:$0xff] %vm357, %v4050
      %4124 = vst.msk [vmem:[%s289 + $0x28] sm:$0xff] %vm357, %v4052
      %4125 = vst.msk [vmem:[%s289 + $0x30] sm:$0xff] %vm357, %v4055
      %4126 = vst.msk [vmem:[%s289 + $0x38] sm:$0xff] %vm357, %v4057
      %4127 = vst.msk [vmem:[%s289 + $0x40] sm:$0xff] %vm357, %v4060
      %4128 = vst.msk [vmem:[%s289 + $0x48] sm:$0xff] %vm357, %v4062
      %4129 = vst.msk [vmem:[%s289 + $0x50] sm:$0xff] %vm357, %v4065
      %4130 = vst.msk [vmem:[%s289 + $0x58] sm:$0xff] %vm357, %v4067
      %4131 = vst.msk [vmem:[%s289 + $0x60] sm:$0xff] %vm357, %v4070
      %4132 = vst.msk [vmem:[%s289 + $0x68] sm:$0xff] %vm357, %v4072
      %4133 = vst.msk [vmem:[%s289 + $0x70] sm:$0xff] %vm357, %v4075
      %4134 = vst.msk [vmem:[%s289 + $0x78] sm:$0xff] %vm357, %v4077
      %4135 = vst.msk [vmem:[%s289 + $0x80] sm:$0xff] %vm357, %v4080
      %4136 = vst.msk [vmem:[%s289 + $0x88] sm:$0xff] %vm357, %v4082
      %4137 = vst.msk [vmem:[%s289 + $0x90] sm:$0xff] %vm357, %v4085
      %4138 = vst.msk [vmem:[%s289 + $0x98] sm:$0xff] %vm357, %v4087
      %4139 = vst.msk [vmem:[%s289 + $0xa0] sm:$0xff] %vm357, %v4090
      %4140 = vst.msk [vmem:[%s289 + $0xa8] sm:$0xff] %vm357, %v4092
      %4141 = vst.msk [vmem:[%s289 + $0xb0] sm:$0xff] %vm357, %v4095
      %4142 = vst.msk [vmem:[%s289 + $0xb8] sm:$0xff] %vm357, %v4097
      %4143 = vst.msk [vmem:[%s289 + $0xc0] sm:$0xff] %vm357, %v4100
      %4144 = vst.msk [vmem:[%s289 + $0xc8] sm:$0xff] %vm357, %v4102
      %4145 = vst.msk [vmem:[%s289 + $0xd0] sm:$0xff] %vm357, %v4105
      %4146 = vst.msk [vmem:[%s289 + $0xd8] sm:$0xff] %vm357, %v4107
      %4147 = vst.msk [vmem:[%s289 + $0xe0] sm:$0xff] %vm357, %v4110
      %4148 = vst.msk [vmem:[%s289 + $0xe8] sm:$0xff] %vm357, %v4112
      %4149 = vst.msk [vmem:[%s289 + $0xf0] sm:$0xff] %vm357, %v4115
      %4150 = vst.msk [vmem:[%s289 + $0xf8] sm:$0xff] %vm357, %v4117
      %v4151 = vsel %vm357, %v4040, 0.0
      %v4152 = vsel %vm357, %v4042, 0.0
      %v4153 = vadd.f32 %v4151, %v4152
      %v4154 = vsel %vm357, %v4045, 0.0
      %v4155 = vadd.f32 %v4153, %v4154
      %v4156 = vsel %vm357, %v4047, 0.0
      %v4157 = vadd.f32 %v4155, %v4156
      %v4158 = vsel %vm357, %v4050, 0.0
      %v4159 = vadd.f32 %v4157, %v4158
      %v4160 = vsel %vm357, %v4052, 0.0
      %v4161 = vadd.f32 %v4159, %v4160
      %v4162 = vsel %vm357, %v4055, 0.0
      %v4163 = vadd.f32 %v4161, %v4162
      %v4164 = vsel %vm357, %v4057, 0.0
      %v4165 = vadd.f32 %v4163, %v4164
      %v4166 = vsel %vm357, %v4060, 0.0
      %v4167 = vadd.f32 %v4165, %v4166
      %v4168 = vsel %vm357, %v4062, 0.0
      %v4169 = vadd.f32 %v4167, %v4168
      %v4170 = vsel %vm357, %v4065, 0.0
      %v4171 = vadd.f32 %v4169, %v4170
      %v4172 = vsel %vm357, %v4067, 0.0
      %v4173 = vadd.f32 %v4171, %v4172
      %v4174 = vsel %vm357, %v4070, 0.0
      %v4175 = vadd.f32 %v4173, %v4174
      %v4176 = vsel %vm357, %v4072, 0.0
      %v4177 = vadd.f32 %v4175, %v4176
      %v4178 = vsel %vm357, %v4075, 0.0
      %v4179 = vadd.f32 %v4177, %v4178
      %v4180 = vsel %vm357, %v4077, 0.0
      %v4181 = vadd.f32 %v4179, %v4180
      %v4182 = vsel %vm357, %v4080, 0.0
      %v4183 = vadd.f32 %v4181, %v4182
      %v4184 = vsel %vm357, %v4082, 0.0
      %v4185 = vadd.f32 %v4183, %v4184
      %v4186 = vsel %vm357, %v4085, 0.0
      %v4187 = vadd.f32 %v4185, %v4186
      %v4188 = vsel %vm357, %v4087, 0.0
      %v4189 = vadd.f32 %v4187, %v4188
      %v4190 = vsel %vm357, %v4090, 0.0
      %v4191 = vadd.f32 %v4189, %v4190
      %v4192 = vsel %vm357, %v4092, 0.0
      %v4193 = vadd.f32 %v4191, %v4192
      %v4194 = vsel %vm357, %v4095, 0.0
      %v4195 = vadd.f32 %v4193, %v4194
      %v4196 = vsel %vm357, %v4097, 0.0
      %v4197 = vadd.f32 %v4195, %v4196
      %v4198 = vsel %vm357, %v4100, 0.0
      %v4199 = vadd.f32 %v4197, %v4198
      %v4200 = vsel %vm357, %v4102, 0.0
      %v4201 = vadd.f32 %v4199, %v4200
      %v4202 = vsel %vm357, %v4105, 0.0
      %v4203 = vadd.f32 %v4201, %v4202
      %v4204 = vsel %vm357, %v4107, 0.0
      %v4205 = vadd.f32 %v4203, %v4204
      %v4206 = vsel %vm357, %v4110, 0.0
      %v4207 = vadd.f32 %v4205, %v4206
      %v4208 = vsel %vm357, %v4112, 0.0
      %v4209 = vadd.f32 %v4207, %v4208
      %v4210 = vsel %vm357, %v4115, 0.0
      %v4211 = vadd.f32 %v4209, %v4210
      %v4212 = vsel %vm357, %v4117, 0.0
      %v4213 = vadd.f32 %v4211, %v4212
      %v4214 = vrot.slane %v4213, 4
      %v4215 = vadd.f32 %v4213, %v4214
      %v4216 = vrot.slane %v4215, 2
      %v4217 = vadd.f32 %v4215, %v4216
      %v4218 = vrot.slane %v4217, 1
      %v4219 = vadd.f32 %v4217, %v4218
      %vm4220 = vcmask 122880
      %4221 = vst.msk [vmem:[%s292] sm:$0x1] %vm4220, %v4219
      %v4222 = vmul.f32 %v4040, %v4040
      %v4223 = vmul.f32 %v4042, %v4042
      %v4224 = vmul.f32 %v4045, %v4045
      %v4225 = vmul.f32 %v4047, %v4047
      %v4226 = vmul.f32 %v4050, %v4050
      %v4227 = vmul.f32 %v4052, %v4052
      %v4228 = vmul.f32 %v4055, %v4055
      %v4229 = vmul.f32 %v4057, %v4057
      %v4230 = vmul.f32 %v4060, %v4060
      %v4231 = vmul.f32 %v4062, %v4062
      %v4232 = vmul.f32 %v4065, %v4065
      %v4233 = vmul.f32 %v4067, %v4067
      %v4234 = vmul.f32 %v4070, %v4070
      %v4235 = vmul.f32 %v4072, %v4072
      %v4236 = vmul.f32 %v4075, %v4075
      %v4237 = vmul.f32 %v4077, %v4077
      %v4238 = vmul.f32 %v4080, %v4080
      %v4239 = vmul.f32 %v4082, %v4082
      %v4240 = vmul.f32 %v4085, %v4085
      %v4241 = vmul.f32 %v4087, %v4087
      %v4242 = vmul.f32 %v4090, %v4090
      %v4243 = vmul.f32 %v4092, %v4092
      %v4244 = vmul.f32 %v4095, %v4095
      %v4245 = vmul.f32 %v4097, %v4097
      %v4246 = vmul.f32 %v4100, %v4100
      %v4247 = vmul.f32 %v4102, %v4102
      %v4248 = vmul.f32 %v4105, %v4105
      %v4249 = vmul.f32 %v4107, %v4107
      %v4250 = vmul.f32 %v4110, %v4110
      %v4251 = vmul.f32 %v4112, %v4112
      %v4252 = vmul.f32 %v4115, %v4115
      %v4253 = vmul.f32 %v4117, %v4117
      %v4254 = vsel %vm357, %v4222, 0.0
      %v4255 = vsel %vm357, %v4223, 0.0
      %v4256 = vadd.f32 %v4254, %v4255
      %v4257 = vsel %vm357, %v4224, 0.0
      %v4258 = vadd.f32 %v4256, %v4257
      %v4259 = vsel %vm357, %v4225, 0.0
      %v4260 = vadd.f32 %v4258, %v4259
      %v4261 = vsel %vm357, %v4226, 0.0
      %v4262 = vadd.f32 %v4260, %v4261
      %v4263 = vsel %vm357, %v4227, 0.0
      %v4264 = vadd.f32 %v4262, %v4263
      %v4265 = vsel %vm357, %v4228, 0.0
      %v4266 = vadd.f32 %v4264, %v4265
      %v4267 = vsel %vm357, %v4229, 0.0
      %v4268 = vadd.f32 %v4266, %v4267
      %v4269 = vsel %vm357, %v4230, 0.0
      %v4270 = vadd.f32 %v4268, %v4269
      %v4271 = vsel %vm357, %v4231, 0.0
      %v4272 = vadd.f32 %v4270, %v4271
      %v4273 = vsel %vm357, %v4232, 0.0
      %v4274 = vadd.f32 %v4272, %v4273
      %v4275 = vsel %vm357, %v4233, 0.0
      %v4276 = vadd.f32 %v4274, %v4275
      %v4277 = vsel %vm357, %v4234, 0.0
      %v4278 = vadd.f32 %v4276, %v4277
      %v4279 = vsel %vm357, %v4235, 0.0
      %v4280 = vadd.f32 %v4278, %v4279
      %v4281 = vsel %vm357, %v4236, 0.0
      %v4282 = vadd.f32 %v4280, %v4281
      %v4283 = vsel %vm357, %v4237, 0.0
      %v4284 = vadd.f32 %v4282, %v4283
      %v4285 = vsel %vm357, %v4238, 0.0
      %v4286 = vadd.f32 %v4284, %v4285
      %v4287 = vsel %vm357, %v4239, 0.0
      %v4288 = vadd.f32 %v4286, %v4287
      %v4289 = vsel %vm357, %v4240, 0.0
      %v4290 = vadd.f32 %v4288, %v4289
      %v4291 = vsel %vm357, %v4241, 0.0
      %v4292 = vadd.f32 %v4290, %v4291
      %v4293 = vsel %vm357, %v4242, 0.0
      %v4294 = vadd.f32 %v4292, %v4293
      %v4295 = vsel %vm357, %v4243, 0.0
      %v4296 = vadd.f32 %v4294, %v4295
      %v4297 = vsel %vm357, %v4244, 0.0
      %v4298 = vadd.f32 %v4296, %v4297
      %v4299 = vsel %vm357, %v4245, 0.0
      %v4300 = vadd.f32 %v4298, %v4299
      %v4301 = vsel %vm357, %v4246, 0.0
      %v4302 = vadd.f32 %v4300, %v4301
      %v4303 = vsel %vm357, %v4247, 0.0
      %v4304 = vadd.f32 %v4302, %v4303
      %v4305 = vsel %vm357, %v4248, 0.0
      %v4306 = vadd.f32 %v4304, %v4305
      %v4307 = vsel %vm357, %v4249, 0.0
      %v4308 = vadd.f32 %v4306, %v4307
      %v4309 = vsel %vm357, %v4250, 0.0
      %v4310 = vadd.f32 %v4308, %v4309
      %v4311 = vsel %vm357, %v4251, 0.0
      %v4312 = vadd.f32 %v4310, %v4311
      %v4313 = vsel %vm357, %v4252, 0.0
      %v4314 = vadd.f32 %v4312, %v4313
      %v4315 = vsel %vm357, %v4253, 0.0
      %v4316 = vadd.f32 %v4314, %v4315
      %v4317 = vrot.slane %v4316, 4
      %v4318 = vadd.f32 %v4316, %v4317
      %v4319 = vrot.slane %v4318, 2
      %v4320 = vadd.f32 %v4318, %v4319
      %v4321 = vrot.slane %v4320, 1
      %v4322 = vadd.f32 %v4320, %v4321
      %4323 = vst.msk [vmem:[%s295] sm:$0x1] %vm4220, %v4322
      %p4324 = scmp.lt.s32.totalorder %s19, 1
      %s4325 = scalar_select %p4324, %s19, 1
      %s4326 = smul.addr %s4325, 32
      %s4327 = smul.addr %s4326, 8
      %s4328 = scalar_lea.vmem %s5, %s4327
      %p4329 = scmp.lt.s32.totalorder %s19, 1
      %s4330 = scalar_select %p4329, %s19, 1
      %s4331 = scalar_lea.vmem %s6, %s4330
      %p4332 = scmp.lt.s32.totalorder %s19, 1
      %s4333 = scalar_select %p4332, %s19, 1
      %s4334 = scalar_lea.vmem %s7, %s4333
      // Predicated region
      $region41: #{sab_forward.2} parent=39 // pred_check
        %p4335 = pneg %p147
      $region42: #{sab_forward.2} parent=39 // pred_check_branch
        %4337 = sbr.rel (%p4335) target = $region44
      $region43: #{sab_forward.2} parent=39 // pred_region
        _
      $region44: #{sab_forward.2} parent=39 // pred_fallthru
        _
      // Predicated region
      $region45: #{sab_forward.2} parent=39 // pred_check
        %p4338 = pneg %p173
      $region46: #{sab_forward.2} parent=39 // pred_check_branch
        %4340 = sbr.rel (%p4338) target = $region48
      $region47: #{sab_forward.2} parent=39 // pred_region
        _
      $region48: #{sab_forward.2} parent=39 // pred_fallthru
        _
      // Predicated region
      $region49: #{sab_forward.2} parent=39 // pred_check
        %p4341 = pneg %p199
      $region50: #{sab_forward.2} parent=39 // pred_check_branch
        %4343 = sbr.rel (%p4341) target = $region52
      $region51: #{sab_forward.2} parent=39 // pred_region
        _
      $region52: #{sab_forward.2} parent=39 // pred_fallthru
        _
    $region40: #{sab_forward.2} parent=5 // pred_fallthru
      _
    %p4344 = scmp.le.s32.totalorder 2, %s14
    // Predicated region
    $region53: #{sab_forward.2} parent=5 // pred_check
      %p4345 = pneg %p4344
    $region54: #{sab_forward.2} parent=5 // pred_check_branch
      %4347 = sbr.rel (%p4345) target = $region56
    $region55: #{sab_forward.2} parent=5 // pred_region
      %s4348 = ssub.s32 %s14, 2
      // Predicated region
      $region57: #{sab_forward.2} parent=55 // pred_check
        %p4349 = pneg %p153
      $region58: #{sab_forward.2} parent=55 // pred_check_branch
        %4351 = sbr.rel (%p4349) target = $region60
      $region59: #{sab_forward.2} parent=55 // pred_region
        %p4352 = scmp.lt.s32.totalorder %s20, 1
        %s4353 = scalar_select %p4352, %s20, 1
        %s4354 = smul.addr %s4353, 32
        %s4355 = smul.addr %s4354, 8
        %s4356 = scalar_lea.vmem %s5, %s4355
      $region60: #{sab_forward.2} parent=55 // pred_fallthru
        _
      // Predicated region
      $region61: #{sab_forward.2} parent=55 // pred_check
        %p4357 = pneg %p179
      $region62: #{sab_forward.2} parent=55 // pred_check_branch
        %4359 = sbr.rel (%p4357) target = $region64
      $region63: #{sab_forward.2} parent=55 // pred_region
        %p4360 = scmp.lt.s32.totalorder %s20, 1
        %s4361 = scalar_select %p4360, %s20, 1
        %s4362 = scalar_lea.vmem %s6, %s4361
      $region64: #{sab_forward.2} parent=55 // pred_fallthru
        _
      // Predicated region
      $region65: #{sab_forward.2} parent=55 // pred_check
        %p4363 = pneg %p205
      $region66: #{sab_forward.2} parent=55 // pred_check_branch
        %4365 = sbr.rel (%p4363) target = $region68
      $region67: #{sab_forward.2} parent=55 // pred_region
        %p4366 = scmp.lt.s32.totalorder %s20, 1
        %s4367 = scalar_select %p4366, %s20, 1
        %s4368 = scalar_lea.vmem %s7, %s4367
      $region68: #{sab_forward.2} parent=55 // pred_fallthru
        _
    $region56: #{sab_forward.2} parent=5 // pred_fallthru
      _
  $region6: #{sab_forward.2} parent=0 // loop_footer
    %s18 = sadd.s32 1, %s14
  $region7: #{sab_forward.2} parent=0 // loop_footer_branch
    %13 = sbr.rel target = $region3
  $region8: #{sab_forward.2} parent=0 // loop_exit
    _

</llo_original>
